<compile_context>
chip_gen: v7x
topology: tpu7x:2x2x1
jax: 0.10.0
libtpu: 0.0.40
codegen_flags: <defaults>
</compile_context>

<pallas_src>
import math

import jax
import jax.numpy as jnp
from jax.experimental import pallas as pl
from jax.experimental.pallas import tpu as pltpu

# ----------------------------- model config ---------------------------------
BATCH = 2
SEQ = 8
HIDDEN = 32
NUM_HEADS = 4
HEAD_DIM = HIDDEN // NUM_HEADS
INTERMEDIATE = 64
NUM_LAYERS = 2
VOCAB = 64
LN_EPS = 1e-7                      # deberta layer_norm_eps
ATTN_SCALE = 1.0 / math.sqrt(HEAD_DIM)

F32 = jnp.float32
BF16 = jnp.bfloat16


# ------------------------- shared math helpers --------------------------------
def _gelu_exact(x):
    # exact (erf-based) GELU, as used by HF DeBERTa ("gelu")
    return 0.5 * x * (1.0 + jax.lax.erf(x * 0.7071067811865475))


def _layernorm(x, g, b):
    mean = jnp.mean(x, axis=-1, keepdims=True)
    var = jnp.mean((x - mean) ** 2, axis=-1, keepdims=True)
    return (x - mean) * jax.lax.rsqrt(var + LN_EPS) * g + b


# ------------------------------ fused kernel ----------------------------------
def _deberta_forward_kernel(
    ids_ref, mask_ref,
    word_emb_ref, emb_ln_g_ref, emb_ln_b_ref,
    wq_ref, bq_ref, wk_ref, bk_ref, wv_ref, bv_ref,
    wo_ref, bo_ref, ln1_g_ref, ln1_b_ref,
    w1_ref, b1_ref, w2_ref, b2_ref, ln2_g_ref, ln2_b_ref,
    head_w_ref, head_b_ref,
    out_ref,
):
    # One grid step == one batch element. Everything below stays in VMEM/vregs.

    # ---- embedding lookup as a one-hot matmul (f32, exact row selection) ----
    ids = ids_ref[0]                                                   # (S, 1) int32
    vocab_iota = jax.lax.broadcasted_iota(jnp.int32, (SEQ, VOCAB), 1)
    onehot = (vocab_iota == ids).astype(F32)                           # (S, V)
    x = jnp.dot(onehot, word_emb_ref[...], preferred_element_type=F32) # (S, H)
    x = _layernorm(x, emb_ln_g_ref[...], emb_ln_b_ref[...])

    mask = mask_ref[0]                                                 # (1, S)
    attn_bias = ((1.0 - mask) * -1e9).reshape(1, 1, SEQ)               # (1, 1, S)

    # ---- encoder layers (statically unrolled; weights indexed by layer) ----
    for li in range(NUM_LAYERS):
        wq = wq_ref[li].astype(BF16)                                   # (NH, H, dh)
        wk = wk_ref[li].astype(BF16)
        wv = wv_ref[li].astype(BF16)
        wo = wo_ref[li].astype(BF16)                                   # (NH, dh, H)

        # Batched (over heads) Q/K/V projections: (NH, S, H) x (NH, H, dh).
        xb = jnp.broadcast_to(x, (NUM_HEADS, SEQ, HIDDEN)).astype(BF16)
        q = jnp.einsum("nsh,nhd->nsd", xb, wq,
                       preferred_element_type=F32) + bq_ref[li]        # (NH, S, dh)
        k = jnp.einsum("nsh,nhd->nsd", xb, wk,
                       preferred_element_type=F32) + bk_ref[li]
        v = jnp.einsum("nsh,nhd->nsd", xb, wv,
                       preferred_element_type=F32) + bv_ref[li]

        # Batched attention: one scores matmul, one probs@V matmul per layer.
        scores = jnp.einsum("nsd,ntd->nst", q.astype(BF16), k.astype(BF16),
                            preferred_element_type=F32) * ATTN_SCALE + attn_bias
        probs = jax.nn.softmax(scores, axis=-1)                        # f32
        ctx = jnp.einsum("nst,ntd->nsd", probs.astype(BF16), v.astype(BF16),
                         preferred_element_type=F32)                   # (NH, S, dh)

        # Output projection without any head concatenation: per-head
        # (S, dh) x (dh, H) batched matmul, then sum over heads.
        attn_heads = jnp.einsum("nsd,ndh->nsh", ctx.astype(BF16), wo,
                                preferred_element_type=F32)            # (NH, S, H)
        attn_out = jnp.sum(attn_heads, axis=0) + bo_ref[li]            # (S, H)
        x1 = _layernorm(attn_out + x, ln1_g_ref[li], ln1_b_ref[li])

        # FFN: matmul+GELU fused, matmul + residual + LayerNorm fused.
        h1 = _gelu_exact(
            jnp.dot(x1.astype(BF16), w1_ref[li].astype(BF16),
                    preferred_element_type=F32) + b1_ref[li])
        h2 = jnp.dot(h1.astype(BF16), w2_ref[li].astype(BF16),
                     preferred_element_type=F32) + b2_ref[li]
        x = _layernorm(h2 + x1, ln2_g_ref[li], ln2_b_ref[li])

    # ---- masked mean pooling as a single matmul + regression head ----
    sum_emb = jnp.dot(mask, x, preferred_element_type=F32)             # (1, H)
    sum_mask = jnp.maximum(jnp.sum(mask, axis=-1, keepdims=True), 1e-9)
    pooled = sum_emb / sum_mask                                        # (1, H)
    out = jnp.dot(pooled.astype(BF16), head_w_ref[...].astype(BF16),
                  preferred_element_type=F32) + head_b_ref[...]        # (1, 1)
    out_ref[...] = out.reshape(1, 1, 1)


# ------------------------- BlockSpec helpers ----------------------------------
def _const_spec(shape):
    """Full-array VMEM block, same block for every grid step (weights)."""
    zeros = (0,) * len(shape)
    return pl.BlockSpec(tuple(shape), lambda b, _z=zeros: _z)


# ------------------------------ parameters ------------------------------------
def init_params(key):
    def norm(k, shape):
        return (0.02 * jax.random.normal(k, shape)).astype(F32)

    k_emb, k_head, k_layers = jax.random.split(key, 3)
    layer_keys = jax.random.split(k_layers, NUM_LAYERS)

    def layer_weights(k):
        kq, kk, kv, ko, k1, k2 = jax.random.split(k, 6)
        return (norm(kq, (HIDDEN, HIDDEN)), norm(kk, (HIDDEN, HIDDEN)),
                norm(kv, (HIDDEN, HIDDEN)), norm(ko, (HIDDEN, HIDDEN)),
                norm(k1, (HIDDEN, INTERMEDIATE)), norm(k2, (INTERMEDIATE, HIDDEN)))

    per = [layer_weights(k) for k in layer_keys]
    stack = lambda i: jnp.stack([p[i] for p in per])
    L = NUM_LAYERS
    return {
        "word_emb": norm(k_emb, (VOCAB, HIDDEN)),
        "emb_ln_g": jnp.ones((1, HIDDEN), F32),
        "emb_ln_b": jnp.zeros((1, HIDDEN), F32),
        "wq": stack(0), "bq": jnp.zeros((L, 1, HIDDEN), F32),
        "wk": stack(1), "bk": jnp.zeros((L, 1, HIDDEN), F32),
        "wv": stack(2), "bv": jnp.zeros((L, 1, HIDDEN), F32),
        "wo": stack(3), "bo": jnp.zeros((L, 1, HIDDEN), F32),
        "ln1_g": jnp.ones((L, 1, HIDDEN), F32),
        "ln1_b": jnp.zeros((L, 1, HIDDEN), F32),
        "w1": stack(4), "b1": jnp.zeros((L, 1, INTERMEDIATE), F32),
        "w2": stack(5), "b2": jnp.zeros((L, 1, HIDDEN), F32),
        "ln2_g": jnp.ones((L, 1, HIDDEN), F32),
        "ln2_b": jnp.zeros((L, 1, HIDDEN), F32),
        "head_w": norm(k_head, (HIDDEN, 1)),
        "head_b": jnp.zeros((1, 1), F32),
    }


# ------------------------------ forward ----------------------------------------
def _head_major_w(w):      # (L, H, H) column-blocked by head -> (L, NH, H, dh)
    return w.reshape(NUM_LAYERS, HIDDEN, NUM_HEADS, HEAD_DIM).transpose(0, 2, 1, 3)


def _head_major_b(b):      # (L, 1, H) -> (L, NH, 1, dh)
    return b.reshape(NUM_LAYERS, 1, NUM_HEADS, HEAD_DIM).transpose(0, 2, 1, 3)


@jax.jit
def deberta_for_regression_forward(params, input_ids, attention_mask):
    B, S = input_ids.shape
    ids3 = input_ids.astype(jnp.int32).reshape(B, S, 1)
    mask3 = attention_mask.astype(F32).reshape(B, 1, S)

    # One-time layout plumbing (outside the kernel): head-major weight layouts
    # so the kernel never slices HEAD_DIM-wide lane chunks.
    weight_args = (
        params["word_emb"], params["emb_ln_g"], params["emb_ln_b"],
        _head_major_w(params["wq"]), _head_major_b(params["bq"]),
        _head_major_w(params["wk"]), _head_major_b(params["bk"]),
        _head_major_w(params["wv"]), _head_major_b(params["bv"]),
        params["wo"].reshape(NUM_LAYERS, NUM_HEADS, HEAD_DIM, HIDDEN), params["bo"],
        params["ln1_g"], params["ln1_b"],
        params["w1"], params["b1"], params["w2"], params["b2"],
        params["ln2_g"], params["ln2_b"],
        params["head_w"], params["head_b"],
    )

    in_specs = [
        pl.BlockSpec((1, SEQ, 1), lambda b: (b, 0, 0)),   # ids (per batch element)
        pl.BlockSpec((1, 1, SEQ), lambda b: (b, 0, 0)),   # mask (per batch element)
    ] + [_const_spec(w.shape) for w in weight_args]

    out = pl.pallas_call(
        _deberta_forward_kernel,
        grid=(BATCH,),
        in_specs=in_specs,
        out_specs=pl.BlockSpec((1, 1, 1), lambda b: (b, 0, 0)),
        out_shape=jax.ShapeDtypeStruct((BATCH, 1, 1), F32),
        compiler_params=pltpu.CompilerParams(
            dimension_semantics=("parallel",),            # both TCs busy on v7x
            vmem_limit_bytes=32 * 1024 * 1024),
    )(ids3, mask3, *weight_args)
    return out.reshape(B, 1)


# --------------------------- pure-JAX reference ---------------------------------
def _bf16_matmul(a, b):
    return jnp.matmul(a.astype(BF16), b.astype(BF16), preferred_element_type=F32)


def _reference_forward(params, input_ids, attention_mask):
    B, S = input_ids.shape
    x = params["word_emb"][input_ids.reshape(-1)]
    x = _layernorm(x, params["emb_ln_g"], params["emb_ln_b"]).reshape(B, S, HIDDEN)
    mask = attention_mask.astype(F32)
    bias = ((1.0 - mask) * -1e9)[:, None, None, :]                    # (B,1,1,S)

    def split_heads(t):
        return t.reshape(B, S, NUM_HEADS, HEAD_DIM).transpose(0, 2, 1, 3)

    for li in range(NUM_LAYERS):
        q = split_heads(_bf16_matmul(x, params["wq"][li]) + params["bq"][li])
        k = split_heads(_bf16_matmul(x, params["wk"][li]) + params["bk"][li])
        v = split_heads(_bf16_matmul(x, params["wv"][li]) + params["bv"][li])
        scores = jnp.einsum("bnsd,bntd->bnst", q.astype(BF16), k.astype(BF16),
                            preferred_element_type=F32) * ATTN_SCALE + bias
        probs = jax.nn.softmax(scores, axis=-1)
        ctx = jnp.einsum("bnst,bntd->bnsd", probs.astype(BF16), v.astype(BF16),
                         preferred_element_type=F32)
        ctx = ctx.transpose(0, 2, 1, 3).reshape(B, S, HIDDEN)
        attn_out = _bf16_matmul(ctx, params["wo"][li]) + params["bo"][li]
        x1 = _layernorm(attn_out + x, params["ln1_g"][li], params["ln1_b"][li])
        h1 = _gelu_exact(_bf16_matmul(x1, params["w1"][li]) + params["b1"][li])
        h2 = _bf16_matmul(h1, params["w2"][li]) + params["b2"][li]
        x = _layernorm(h2 + x1, params["ln2_g"][li], params["ln2_b"][li])

    m = mask[:, :, None]
    pooled = jnp.sum(x * m, axis=1) / jnp.maximum(jnp.sum(m, axis=1), 1e-9)
    return _bf16_matmul(pooled, params["head_w"]) + params["head_b"]


# ------------------------------ main -------------------------------------------
if __name__ == "__main__":
    key = jax.random.PRNGKey(0)
    k_param, k_ids = jax.random.split(key)

    params = init_params(k_param)
    input_ids = jax.random.randint(k_ids, (BATCH, SEQ), 0, VOCAB, dtype=jnp.int32)
    attention_mask = jnp.array(
        [[1, 1, 1, 1, 1, 1, 1, 1],
         [1, 1, 1, 1, 1, 1, 0, 0]], dtype=jnp.int32
    )

    out = deberta_for_regression_forward(params, input_ids, attention_mask)
    out = jax.block_until_ready(out)
    assert out.shape == (BATCH, 1), out.shape

    ref = _reference_forward(params, input_ids, attention_mask)
    # bf16 MXU operands (with f32 accumulation) -> slightly loosened tolerance.
    assert jnp.allclose(out, ref, rtol=2e-2, atol=1e-3), (out, ref)

    print("KERNEL_OK")
</pallas_src>

<mosaic_0001>
module attributes {stable_mosaic.version = 11 : i64} {
  func.func @_deberta_forward_kernel(%arg0: i32, %arg1: memref<1x8x1xi32, #tpu.memory_space<vmem>>, %arg2: memref<1x1x8xf32, #tpu.memory_space<vmem>>, %arg3: memref<64x32xf32, #tpu.memory_space<vmem>>, %arg4: memref<1x32xf32, #tpu.memory_space<vmem>>, %arg5: memref<1x32xf32, #tpu.memory_space<vmem>>, %arg6: memref<2x4x32x8xf32, #tpu.memory_space<vmem>>, %arg7: memref<2x4x1x8xf32, #tpu.memory_space<vmem>>, %arg8: memref<2x4x32x8xf32, #tpu.memory_space<vmem>>, %arg9: memref<2x4x1x8xf32, #tpu.memory_space<vmem>>, %arg10: memref<2x4x32x8xf32, #tpu.memory_space<vmem>>, %arg11: memref<2x4x1x8xf32, #tpu.memory_space<vmem>>, %arg12: memref<2x4x8x32xf32, #tpu.memory_space<vmem>>, %arg13: memref<2x1x32xf32, #tpu.memory_space<vmem>>, %arg14: memref<2x1x32xf32, #tpu.memory_space<vmem>>, %arg15: memref<2x1x32xf32, #tpu.memory_space<vmem>>, %arg16: memref<2x32x64xf32, #tpu.memory_space<vmem>>, %arg17: memref<2x1x64xf32, #tpu.memory_space<vmem>>, %arg18: memref<2x64x32xf32, #tpu.memory_space<vmem>>, %arg19: memref<2x1x32xf32, #tpu.memory_space<vmem>>, %arg20: memref<2x1x32xf32, #tpu.memory_space<vmem>>, %arg21: memref<2x1x32xf32, #tpu.memory_space<vmem>>, %arg22: memref<32x1xf32, #tpu.memory_space<vmem>>, %arg23: memref<1x1xf32, #tpu.memory_space<vmem>>, %arg24: memref<1x1x1xf32, #tpu.memory_space<vmem>>) attributes {dimension_semantics = [#tpu.dimension_semantics<parallel>], iteration_bounds = array<i64: 2>, scalar_prefetch = 0 : i64, scratch_operands = 0 : i64, tpu.core_type = #tpu.core_type<tc>, window_params = [{transform_indices = @transform_0, window_bounds = array<i64: 1, 8, 1>}, {transform_indices = @transform_1, window_bounds = array<i64: 1, 1, 8>}, {pipeline_mode = #tpu.pipeline_mode<synchronous>, transform_indices = @transform_2, window_bounds = array<i64: 64, 32>}, {pipeline_mode = #tpu.pipeline_mode<synchronous>, transform_indices = @transform_3, window_bounds = array<i64: 1, 32>}, {pipeline_mode = #tpu.pipeline_mode<synchronous>, transform_indices = @transform_4, window_bounds = array<i64: 1, 32>}, {pipeline_mode = #tpu.pipeline_mode<synchronous>, transform_indices = @transform_5, window_bounds = array<i64: 2, 4, 32, 8>}, {pipeline_mode = #tpu.pipeline_mode<synchronous>, transform_indices = @transform_6, window_bounds = array<i64: 2, 4, 1, 8>}, {pipeline_mode = #tpu.pipeline_mode<synchronous>, transform_indices = @transform_7, window_bounds = array<i64: 2, 4, 32, 8>}, {pipeline_mode = #tpu.pipeline_mode<synchronous>, transform_indices = @transform_8, window_bounds = array<i64: 2, 4, 1, 8>}, {pipeline_mode = #tpu.pipeline_mode<synchronous>, transform_indices = @transform_9, window_bounds = array<i64: 2, 4, 32, 8>}, {pipeline_mode = #tpu.pipeline_mode<synchronous>, transform_indices = @transform_10, window_bounds = array<i64: 2, 4, 1, 8>}, {pipeline_mode = #tpu.pipeline_mode<synchronous>, transform_indices = @transform_11, window_bounds = array<i64: 2, 4, 8, 32>}, {pipeline_mode = #tpu.pipeline_mode<synchronous>, transform_indices = @transform_12, window_bounds = array<i64: 2, 1, 32>}, {pipeline_mode = #tpu.pipeline_mode<synchronous>, transform_indices = @transform_13, window_bounds = array<i64: 2, 1, 32>}, {pipeline_mode = #tpu.pipeline_mode<synchronous>, transform_indices = @transform_14, window_bounds = array<i64: 2, 1, 32>}, {pipeline_mode = #tpu.pipeline_mode<synchronous>, transform_indices = @transform_15, window_bounds = array<i64: 2, 32, 64>}, {pipeline_mode = #tpu.pipeline_mode<synchronous>, transform_indices = @transform_16, window_bounds = array<i64: 2, 1, 64>}, {pipeline_mode = #tpu.pipeline_mode<synchronous>, transform_indices = @transform_17, window_bounds = array<i64: 2, 64, 32>}, {pipeline_mode = #tpu.pipeline_mode<synchronous>, transform_indices = @transform_18, window_bounds = array<i64: 2, 1, 32>}, {pipeline_mode = #tpu.pipeline_mode<synchronous>, transform_indices = @transform_19, window_bounds = array<i64: 2, 1, 32>}, {pipeline_mode = #tpu.pipeline_mode<synchronous>, transform_indices = @transform_20, window_bounds = array<i64: 2, 1, 32>}, {pipeline_mode = #tpu.pipeline_mode<synchronous>, transform_indices = @transform_21, window_bounds = array<i64: 32, 1>}, {pipeline_mode = #tpu.pipeline_mode<synchronous>, transform_indices = @transform_22, window_bounds = array<i64: 1, 1>}, {transform_indices = @transform_23, window_bounds = array<i64: 1, 1, 1>}]} {
    %c0 = arith.constant 0 : index
    %c0_0 = arith.constant 0 : index
    %c0_1 = arith.constant 0 : index
    %0 = vector.load %arg1[%c0, %c0_0, %c0_1] : memref<1x8x1xi32, #tpu.memory_space<vmem>>, vector<1x8x1xi32>
    %1 = vector.shape_cast %0 : vector<1x8x1xi32> to vector<8x1xi32>
    %2 = tpu.iota {dimensions = array<i32: 1>} : vector<8x64xi32>
    %3 = vector.broadcast %1 : vector<8x1xi32> to vector<8x64xi32>
    %4 = arith.cmpi eq, %2, %3 : vector<8x64xi32>
    %5 = arith.extui %4 : vector<8x64xi1> to vector<8x64xi32>
    %6 = arith.sitofp %5 : vector<8x64xi32> to vector<8x64xf32>
    %c0_2 = arith.constant 0 : index
    %c0_3 = arith.constant 0 : index
    %7 = vector.load %arg3[%c0_2, %c0_3] : memref<64x32xf32, #tpu.memory_space<vmem>>, vector<64x32xf32>
    %cst = arith.constant dense<0.000000e+00> : vector<8x32xf32>
    %8 = tpu.matmul %6, %7, %cst {dimension_numbers = #tpu.dot_dimension_numbers<[1], [0], [0], [1], [0, 0, 1, 1], [], []>} : vector<8x64xf32>, vector<64x32xf32>, vector<8x32xf32> -> vector<8x32xf32>
    %c0_4 = arith.constant 0 : index
    %c0_5 = arith.constant 0 : index
    %9 = vector.load %arg4[%c0_4, %c0_5] : memref<1x32xf32, #tpu.memory_space<vmem>>, vector<1x32xf32>
    %c0_6 = arith.constant 0 : index
    %c0_7 = arith.constant 0 : index
    %10 = vector.load %arg5[%c0_6, %c0_7] : memref<1x32xf32, #tpu.memory_space<vmem>>, vector<1x32xf32>
    %cst_8 = arith.constant dense<0.000000e+00> : vector<8xf32>
    %11 = vector.multi_reduction <add>, %8, %cst_8 [1] : vector<8x32xf32> to vector<8xf32>
    %12 = vector.shape_cast %11 : vector<8xf32> to vector<8x1xf32>
    %cst_9 = arith.constant 3.200000e+01 : f32
    %13 = vector.broadcast %cst_9 : f32 to vector<8x1xf32>
    %14 = arith.divf %12, %13 : vector<8x1xf32>
    %15 = vector.broadcast %14 : vector<8x1xf32> to vector<8x32xf32>
    %16 = arith.subf %8, %15 : vector<8x32xf32>
    %17 = arith.mulf %16, %16 : vector<8x32xf32>
    %cst_10 = arith.constant dense<0.000000e+00> : vector<8xf32>
    %18 = vector.multi_reduction <add>, %17, %cst_10 [1] : vector<8x32xf32> to vector<8xf32>
    %19 = vector.shape_cast %18 : vector<8xf32> to vector<8x1xf32>
    %cst_11 = arith.constant 3.200000e+01 : f32
    %20 = vector.broadcast %cst_11 : f32 to vector<8x1xf32>
    %21 = arith.divf %19, %20 : vector<8x1xf32>
    %22 = vector.broadcast %14 : vector<8x1xf32> to vector<8x32xf32>
    %23 = arith.subf %8, %22 : vector<8x32xf32>
    %cst_12 = arith.constant 1.000000e-07 : f32
    %24 = vector.broadcast %cst_12 : f32 to vector<8x1xf32>
    %25 = arith.addf %21, %24 : vector<8x1xf32>
    %26 = math.rsqrt %25 : vector<8x1xf32>
    %27 = vector.broadcast %26 : vector<8x1xf32> to vector<8x32xf32>
    %28 = arith.mulf %23, %27 : vector<8x32xf32>
    %29 = vector.broadcast %9 : vector<1x32xf32> to vector<8x32xf32>
    %30 = arith.mulf %28, %29 : vector<8x32xf32>
    %31 = vector.broadcast %10 : vector<1x32xf32> to vector<8x32xf32>
    %32 = arith.addf %30, %31 : vector<8x32xf32>
    %c0_13 = arith.constant 0 : index
    %c0_14 = arith.constant 0 : index
    %c0_15 = arith.constant 0 : index
    %33 = vector.load %arg2[%c0_13, %c0_14, %c0_15] : memref<1x1x8xf32, #tpu.memory_space<vmem>>, vector<1x1x8xf32>
    %34 = vector.shape_cast %33 : vector<1x1x8xf32> to vector<1x8xf32>
    %cst_16 = arith.constant 1.000000e+00 : f32
    %35 = vector.broadcast %cst_16 : f32 to vector<1x8xf32>
    %36 = arith.subf %35, %34 : vector<1x8xf32>
    %cst_17 = arith.constant -1.000000e+09 : f32
    %37 = vector.broadcast %cst_17 : f32 to vector<1x8xf32>
    %38 = arith.mulf %36, %37 : vector<1x8xf32>
    %39 = vector.shape_cast %38 : vector<1x8xf32> to vector<1x1x8xf32>
    %c0_18 = arith.constant 0 : index
    %c0_19 = arith.constant 0 : index
    %c0_20 = arith.constant 0 : index
    %c0_21 = arith.constant 0 : index
    %40 = vector.load %arg6[%c0_18, %c0_19, %c0_20, %c0_21] : memref<2x4x32x8xf32, #tpu.memory_space<vmem>>, vector<1x4x32x8xf32>
    %41 = vector.shape_cast %40 : vector<1x4x32x8xf32> to vector<4x32x8xf32>
    %42 = arith.truncf %41 : vector<4x32x8xf32> to vector<4x32x8xbf16>
    %c0_22 = arith.constant 0 : index
    %c0_23 = arith.constant 0 : index
    %c0_24 = arith.constant 0 : index
    %c0_25 = arith.constant 0 : index
    %43 = vector.load %arg8[%c0_22, %c0_23, %c0_24, %c0_25] : memref<2x4x32x8xf32, #tpu.memory_space<vmem>>, vector<1x4x32x8xf32>
    %44 = vector.shape_cast %43 : vector<1x4x32x8xf32> to vector<4x32x8xf32>
    %45 = arith.truncf %44 : vector<4x32x8xf32> to vector<4x32x8xbf16>
    %c0_26 = arith.constant 0 : index
    %c0_27 = arith.constant 0 : index
    %c0_28 = arith.constant 0 : index
    %c0_29 = arith.constant 0 : index
    %46 = vector.load %arg10[%c0_26, %c0_27, %c0_28, %c0_29] : memref<2x4x32x8xf32, #tpu.memory_space<vmem>>, vector<1x4x32x8xf32>
    %47 = vector.shape_cast %46 : vector<1x4x32x8xf32> to vector<4x32x8xf32>
    %48 = arith.truncf %47 : vector<4x32x8xf32> to vector<4x32x8xbf16>
    %c0_30 = arith.constant 0 : index
    %c0_31 = arith.constant 0 : index
    %c0_32 = arith.constant 0 : index
    %c0_33 = arith.constant 0 : index
    %49 = vector.load %arg12[%c0_30, %c0_31, %c0_32, %c0_33] : memref<2x4x8x32xf32, #tpu.memory_space<vmem>>, vector<1x4x8x32xf32>
    %50 = vector.shape_cast %49 : vector<1x4x8x32xf32> to vector<4x8x32xf32>
    %51 = arith.truncf %50 : vector<4x8x32xf32> to vector<4x8x32xbf16>
    %52 = vector.shape_cast %32 : vector<8x32xf32> to vector<1x8x32xf32>
    %53 = vector.broadcast %52 : vector<1x8x32xf32> to vector<4x8x32xf32>
    %54 = arith.truncf %53 : vector<4x8x32xf32> to vector<4x8x32xbf16>
    "tpu.trace_start"() <{level = 10 : i32, message = "nsh,nhd->nsd"}> : () -> ()
    %cst_34 = arith.constant dense<0.000000e+00> : vector<4x8x8xf32>
    %55 = tpu.matmul %54, %42, %cst_34 {dimension_numbers = #tpu.dot_dimension_numbers<[2], [1], [1], [2], [0, 0, 0, 1, 1, 2], [0], [0]>} : vector<4x8x32xbf16>, vector<4x32x8xbf16>, vector<4x8x8xf32> -> vector<4x8x8xf32>
    "tpu.trace_stop"() : () -> ()
    %c0_35 = arith.constant 0 : index
    %c0_36 = arith.constant 0 : index
    %c0_37 = arith.constant 0 : index
    %c0_38 = arith.constant 0 : index
    %56 = vector.load %arg7[%c0_35, %c0_36, %c0_37, %c0_38] : memref<2x4x1x8xf32, #tpu.memory_space<vmem>>, vector<1x4x1x8xf32>
    %57 = vector.shape_cast %56 : vector<1x4x1x8xf32> to vector<4x1x8xf32>
    %58 = vector.broadcast %57 : vector<4x1x8xf32> to vector<4x8x8xf32>
    %59 = arith.addf %55, %58 : vector<4x8x8xf32>
    "tpu.trace_start"() <{level = 10 : i32, message = "nsh,nhd->nsd"}> : () -> ()
    %cst_39 = arith.constant dense<0.000000e+00> : vector<4x8x8xf32>
    %60 = tpu.matmul %54, %45, %cst_39 {dimension_numbers = #tpu.dot_dimension_numbers<[2], [1], [1], [2], [0, 0, 0, 1, 1, 2], [0], [0]>} : vector<4x8x32xbf16>, vector<4x32x8xbf16>, vector<4x8x8xf32> -> vector<4x8x8xf32>
    "tpu.trace_stop"() : () -> ()
    %c0_40 = arith.constant 0 : index
    %c0_41 = arith.constant 0 : index
    %c0_42 = arith.constant 0 : index
    %c0_43 = arith.constant 0 : index
    %61 = vector.load %arg9[%c0_40, %c0_41, %c0_42, %c0_43] : memref<2x4x1x8xf32, #tpu.memory_space<vmem>>, vector<1x4x1x8xf32>
    %62 = vector.shape_cast %61 : vector<1x4x1x8xf32> to vector<4x1x8xf32>
    %63 = vector.broadcast %62 : vector<4x1x8xf32> to vector<4x8x8xf32>
    %64 = arith.addf %60, %63 : vector<4x8x8xf32>
    "tpu.trace_start"() <{level = 10 : i32, message = "nsh,nhd->nsd"}> : () -> ()
    %cst_44 = arith.constant dense<0.000000e+00> : vector<4x8x8xf32>
    %65 = tpu.matmul %54, %48, %cst_44 {dimension_numbers = #tpu.dot_dimension_numbers<[2], [1], [1], [2], [0, 0, 0, 1, 1, 2], [0], [0]>} : vector<4x8x32xbf16>, vector<4x32x8xbf16>, vector<4x8x8xf32> -> vector<4x8x8xf32>
    "tpu.trace_stop"() : () -> ()
    %c0_45 = arith.constant 0 : index
    %c0_46 = arith.constant 0 : index
    %c0_47 = arith.constant 0 : index
    %c0_48 = arith.constant 0 : index
    %66 = vector.load %arg11[%c0_45, %c0_46, %c0_47, %c0_48] : memref<2x4x1x8xf32, #tpu.memory_space<vmem>>, vector<1x4x1x8xf32>
    %67 = vector.shape_cast %66 : vector<1x4x1x8xf32> to vector<4x1x8xf32>
    %68 = vector.broadcast %67 : vector<4x1x8xf32> to vector<4x8x8xf32>
    %69 = arith.addf %65, %68 : vector<4x8x8xf32>
    %70 = arith.truncf %59 : vector<4x8x8xf32> to vector<4x8x8xbf16>
    %71 = arith.truncf %64 : vector<4x8x8xf32> to vector<4x8x8xbf16>
    "tpu.trace_start"() <{level = 10 : i32, message = "nsd,ntd->nst"}> : () -> ()
    %cst_49 = arith.constant dense<0.000000e+00> : vector<4x8x8xf32>
    %72 = tpu.matmul %70, %71, %cst_49 {dimension_numbers = #tpu.dot_dimension_numbers<[2], [2], [1], [1], [0, 0, 0, 1, 1, 1], [0], [0]>} : vector<4x8x8xbf16>, vector<4x8x8xbf16>, vector<4x8x8xf32> -> vector<4x8x8xf32>
    "tpu.trace_stop"() : () -> ()
    %cst_50 = arith.constant 0.353553385 : f32
    %73 = vector.broadcast %cst_50 : f32 to vector<4x8x8xf32>
    %74 = arith.mulf %72, %73 : vector<4x8x8xf32>
    %75 = vector.broadcast %39 : vector<1x1x8xf32> to vector<4x8x8xf32>
    %76 = arith.addf %74, %75 : vector<4x8x8xf32>
    %cst_51 = arith.constant dense<0xFF800000> : vector<4x8xf32>
    %77 = vector.multi_reduction <maximumf>, %76, %cst_51 [2] : vector<4x8x8xf32> to vector<4x8xf32>
    %cst_52 = arith.constant 0xFF800000 : f32
    %78 = vector.broadcast %cst_52 : f32 to vector<4x8xf32>
    %79 = arith.maximumf %78, %77 : vector<4x8xf32>
    %80 = vector.shape_cast %79 : vector<4x8xf32> to vector<4x8x1xf32>
    %81 = vector.broadcast %80 : vector<4x8x1xf32> to vector<4x8x8xf32>
    %82 = arith.subf %76, %81 : vector<4x8x8xf32>
    %83 = math.exp %82 : vector<4x8x8xf32>
    %cst_53 = arith.constant dense<0.000000e+00> : vector<4x8xf32>
    %84 = vector.multi_reduction <add>, %83, %cst_53 [2] : vector<4x8x8xf32> to vector<4x8xf32>
    %85 = vector.shape_cast %84 : vector<4x8xf32> to vector<4x8x1xf32>
    %86 = vector.broadcast %85 : vector<4x8x1xf32> to vector<4x8x8xf32>
    %87 = arith.divf %83, %86 : vector<4x8x8xf32>
    %88 = arith.truncf %87 : vector<4x8x8xf32> to vector<4x8x8xbf16>
    %89 = arith.truncf %69 : vector<4x8x8xf32> to vector<4x8x8xbf16>
    "tpu.trace_start"() <{level = 10 : i32, message = "nst,ntd->nsd"}> : () -> ()
    %cst_54 = arith.constant dense<0.000000e+00> : vector<4x8x8xf32>
    %90 = tpu.matmul %88, %89, %cst_54 {dimension_numbers = #tpu.dot_dimension_numbers<[2], [1], [1], [2], [0, 0, 0, 1, 1, 2], [0], [0]>} : vector<4x8x8xbf16>, vector<4x8x8xbf16>, vector<4x8x8xf32> -> vector<4x8x8xf32>
    "tpu.trace_stop"() : () -> ()
    %91 = arith.truncf %90 : vector<4x8x8xf32> to vector<4x8x8xbf16>
    "tpu.trace_start"() <{level = 10 : i32, message = "nsd,ndh->nsh"}> : () -> ()
    %cst_55 = arith.constant dense<0.000000e+00> : vector<4x8x32xf32>
    %92 = tpu.matmul %91, %51, %cst_55 {dimension_numbers = #tpu.dot_dimension_numbers<[2], [1], [1], [2], [0, 0, 0, 1, 1, 2], [0], [0]>} : vector<4x8x8xbf16>, vector<4x8x32xbf16>, vector<4x8x32xf32> -> vector<4x8x32xf32>
    "tpu.trace_stop"() : () -> ()
    %cst_56 = arith.constant dense<0.000000e+00> : vector<8x32xf32>
    %93 = vector.multi_reduction <add>, %92, %cst_56 [0] : vector<4x8x32xf32> to vector<8x32xf32>
    %c0_57 = arith.constant 0 : index
    %c0_58 = arith.constant 0 : index
    %c0_59 = arith.constant 0 : index
    %94 = vector.load %arg13[%c0_57, %c0_58, %c0_59] : memref<2x1x32xf32, #tpu.memory_space<vmem>>, vector<1x1x32xf32>
    %95 = vector.shape_cast %94 : vector<1x1x32xf32> to vector<1x32xf32>
    %96 = vector.broadcast %95 : vector<1x32xf32> to vector<8x32xf32>
    %97 = arith.addf %93, %96 : vector<8x32xf32>
    %98 = arith.addf %97, %32 : vector<8x32xf32>
    %c0_60 = arith.constant 0 : index
    %c0_61 = arith.constant 0 : index
    %c0_62 = arith.constant 0 : index
    %99 = vector.load %arg14[%c0_60, %c0_61, %c0_62] : memref<2x1x32xf32, #tpu.memory_space<vmem>>, vector<1x1x32xf32>
    %100 = vector.shape_cast %99 : vector<1x1x32xf32> to vector<1x32xf32>
    %c0_63 = arith.constant 0 : index
    %c0_64 = arith.constant 0 : index
    %c0_65 = arith.constant 0 : index
    %101 = vector.load %arg15[%c0_63, %c0_64, %c0_65] : memref<2x1x32xf32, #tpu.memory_space<vmem>>, vector<1x1x32xf32>
    %102 = vector.shape_cast %101 : vector<1x1x32xf32> to vector<1x32xf32>
    %cst_66 = arith.constant dense<0.000000e+00> : vector<8xf32>
    %103 = vector.multi_reduction <add>, %98, %cst_66 [1] : vector<8x32xf32> to vector<8xf32>
    %104 = vector.shape_cast %103 : vector<8xf32> to vector<8x1xf32>
    %cst_67 = arith.constant 3.200000e+01 : f32
    %105 = vector.broadcast %cst_67 : f32 to vector<8x1xf32>
    %106 = arith.divf %104, %105 : vector<8x1xf32>
    %107 = vector.broadcast %106 : vector<8x1xf32> to vector<8x32xf32>
    %108 = arith.subf %98, %107 : vector<8x32xf32>
    %109 = arith.mulf %108, %108 : vector<8x32xf32>
    %cst_68 = arith.constant dense<0.000000e+00> : vector<8xf32>
    %110 = vector.multi_reduction <add>, %109, %cst_68 [1] : vector<8x32xf32> to vector<8xf32>
    %111 = vector.shape_cast %110 : vector<8xf32> to vector<8x1xf32>
    %cst_69 = arith.constant 3.200000e+01 : f32
    %112 = vector.broadcast %cst_69 : f32 to vector<8x1xf32>
    %113 = arith.divf %111, %112 : vector<8x1xf32>
    %114 = vector.broadcast %106 : vector<8x1xf32> to vector<8x32xf32>
    %115 = arith.subf %98, %114 : vector<8x32xf32>
    %cst_70 = arith.constant 1.000000e-07 : f32
    %116 = vector.broadcast %cst_70 : f32 to vector<8x1xf32>
    %117 = arith.addf %113, %116 : vector<8x1xf32>
    %118 = math.rsqrt %117 : vector<8x1xf32>
    %119 = vector.broadcast %118 : vector<8x1xf32> to vector<8x32xf32>
    %120 = arith.mulf %115, %119 : vector<8x32xf32>
    %121 = vector.broadcast %100 : vector<1x32xf32> to vector<8x32xf32>
    %122 = arith.mulf %120, %121 : vector<8x32xf32>
    %123 = vector.broadcast %102 : vector<1x32xf32> to vector<8x32xf32>
    %124 = arith.addf %122, %123 : vector<8x32xf32>
    %125 = arith.truncf %124 : vector<8x32xf32> to vector<8x32xbf16>
    %c0_71 = arith.constant 0 : index
    %c0_72 = arith.constant 0 : index
    %c0_73 = arith.constant 0 : index
    %126 = vector.load %arg16[%c0_71, %c0_72, %c0_73] : memref<2x32x64xf32, #tpu.memory_space<vmem>>, vector<1x32x64xf32>
    %127 = vector.shape_cast %126 : vector<1x32x64xf32> to vector<32x64xf32>
    %128 = arith.truncf %127 : vector<32x64xf32> to vector<32x64xbf16>
    %cst_74 = arith.constant dense<0.000000e+00> : vector<8x64xf32>
    %129 = tpu.matmul %125, %128, %cst_74 {dimension_numbers = #tpu.dot_dimension_numbers<[1], [0], [0], [1], [0, 0, 1, 1], [], []>} : vector<8x32xbf16>, vector<32x64xbf16>, vector<8x64xf32> -> vector<8x64xf32>
    %c0_75 = arith.constant 0 : index
    %c0_76 = arith.constant 0 : index
    %c0_77 = arith.constant 0 : index
    %130 = vector.load %arg17[%c0_75, %c0_76, %c0_77] : memref<2x1x64xf32, #tpu.memory_space<vmem>>, vector<1x1x64xf32>
    %131 = vector.shape_cast %130 : vector<1x1x64xf32> to vector<1x64xf32>
    %132 = vector.broadcast %131 : vector<1x64xf32> to vector<8x64xf32>
    %133 = arith.addf %129, %132 : vector<8x64xf32>
    %cst_78 = arith.constant 5.000000e-01 : f32
    %134 = vector.broadcast %cst_78 : f32 to vector<8x64xf32>
    %135 = arith.mulf %134, %133 : vector<8x64xf32>
    %cst_79 = arith.constant 0.707106769 : f32
    %136 = vector.broadcast %cst_79 : f32 to vector<8x64xf32>
    %137 = arith.mulf %133, %136 : vector<8x64xf32>
    %138 = math.erf %137 : vector<8x64xf32>
    %cst_80 = arith.constant 1.000000e+00 : f32
    %139 = vector.broadcast %cst_80 : f32 to vector<8x64xf32>
    %140 = arith.addf %139, %138 : vector<8x64xf32>
    %141 = arith.mulf %135, %140 : vector<8x64xf32>
    %142 = arith.truncf %141 : vector<8x64xf32> to vector<8x64xbf16>
    %c0_81 = arith.constant 0 : index
    %c0_82 = arith.constant 0 : index
    %c0_83 = arith.constant 0 : index
    %143 = vector.load %arg18[%c0_81, %c0_82, %c0_83] : memref<2x64x32xf32, #tpu.memory_space<vmem>>, vector<1x64x32xf32>
    %144 = vector.shape_cast %143 : vector<1x64x32xf32> to vector<64x32xf32>
    %145 = arith.truncf %144 : vector<64x32xf32> to vector<64x32xbf16>
    %cst_84 = arith.constant dense<0.000000e+00> : vector<8x32xf32>
    %146 = tpu.matmul %142, %145, %cst_84 {dimension_numbers = #tpu.dot_dimension_numbers<[1], [0], [0], [1], [0, 0, 1, 1], [], []>} : vector<8x64xbf16>, vector<64x32xbf16>, vector<8x32xf32> -> vector<8x32xf32>
    %c0_85 = arith.constant 0 : index
    %c0_86 = arith.constant 0 : index
    %c0_87 = arith.constant 0 : index
    %147 = vector.load %arg19[%c0_85, %c0_86, %c0_87] : memref<2x1x32xf32, #tpu.memory_space<vmem>>, vector<1x1x32xf32>
    %148 = vector.shape_cast %147 : vector<1x1x32xf32> to vector<1x32xf32>
    %149 = vector.broadcast %148 : vector<1x32xf32> to vector<8x32xf32>
    %150 = arith.addf %146, %149 : vector<8x32xf32>
    %151 = arith.addf %150, %124 : vector<8x32xf32>
    %c0_88 = arith.constant 0 : index
    %c0_89 = arith.constant 0 : index
    %c0_90 = arith.constant 0 : index
    %152 = vector.load %arg20[%c0_88, %c0_89, %c0_90] : memref<2x1x32xf32, #tpu.memory_space<vmem>>, vector<1x1x32xf32>
    %153 = vector.shape_cast %152 : vector<1x1x32xf32> to vector<1x32xf32>
    %c0_91 = arith.constant 0 : index
    %c0_92 = arith.constant 0 : index
    %c0_93 = arith.constant 0 : index
    %154 = vector.load %arg21[%c0_91, %c0_92, %c0_93] : memref<2x1x32xf32, #tpu.memory_space<vmem>>, vector<1x1x32xf32>
    %155 = vector.shape_cast %154 : vector<1x1x32xf32> to vector<1x32xf32>
    %cst_94 = arith.constant dense<0.000000e+00> : vector<8xf32>
    %156 = vector.multi_reduction <add>, %151, %cst_94 [1] : vector<8x32xf32> to vector<8xf32>
    %157 = vector.shape_cast %156 : vector<8xf32> to vector<8x1xf32>
    %cst_95 = arith.constant 3.200000e+01 : f32
    %158 = vector.broadcast %cst_95 : f32 to vector<8x1xf32>
    %159 = arith.divf %157, %158 : vector<8x1xf32>
    %160 = vector.broadcast %159 : vector<8x1xf32> to vector<8x32xf32>
    %161 = arith.subf %151, %160 : vector<8x32xf32>
    %162 = arith.mulf %161, %161 : vector<8x32xf32>
    %cst_96 = arith.constant dense<0.000000e+00> : vector<8xf32>
    %163 = vector.multi_reduction <add>, %162, %cst_96 [1] : vector<8x32xf32> to vector<8xf32>
    %164 = vector.shape_cast %163 : vector<8xf32> to vector<8x1xf32>
    %cst_97 = arith.constant 3.200000e+01 : f32
    %165 = vector.broadcast %cst_97 : f32 to vector<8x1xf32>
    %166 = arith.divf %164, %165 : vector<8x1xf32>
    %167 = vector.broadcast %159 : vector<8x1xf32> to vector<8x32xf32>
    %168 = arith.subf %151, %167 : vector<8x32xf32>
    %cst_98 = arith.constant 1.000000e-07 : f32
    %169 = vector.broadcast %cst_98 : f32 to vector<8x1xf32>
    %170 = arith.addf %166, %169 : vector<8x1xf32>
    %171 = math.rsqrt %170 : vector<8x1xf32>
    %172 = vector.broadcast %171 : vector<8x1xf32> to vector<8x32xf32>
    %173 = arith.mulf %168, %172 : vector<8x32xf32>
    %174 = vector.broadcast %153 : vector<1x32xf32> to vector<8x32xf32>
    %175 = arith.mulf %173, %174 : vector<8x32xf32>
    %176 = vector.broadcast %155 : vector<1x32xf32> to vector<8x32xf32>
    %177 = arith.addf %175, %176 : vector<8x32xf32>
    %c1 = arith.constant 1 : index
    %c0_99 = arith.constant 0 : index
    %c0_100 = arith.constant 0 : index
    %c0_101 = arith.constant 0 : index
    %178 = vector.load %arg6[%c1, %c0_99, %c0_100, %c0_101] : memref<2x4x32x8xf32, #tpu.memory_space<vmem>>, vector<1x4x32x8xf32>
    %179 = vector.shape_cast %178 : vector<1x4x32x8xf32> to vector<4x32x8xf32>
    %180 = arith.truncf %179 : vector<4x32x8xf32> to vector<4x32x8xbf16>
    %c1_102 = arith.constant 1 : index
    %c0_103 = arith.constant 0 : index
    %c0_104 = arith.constant 0 : index
    %c0_105 = arith.constant 0 : index
    %181 = vector.load %arg8[%c1_102, %c0_103, %c0_104, %c0_105] : memref<2x4x32x8xf32, #tpu.memory_space<vmem>>, vector<1x4x32x8xf32>
    %182 = vector.shape_cast %181 : vector<1x4x32x8xf32> to vector<4x32x8xf32>
    %183 = arith.truncf %182 : vector<4x32x8xf32> to vector<4x32x8xbf16>
    %c1_106 = arith.constant 1 : index
    %c0_107 = arith.constant 0 : index
    %c0_108 = arith.constant 0 : index
    %c0_109 = arith.constant 0 : index
    %184 = vector.load %arg10[%c1_106, %c0_107, %c0_108, %c0_109] : memref<2x4x32x8xf32, #tpu.memory_space<vmem>>, vector<1x4x32x8xf32>
    %185 = vector.shape_cast %184 : vector<1x4x32x8xf32> to vector<4x32x8xf32>
    %186 = arith.truncf %185 : vector<4x32x8xf32> to vector<4x32x8xbf16>
    %c1_110 = arith.constant 1 : index
    %c0_111 = arith.constant 0 : index
    %c0_112 = arith.constant 0 : index
    %c0_113 = arith.constant 0 : index
    %187 = vector.load %arg12[%c1_110, %c0_111, %c0_112, %c0_113] : memref<2x4x8x32xf32, #tpu.memory_space<vmem>>, vector<1x4x8x32xf32>
    %188 = vector.shape_cast %187 : vector<1x4x8x32xf32> to vector<4x8x32xf32>
    %189 = arith.truncf %188 : vector<4x8x32xf32> to vector<4x8x32xbf16>
    %190 = vector.shape_cast %177 : vector<8x32xf32> to vector<1x8x32xf32>
    %191 = vector.broadcast %190 : vector<1x8x32xf32> to vector<4x8x32xf32>
    %192 = arith.truncf %191 : vector<4x8x32xf32> to vector<4x8x32xbf16>
    "tpu.trace_start"() <{level = 10 : i32, message = "nsh,nhd->nsd"}> : () -> ()
    %cst_114 = arith.constant dense<0.000000e+00> : vector<4x8x8xf32>
    %193 = tpu.matmul %192, %180, %cst_114 {dimension_numbers = #tpu.dot_dimension_numbers<[2], [1], [1], [2], [0, 0, 0, 1, 1, 2], [0], [0]>} : vector<4x8x32xbf16>, vector<4x32x8xbf16>, vector<4x8x8xf32> -> vector<4x8x8xf32>
    "tpu.trace_stop"() : () -> ()
    %c1_115 = arith.constant 1 : index
    %c0_116 = arith.constant 0 : index
    %c0_117 = arith.constant 0 : index
    %c0_118 = arith.constant 0 : index
    %194 = vector.load %arg7[%c1_115, %c0_116, %c0_117, %c0_118] : memref<2x4x1x8xf32, #tpu.memory_space<vmem>>, vector<1x4x1x8xf32>
    %195 = vector.shape_cast %194 : vector<1x4x1x8xf32> to vector<4x1x8xf32>
    %196 = vector.broadcast %195 : vector<4x1x8xf32> to vector<4x8x8xf32>
    %197 = arith.addf %193, %196 : vector<4x8x8xf32>
    "tpu.trace_start"() <{level = 10 : i32, message = "nsh,nhd->nsd"}> : () -> ()
    %cst_119 = arith.constant dense<0.000000e+00> : vector<4x8x8xf32>
    %198 = tpu.matmul %192, %183, %cst_119 {dimension_numbers = #tpu.dot_dimension_numbers<[2], [1], [1], [2], [0, 0, 0, 1, 1, 2], [0], [0]>} : vector<4x8x32xbf16>, vector<4x32x8xbf16>, vector<4x8x8xf32> -> vector<4x8x8xf32>
    "tpu.trace_stop"() : () -> ()
    %c1_120 = arith.constant 1 : index
    %c0_121 = arith.constant 0 : index
    %c0_122 = arith.constant 0 : index
    %c0_123 = arith.constant 0 : index
    %199 = vector.load %arg9[%c1_120, %c0_121, %c0_122, %c0_123] : memref<2x4x1x8xf32, #tpu.memory_space<vmem>>, vector<1x4x1x8xf32>
    %200 = vector.shape_cast %199 : vector<1x4x1x8xf32> to vector<4x1x8xf32>
    %201 = vector.broadcast %200 : vector<4x1x8xf32> to vector<4x8x8xf32>
    %202 = arith.addf %198, %201 : vector<4x8x8xf32>
    "tpu.trace_start"() <{level = 10 : i32, message = "nsh,nhd->nsd"}> : () -> ()
    %cst_124 = arith.constant dense<0.000000e+00> : vector<4x8x8xf32>
    %203 = tpu.matmul %192, %186, %cst_124 {dimension_numbers = #tpu.dot_dimension_numbers<[2], [1], [1], [2], [0, 0, 0, 1, 1, 2], [0], [0]>} : vector<4x8x32xbf16>, vector<4x32x8xbf16>, vector<4x8x8xf32> -> vector<4x8x8xf32>
    "tpu.trace_stop"() : () -> ()
    %c1_125 = arith.constant 1 : index
    %c0_126 = arith.constant 0 : index
    %c0_127 = arith.constant 0 : index
    %c0_128 = arith.constant 0 : index
    %204 = vector.load %arg11[%c1_125, %c0_126, %c0_127, %c0_128] : memref<2x4x1x8xf32, #tpu.memory_space<vmem>>, vector<1x4x1x8xf32>
    %205 = vector.shape_cast %204 : vector<1x4x1x8xf32> to vector<4x1x8xf32>
    %206 = vector.broadcast %205 : vector<4x1x8xf32> to vector<4x8x8xf32>
    %207 = arith.addf %203, %206 : vector<4x8x8xf32>
    %208 = arith.truncf %197 : vector<4x8x8xf32> to vector<4x8x8xbf16>
    %209 = arith.truncf %202 : vector<4x8x8xf32> to vector<4x8x8xbf16>
    "tpu.trace_start"() <{level = 10 : i32, message = "nsd,ntd->nst"}> : () -> ()
    %cst_129 = arith.constant dense<0.000000e+00> : vector<4x8x8xf32>
    %210 = tpu.matmul %208, %209, %cst_129 {dimension_numbers = #tpu.dot_dimension_numbers<[2], [2], [1], [1], [0, 0, 0, 1, 1, 1], [0], [0]>} : vector<4x8x8xbf16>, vector<4x8x8xbf16>, vector<4x8x8xf32> -> vector<4x8x8xf32>
    "tpu.trace_stop"() : () -> ()
    %cst_130 = arith.constant 0.353553385 : f32
    %211 = vector.broadcast %cst_130 : f32 to vector<4x8x8xf32>
    %212 = arith.mulf %210, %211 : vector<4x8x8xf32>
    %213 = vector.broadcast %39 : vector<1x1x8xf32> to vector<4x8x8xf32>
    %214 = arith.addf %212, %213 : vector<4x8x8xf32>
    %cst_131 = arith.constant dense<0xFF800000> : vector<4x8xf32>
    %215 = vector.multi_reduction <maximumf>, %214, %cst_131 [2] : vector<4x8x8xf32> to vector<4x8xf32>
    %cst_132 = arith.constant 0xFF800000 : f32
    %216 = vector.broadcast %cst_132 : f32 to vector<4x8xf32>
    %217 = arith.maximumf %216, %215 : vector<4x8xf32>
    %218 = vector.shape_cast %217 : vector<4x8xf32> to vector<4x8x1xf32>
    %219 = vector.broadcast %218 : vector<4x8x1xf32> to vector<4x8x8xf32>
    %220 = arith.subf %214, %219 : vector<4x8x8xf32>
    %221 = math.exp %220 : vector<4x8x8xf32>
    %cst_133 = arith.constant dense<0.000000e+00> : vector<4x8xf32>
    %222 = vector.multi_reduction <add>, %221, %cst_133 [2] : vector<4x8x8xf32> to vector<4x8xf32>
    %223 = vector.shape_cast %222 : vector<4x8xf32> to vector<4x8x1xf32>
    %224 = vector.broadcast %223 : vector<4x8x1xf32> to vector<4x8x8xf32>
    %225 = arith.divf %221, %224 : vector<4x8x8xf32>
    %226 = arith.truncf %225 : vector<4x8x8xf32> to vector<4x8x8xbf16>
    %227 = arith.truncf %207 : vector<4x8x8xf32> to vector<4x8x8xbf16>
    "tpu.trace_start"() <{level = 10 : i32, message = "nst,ntd->nsd"}> : () -> ()
    %cst_134 = arith.constant dense<0.000000e+00> : vector<4x8x8xf32>
    %228 = tpu.matmul %226, %227, %cst_134 {dimension_numbers = #tpu.dot_dimension_numbers<[2], [1], [1], [2], [0, 0, 0, 1, 1, 2], [0], [0]>} : vector<4x8x8xbf16>, vector<4x8x8xbf16>, vector<4x8x8xf32> -> vector<4x8x8xf32>
    "tpu.trace_stop"() : () -> ()
    %229 = arith.truncf %228 : vector<4x8x8xf32> to vector<4x8x8xbf16>
    "tpu.trace_start"() <{level = 10 : i32, message = "nsd,ndh->nsh"}> : () -> ()
    %cst_135 = arith.constant dense<0.000000e+00> : vector<4x8x32xf32>
    %230 = tpu.matmul %229, %189, %cst_135 {dimension_numbers = #tpu.dot_dimension_numbers<[2], [1], [1], [2], [0, 0, 0, 1, 1, 2], [0], [0]>} : vector<4x8x8xbf16>, vector<4x8x32xbf16>, vector<4x8x32xf32> -> vector<4x8x32xf32>
    "tpu.trace_stop"() : () -> ()
    %cst_136 = arith.constant dense<0.000000e+00> : vector<8x32xf32>
    %231 = vector.multi_reduction <add>, %230, %cst_136 [0] : vector<4x8x32xf32> to vector<8x32xf32>
    %c1_137 = arith.constant 1 : index
    %c0_138 = arith.constant 0 : index
    %c0_139 = arith.constant 0 : index
    %232 = vector.load %arg13[%c1_137, %c0_138, %c0_139] : memref<2x1x32xf32, #tpu.memory_space<vmem>>, vector<1x1x32xf32>
    %233 = vector.shape_cast %232 : vector<1x1x32xf32> to vector<1x32xf32>
    %234 = vector.broadcast %233 : vector<1x32xf32> to vector<8x32xf32>
    %235 = arith.addf %231, %234 : vector<8x32xf32>
    %236 = arith.addf %235, %177 : vector<8x32xf32>
    %c1_140 = arith.constant 1 : index
    %c0_141 = arith.constant 0 : index
    %c0_142 = arith.constant 0 : index
    %237 = vector.load %arg14[%c1_140, %c0_141, %c0_142] : memref<2x1x32xf32, #tpu.memory_space<vmem>>, vector<1x1x32xf32>
    %238 = vector.shape_cast %237 : vector<1x1x32xf32> to vector<1x32xf32>
    %c1_143 = arith.constant 1 : index
    %c0_144 = arith.constant 0 : index
    %c0_145 = arith.constant 0 : index
    %239 = vector.load %arg15[%c1_143, %c0_144, %c0_145] : memref<2x1x32xf32, #tpu.memory_space<vmem>>, vector<1x1x32xf32>
    %240 = vector.shape_cast %239 : vector<1x1x32xf32> to vector<1x32xf32>
    %cst_146 = arith.constant dense<0.000000e+00> : vector<8xf32>
    %241 = vector.multi_reduction <add>, %236, %cst_146 [1] : vector<8x32xf32> to vector<8xf32>
    %242 = vector.shape_cast %241 : vector<8xf32> to vector<8x1xf32>
    %cst_147 = arith.constant 3.200000e+01 : f32
    %243 = vector.broadcast %cst_147 : f32 to vector<8x1xf32>
    %244 = arith.divf %242, %243 : vector<8x1xf32>
    %245 = vector.broadcast %244 : vector<8x1xf32> to vector<8x32xf32>
    %246 = arith.subf %236, %245 : vector<8x32xf32>
    %247 = arith.mulf %246, %246 : vector<8x32xf32>
    %cst_148 = arith.constant dense<0.000000e+00> : vector<8xf32>
    %248 = vector.multi_reduction <add>, %247, %cst_148 [1] : vector<8x32xf32> to vector<8xf32>
    %249 = vector.shape_cast %248 : vector<8xf32> to vector<8x1xf32>
    %cst_149 = arith.constant 3.200000e+01 : f32
    %250 = vector.broadcast %cst_149 : f32 to vector<8x1xf32>
    %251 = arith.divf %249, %250 : vector<8x1xf32>
    %252 = vector.broadcast %244 : vector<8x1xf32> to vector<8x32xf32>
    %253 = arith.subf %236, %252 : vector<8x32xf32>
    %cst_150 = arith.constant 1.000000e-07 : f32
    %254 = vector.broadcast %cst_150 : f32 to vector<8x1xf32>
    %255 = arith.addf %251, %254 : vector<8x1xf32>
    %256 = math.rsqrt %255 : vector<8x1xf32>
    %257 = vector.broadcast %256 : vector<8x1xf32> to vector<8x32xf32>
    %258 = arith.mulf %253, %257 : vector<8x32xf32>
    %259 = vector.broadcast %238 : vector<1x32xf32> to vector<8x32xf32>
    %260 = arith.mulf %258, %259 : vector<8x32xf32>
    %261 = vector.broadcast %240 : vector<1x32xf32> to vector<8x32xf32>
    %262 = arith.addf %260, %261 : vector<8x32xf32>
    %263 = arith.truncf %262 : vector<8x32xf32> to vector<8x32xbf16>
    %c1_151 = arith.constant 1 : index
    %c0_152 = arith.constant 0 : index
    %c0_153 = arith.constant 0 : index
    %264 = vector.load %arg16[%c1_151, %c0_152, %c0_153] : memref<2x32x64xf32, #tpu.memory_space<vmem>>, vector<1x32x64xf32>
    %265 = vector.shape_cast %264 : vector<1x32x64xf32> to vector<32x64xf32>
    %266 = arith.truncf %265 : vector<32x64xf32> to vector<32x64xbf16>
    %cst_154 = arith.constant dense<0.000000e+00> : vector<8x64xf32>
    %267 = tpu.matmul %263, %266, %cst_154 {dimension_numbers = #tpu.dot_dimension_numbers<[1], [0], [0], [1], [0, 0, 1, 1], [], []>} : vector<8x32xbf16>, vector<32x64xbf16>, vector<8x64xf32> -> vector<8x64xf32>
    %c1_155 = arith.constant 1 : index
    %c0_156 = arith.constant 0 : index
    %c0_157 = arith.constant 0 : index
    %268 = vector.load %arg17[%c1_155, %c0_156, %c0_157] : memref<2x1x64xf32, #tpu.memory_space<vmem>>, vector<1x1x64xf32>
    %269 = vector.shape_cast %268 : vector<1x1x64xf32> to vector<1x64xf32>
    %270 = vector.broadcast %269 : vector<1x64xf32> to vector<8x64xf32>
    %271 = arith.addf %267, %270 : vector<8x64xf32>
    %cst_158 = arith.constant 5.000000e-01 : f32
    %272 = vector.broadcast %cst_158 : f32 to vector<8x64xf32>
    %273 = arith.mulf %272, %271 : vector<8x64xf32>
    %cst_159 = arith.constant 0.707106769 : f32
    %274 = vector.broadcast %cst_159 : f32 to vector<8x64xf32>
    %275 = arith.mulf %271, %274 : vector<8x64xf32>
    %276 = math.erf %275 : vector<8x64xf32>
    %cst_160 = arith.constant 1.000000e+00 : f32
    %277 = vector.broadcast %cst_160 : f32 to vector<8x64xf32>
    %278 = arith.addf %277, %276 : vector<8x64xf32>
    %279 = arith.mulf %273, %278 : vector<8x64xf32>
    %280 = arith.truncf %279 : vector<8x64xf32> to vector<8x64xbf16>
    %c1_161 = arith.constant 1 : index
    %c0_162 = arith.constant 0 : index
    %c0_163 = arith.constant 0 : index
    %281 = vector.load %arg18[%c1_161, %c0_162, %c0_163] : memref<2x64x32xf32, #tpu.memory_space<vmem>>, vector<1x64x32xf32>
    %282 = vector.shape_cast %281 : vector<1x64x32xf32> to vector<64x32xf32>
    %283 = arith.truncf %282 : vector<64x32xf32> to vector<64x32xbf16>
    %cst_164 = arith.constant dense<0.000000e+00> : vector<8x32xf32>
    %284 = tpu.matmul %280, %283, %cst_164 {dimension_numbers = #tpu.dot_dimension_numbers<[1], [0], [0], [1], [0, 0, 1, 1], [], []>} : vector<8x64xbf16>, vector<64x32xbf16>, vector<8x32xf32> -> vector<8x32xf32>
    %c1_165 = arith.constant 1 : index
    %c0_166 = arith.constant 0 : index
    %c0_167 = arith.constant 0 : index
    %285 = vector.load %arg19[%c1_165, %c0_166, %c0_167] : memref<2x1x32xf32, #tpu.memory_space<vmem>>, vector<1x1x32xf32>
    %286 = vector.shape_cast %285 : vector<1x1x32xf32> to vector<1x32xf32>
    %287 = vector.broadcast %286 : vector<1x32xf32> to vector<8x32xf32>
    %288 = arith.addf %284, %287 : vector<8x32xf32>
    %289 = arith.addf %288, %262 : vector<8x32xf32>
    %c1_168 = arith.constant 1 : index
    %c0_169 = arith.constant 0 : index
    %c0_170 = arith.constant 0 : index
    %290 = vector.load %arg20[%c1_168, %c0_169, %c0_170] : memref<2x1x32xf32, #tpu.memory_space<vmem>>, vector<1x1x32xf32>
    %291 = vector.shape_cast %290 : vector<1x1x32xf32> to vector<1x32xf32>
    %c1_171 = arith.constant 1 : index
    %c0_172 = arith.constant 0 : index
    %c0_173 = arith.constant 0 : index
    %292 = vector.load %arg21[%c1_171, %c0_172, %c0_173] : memref<2x1x32xf32, #tpu.memory_space<vmem>>, vector<1x1x32xf32>
    %293 = vector.shape_cast %292 : vector<1x1x32xf32> to vector<1x32xf32>
    %cst_174 = arith.constant dense<0.000000e+00> : vector<8xf32>
    %294 = vector.multi_reduction <add>, %289, %cst_174 [1] : vector<8x32xf32> to vector<8xf32>
    %295 = vector.shape_cast %294 : vector<8xf32> to vector<8x1xf32>
    %cst_175 = arith.constant 3.200000e+01 : f32
    %296 = vector.broadcast %cst_175 : f32 to vector<8x1xf32>
    %297 = arith.divf %295, %296 : vector<8x1xf32>
    %298 = vector.broadcast %297 : vector<8x1xf32> to vector<8x32xf32>
    %299 = arith.subf %289, %298 : vector<8x32xf32>
    %300 = arith.mulf %299, %299 : vector<8x32xf32>
    %cst_176 = arith.constant dense<0.000000e+00> : vector<8xf32>
    %301 = vector.multi_reduction <add>, %300, %cst_176 [1] : vector<8x32xf32> to vector<8xf32>
    %302 = vector.shape_cast %301 : vector<8xf32> to vector<8x1xf32>
    %cst_177 = arith.constant 3.200000e+01 : f32
    %303 = vector.broadcast %cst_177 : f32 to vector<8x1xf32>
    %304 = arith.divf %302, %303 : vector<8x1xf32>
    %305 = vector.broadcast %297 : vector<8x1xf32> to vector<8x32xf32>
    %306 = arith.subf %289, %305 : vector<8x32xf32>
    %cst_178 = arith.constant 1.000000e-07 : f32
    %307 = vector.broadcast %cst_178 : f32 to vector<8x1xf32>
    %308 = arith.addf %304, %307 : vector<8x1xf32>
    %309 = math.rsqrt %308 : vector<8x1xf32>
    %310 = vector.broadcast %309 : vector<8x1xf32> to vector<8x32xf32>
    %311 = arith.mulf %306, %310 : vector<8x32xf32>
    %312 = vector.broadcast %291 : vector<1x32xf32> to vector<8x32xf32>
    %313 = arith.mulf %311, %312 : vector<8x32xf32>
    %314 = vector.broadcast %293 : vector<1x32xf32> to vector<8x32xf32>
    %315 = arith.addf %313, %314 : vector<8x32xf32>
    %cst_179 = arith.constant dense<0.000000e+00> : vector<1x32xf32>
    %316 = tpu.matmul %34, %315, %cst_179 {dimension_numbers = #tpu.dot_dimension_numbers<[1], [0], [0], [1], [0, 0, 1, 1], [], []>} : vector<1x8xf32>, vector<8x32xf32>, vector<1x32xf32> -> vector<1x32xf32>
    %cst_180 = arith.constant dense<0.000000e+00> : vector<1xf32>
    %317 = vector.multi_reduction <add>, %34, %cst_180 [1] : vector<1x8xf32> to vector<1xf32>
    %318 = vector.shape_cast %317 : vector<1xf32> to vector<1x1xf32>
    %cst_181 = arith.constant 9.99999971E-10 : f32
    %319 = vector.broadcast %cst_181 : f32 to vector<1x1xf32>
    %320 = arith.maximumf %318, %319 : vector<1x1xf32>
    %321 = vector.broadcast %320 : vector<1x1xf32> to vector<1x32xf32>
    %322 = arith.divf %316, %321 : vector<1x32xf32>
    %323 = arith.truncf %322 : vector<1x32xf32> to vector<1x32xbf16>
    %c0_182 = arith.constant 0 : index
    %c0_183 = arith.constant 0 : index
    %324 = vector.load %arg22[%c0_182, %c0_183] : memref<32x1xf32, #tpu.memory_space<vmem>>, vector<32x1xf32>
    %325 = arith.truncf %324 : vector<32x1xf32> to vector<32x1xbf16>
    %cst_184 = arith.constant dense<0.000000e+00> : vector<1x1xf32>
    %326 = tpu.matmul %323, %325, %cst_184 {dimension_numbers = #tpu.dot_dimension_numbers<[1], [0], [0], [1], [0, 0, 1, 1], [], []>} : vector<1x32xbf16>, vector<32x1xbf16>, vector<1x1xf32> -> vector<1x1xf32>
    %c0_185 = arith.constant 0 : index
    %c0_186 = arith.constant 0 : index
    %327 = vector.load %arg23[%c0_185, %c0_186] : memref<1x1xf32, #tpu.memory_space<vmem>>, vector<1x1xf32>
    %328 = arith.addf %326, %327 : vector<1x1xf32>
    %329 = vector.shape_cast %328 : vector<1x1xf32> to vector<1x1x1xf32>
    %c0_187 = arith.constant 0 : index
    %c0_188 = arith.constant 0 : index
    %c0_189 = arith.constant 0 : index
    %330 = vector.load %arg24[%c0_187, %c0_188, %c0_189] : memref<1x1x1xf32, #tpu.memory_space<vmem>>, vector<1x1x1xf32>
    tpu.vector_store %arg24[%c0_187, %c0_188, %c0_189], %329 {strides = array<i32>} : memref<1x1x1xf32, #tpu.memory_space<vmem>>, vector<1x1x1xf32>,
    return
  }
  func.func @transform_0(%arg0: i32) -> (i32, i32, i32) {
    %c0_i32 = arith.constant 0 : i32
    %c0_i32_0 = arith.constant 0 : i32
    %c0_i32_1 = arith.constant 0 : i32
    return %arg0, %c0_i32, %c0_i32_0 : i32, i32, i32
  }
  func.func @transform_1(%arg0: i32) -> (i32, i32, i32) {
    %c0_i32 = arith.constant 0 : i32
    %c0_i32_0 = arith.constant 0 : i32
    %c0_i32_1 = arith.constant 0 : i32
    return %arg0, %c0_i32, %c0_i32_0 : i32, i32, i32
  }
  func.func @transform_2(%arg0: i32) -> (i32, i32) {
    %c0_i32 = arith.constant 0 : i32
    %c0_i32_0 = arith.constant 0 : i32
    %c0_i32_1 = arith.constant 0 : i32
    return %c0_i32, %c0_i32_0 : i32, i32
  }
  func.func @transform_3(%arg0: i32) -> (i32, i32) {
    %c0_i32 = arith.constant 0 : i32
    %c0_i32_0 = arith.constant 0 : i32
    %c0_i32_1 = arith.constant 0 : i32
    return %c0_i32, %c0_i32_0 : i32, i32
  }
  func.func @transform_4(%arg0: i32) -> (i32, i32) {
    %c0_i32 = arith.constant 0 : i32
    %c0_i32_0 = arith.constant 0 : i32
    %c0_i32_1 = arith.constant 0 : i32
    return %c0_i32, %c0_i32_0 : i32, i32
  }
  func.func @transform_5(%arg0: i32) -> (i32, i32, i32, i32) {
    %c0_i32 = arith.constant 0 : i32
    %c0_i32_0 = arith.constant 0 : i32
    %c0_i32_1 = arith.constant 0 : i32
    %c0_i32_2 = arith.constant 0 : i32
    %c0_i32_3 = arith.constant 0 : i32
    return %c0_i32, %c0_i32_0, %c0_i32_1, %c0_i32_2 : i32, i32, i32, i32
  }
  func.func @transform_6(%arg0: i32) -> (i32, i32, i32, i32) {
    %c0_i32 = arith.constant 0 : i32
    %c0_i32_0 = arith.constant 0 : i32
    %c0_i32_1 = arith.constant 0 : i32
    %c0_i32_2 = arith.constant 0 : i32
    %c0_i32_3 = arith.constant 0 : i32
    return %c0_i32, %c0_i32_0, %c0_i32_1, %c0_i32_2 : i32, i32, i32, i32
  }
  func.func @transform_7(%arg0: i32) -> (i32, i32, i32, i32) {
    %c0_i32 = arith.constant 0 : i32
    %c0_i32_0 = arith.constant 0 : i32
    %c0_i32_1 = arith.constant 0 : i32
    %c0_i32_2 = arith.constant 0 : i32
    %c0_i32_3 = arith.constant 0 : i32
    return %c0_i32, %c0_i32_0, %c0_i32_1, %c0_i32_2 : i32, i32, i32, i32
  }
  func.func @transform_8(%arg0: i32) -> (i32, i32, i32, i32) {
    %c0_i32 = arith.constant 0 : i32
    %c0_i32_0 = arith.constant 0 : i32
    %c0_i32_1 = arith.constant 0 : i32
    %c0_i32_2 = arith.constant 0 : i32
    %c0_i32_3 = arith.constant 0 : i32
    return %c0_i32, %c0_i32_0, %c0_i32_1, %c0_i32_2 : i32, i32, i32, i32
  }
  func.func @transform_9(%arg0: i32) -> (i32, i32, i32, i32) {
    %c0_i32 = arith.constant 0 : i32
    %c0_i32_0 = arith.constant 0 : i32
    %c0_i32_1 = arith.constant 0 : i32
    %c0_i32_2 = arith.constant 0 : i32
    %c0_i32_3 = arith.constant 0 : i32
    return %c0_i32, %c0_i32_0, %c0_i32_1, %c0_i32_2 : i32, i32, i32, i32
  }
  func.func @transform_10(%arg0: i32) -> (i32, i32, i32, i32) {
    %c0_i32 = arith.constant 0 : i32
    %c0_i32_0 = arith.constant 0 : i32
    %c0_i32_1 = arith.constant 0 : i32
    %c0_i32_2 = arith.constant 0 : i32
    %c0_i32_3 = arith.constant 0 : i32
    return %c0_i32, %c0_i32_0, %c0_i32_1, %c0_i32_2 : i32, i32, i32, i32
  }
  func.func @transform_11(%arg0: i32) -> (i32, i32, i32, i32) {
    %c0_i32 = arith.constant 0 : i32
    %c0_i32_0 = arith.constant 0 : i32
    %c0_i32_1 = arith.constant 0 : i32
    %c0_i32_2 = arith.constant 0 : i32
    %c0_i32_3 = arith.constant 0 : i32
    return %c0_i32, %c0_i32_0, %c0_i32_1, %c0_i32_2 : i32, i32, i32, i32
  }
  func.func @transform_12(%arg0: i32) -> (i32, i32, i32) {
    %c0_i32 = arith.constant 0 : i32
    %c0_i32_0 = arith.constant 0 : i32
    %c0_i32_1 = arith.constant 0 : i32
    %c0_i32_2 = arith.constant 0 : i32
    return %c0_i32, %c0_i32_0, %c0_i32_1 : i32, i32, i32
  }
  func.func @transform_13(%arg0: i32) -> (i32, i32, i32) {
    %c0_i32 = arith.constant 0 : i32
    %c0_i32_0 = arith.constant 0 : i32
    %c0_i32_1 = arith.constant 0 : i32
    %c0_i32_2 = arith.constant 0 : i32
    return %c0_i32, %c0_i32_0, %c0_i32_1 : i32, i32, i32
  }
  func.func @transform_14(%arg0: i32) -> (i32, i32, i32) {
    %c0_i32 = arith.constant 0 : i32
    %c0_i32_0 = arith.constant 0 : i32
    %c0_i32_1 = arith.constant 0 : i32
    %c0_i32_2 = arith.constant 0 : i32
    return %c0_i32, %c0_i32_0, %c0_i32_1 : i32, i32, i32
  }
  func.func @transform_15(%arg0: i32) -> (i32, i32, i32) {
    %c0_i32 = arith.constant 0 : i32
    %c0_i32_0 = arith.constant 0 : i32
    %c0_i32_1 = arith.constant 0 : i32
    %c0_i32_2 = arith.constant 0 : i32
    return %c0_i32, %c0_i32_0, %c0_i32_1 : i32, i32, i32
  }
  func.func @transform_16(%arg0: i32) -> (i32, i32, i32) {
    %c0_i32 = arith.constant 0 : i32
    %c0_i32_0 = arith.constant 0 : i32
    %c0_i32_1 = arith.constant 0 : i32
    %c0_i32_2 = arith.constant 0 : i32
    return %c0_i32, %c0_i32_0, %c0_i32_1 : i32, i32, i32
  }
  func.func @transform_17(%arg0: i32) -> (i32, i32, i32) {
    %c0_i32 = arith.constant 0 : i32
    %c0_i32_0 = arith.constant 0 : i32
    %c0_i32_1 = arith.constant 0 : i32
    %c0_i32_2 = arith.constant 0 : i32
    return %c0_i32, %c0_i32_0, %c0_i32_1 : i32, i32, i32
  }
  func.func @transform_18(%arg0: i32) -> (i32, i32, i32) {
    %c0_i32 = arith.constant 0 : i32
    %c0_i32_0 = arith.constant 0 : i32
    %c0_i32_1 = arith.constant 0 : i32
    %c0_i32_2 = arith.constant 0 : i32
    return %c0_i32, %c0_i32_0, %c0_i32_1 : i32, i32, i32
  }
  func.func @transform_19(%arg0: i32) -> (i32, i32, i32) {
    %c0_i32 = arith.constant 0 : i32
    %c0_i32_0 = arith.constant 0 : i32
    %c0_i32_1 = arith.constant 0 : i32
    %c0_i32_2 = arith.constant 0 : i32
    return %c0_i32, %c0_i32_0, %c0_i32_1 : i32, i32, i32
  }
  func.func @transform_20(%arg0: i32) -> (i32, i32, i32) {
    %c0_i32 = arith.constant 0 : i32
    %c0_i32_0 = arith.constant 0 : i32
    %c0_i32_1 = arith.constant 0 : i32
    %c0_i32_2 = arith.constant 0 : i32
    return %c0_i32, %c0_i32_0, %c0_i32_1 : i32, i32, i32
  }
  func.func @transform_21(%arg0: i32) -> (i32, i32) {
    %c0_i32 = arith.constant 0 : i32
    %c0_i32_0 = arith.constant 0 : i32
    %c0_i32_1 = arith.constant 0 : i32
    return %c0_i32, %c0_i32_0 : i32, i32
  }
  func.func @transform_22(%arg0: i32) -> (i32, i32) {
    %c0_i32 = arith.constant 0 : i32
    %c0_i32_0 = arith.constant 0 : i32
    %c0_i32_1 = arith.constant 0 : i32
    return %c0_i32, %c0_i32_0 : i32, i32
  }
  func.func @transform_23(%arg0: i32) -> (i32, i32, i32) {
    %c0_i32 = arith.constant 0 : i32
    %c0_i32_0 = arith.constant 0 : i32
    %c0_i32_1 = arith.constant 0 : i32
    return %arg0, %c0_i32, %c0_i32_0 : i32, i32, i32
  }
}

</mosaic_0001>

<llo_original>
// kernel: deberta_for_regression_forward.1
$region0: #{deberta_for_regression_forward.1}
  #allocation0 [shape = 'u32[]', space=smem, size = 0x4, offset = 0x4, fixed_abs, tag = 'smem constant byte address 0x4 - core index']
  #allocation1 [shape = 'u32[144,128]{1,0:T(1,128)}', space=vmem, size = 0x12000, scoped, tag = 'internal scratch']
  #allocation2 [shape = 'f32[1,1]{1,0:T(1,128)S(1)}', space=vmem, size = 0x200, scoped, tag = 'scoped memory for deberta_for_regression_forward.1']
  %s0 = inlined_call_operand.vmem [shape: s32[2,8,1], index: 0, kind: input, shape index: {}]
  %s1 = inlined_call_operand.vmem [shape: f32[2,1,8], index: 1, kind: input, shape index: {}]
  %s2 = inlined_call_operand.vmem [shape: f32[64,32], index: 2, kind: input, shape index: {}]
  %s3 = inlined_call_operand.vmem [shape: f32[1,32], index: 3, kind: input, shape index: {}]
  %s4 = inlined_call_operand.vmem [shape: f32[1,32], index: 4, kind: input, shape index: {}]
  %s5 = inlined_call_operand.vmem [shape: f32[2,4,32,8], index: 5, kind: input, shape index: {}]
  %s6 = inlined_call_operand.vmem [shape: f32[2,4,1,8], index: 6, kind: input, shape index: {}]
  %s7 = inlined_call_operand.vmem [shape: f32[2,4,32,8], index: 7, kind: input, shape index: {}]
  %s8 = inlined_call_operand.vmem [shape: f32[2,4,1,8], index: 8, kind: input, shape index: {}]
  %s9 = inlined_call_operand.vmem [shape: f32[2,4,32,8], index: 9, kind: input, shape index: {}]
  %s10 = inlined_call_operand.vmem [shape: f32[2,4,1,8], index: 10, kind: input, shape index: {}]
  %s11 = inlined_call_operand.vmem [shape: f32[2,4,8,32], index: 11, kind: input, shape index: {}]
  %s12 = inlined_call_operand.vmem [shape: f32[2,1,32], index: 12, kind: input, shape index: {}]
  %s13 = inlined_call_operand.vmem [shape: f32[2,1,32], index: 13, kind: input, shape index: {}]
  %s14 = inlined_call_operand.vmem [shape: f32[2,1,32], index: 14, kind: input, shape index: {}]
  %s15 = inlined_call_operand.vmem [shape: f32[2,32,64], index: 15, kind: input, shape index: {}]
  %s16 = inlined_call_operand.vmem [shape: f32[2,1,64], index: 16, kind: input, shape index: {}]
  %s17 = inlined_call_operand.vmem [shape: f32[2,64,32], index: 17, kind: input, shape index: {}]
  %s18 = inlined_call_operand.vmem [shape: f32[2,1,32], index: 18, kind: input, shape index: {}]
  %s19 = inlined_call_operand.vmem [shape: f32[2,1,32], index: 19, kind: input, shape index: {}]
  %s20 = inlined_call_operand.vmem [shape: f32[2,1,32], index: 20, kind: input, shape index: {}]
  %s21 = inlined_call_operand.vmem [shape: f32[32,1], index: 21, kind: input, shape index: {}]
  %s22 = inlined_call_operand.<no memory space> [shape: f32[1,1], index: 22, kind: input, shape index: {}]
  %s23 = inlined_call_operand.vmem [shape: f32[2,1,1], index: 23, kind: output, shape index: {}]
  %s24 = sld [smem:[#allocation0]]
  $region125: #{deberta_for_regression_forward.1} parent=0
    _
  %s26 = ssub.s32 1, %s24
  %s27 = scalar_select 0, %s26, %s24
  %v28 = vstv %s22
  %29 = vst [vmem:[#allocation2] sm:$0x1] %v28
  loop: start=0, step=1, limit=4
  $region2: #{deberta_for_regression_forward.1} parent=0 // loop_pre_header
    _
  $region3: #{deberta_for_regression_forward.1} parent=0 // loop_header
    %s31 = sphi 0, %s35
    %p32 = scmp.ge.s32.totalorder %s31, 4
    %s41 = sphi 0, %s43
    %s44 = sphi 0, %s41
    %s45 = sphi 0, %s44
    %s61 = sphi 0, %s45
    %s67 = sphi 0, %s69
    %s70 = sphi 0, %s67
    %s71 = sphi 0, %s70
    %s87 = sphi 0, %s71
    %s91 = sphi 0, %s91
    %s93 = sphi 0, %s91
    %s94 = sphi 0, %s93
    %s108 = sphi 0, %s94
    %s112 = sphi 0, %s112
    %s114 = sphi 0, %s112
    %s115 = sphi 0, %s114
    %s129 = sphi 0, %s115
    %s133 = sphi 0, %s133
    %s135 = sphi 0, %s133
    %s136 = sphi 0, %s135
    %s150 = sphi 0, %s136
    %s154 = sphi 0, %s154
    %s156 = sphi 0, %s154
    %s157 = sphi 0, %s156
    %s171 = sphi 0, %s157
    %s175 = sphi 0, %s175
    %s177 = sphi 0, %s175
    %s178 = sphi 0, %s177
    %s192 = sphi 0, %s178
    %s196 = sphi 0, %s196
    %s198 = sphi 0, %s196
    %s199 = sphi 0, %s198
    %s213 = sphi 0, %s199
    %s217 = sphi 0, %s217
    %s219 = sphi 0, %s217
    %s220 = sphi 0, %s219
    %s234 = sphi 0, %s220
    %s238 = sphi 0, %s238
    %s240 = sphi 0, %s238
    %s241 = sphi 0, %s240
    %s255 = sphi 0, %s241
    %s259 = sphi 0, %s259
    %s261 = sphi 0, %s259
    %s262 = sphi 0, %s261
    %s276 = sphi 0, %s262
    %s280 = sphi 0, %s280
    %s282 = sphi 0, %s280
    %s283 = sphi 0, %s282
    %s297 = sphi 0, %s283
    %s301 = sphi 0, %s301
    %s303 = sphi 0, %s301
    %s304 = sphi 0, %s303
    %s318 = sphi 0, %s304
    %s322 = sphi 0, %s322
    %s324 = sphi 0, %s322
    %s325 = sphi 0, %s324
    %s339 = sphi 0, %s325
    %s343 = sphi 0, %s343
    %s345 = sphi 0, %s343
    %s346 = sphi 0, %s345
    %s360 = sphi 0, %s346
    %s364 = sphi 0, %s364
    %s366 = sphi 0, %s364
    %s367 = sphi 0, %s366
    %s381 = sphi 0, %s367
    %s385 = sphi 0, %s385
    %s387 = sphi 0, %s385
    %s388 = sphi 0, %s387
    %s402 = sphi 0, %s388
    %s406 = sphi 0, %s406
    %s408 = sphi 0, %s406
    %s409 = sphi 0, %s408
    %s423 = sphi 0, %s409
    %s427 = sphi 0, %s427
    %s429 = sphi 0, %s427
    %s430 = sphi 0, %s429
    %s444 = sphi 0, %s430
    %s448 = sphi 0, %s448
    %s450 = sphi 0, %s448
    %s451 = sphi 0, %s450
    %s465 = sphi 0, %s451
    %s469 = sphi 0, %s469
    %s471 = sphi 0, %s469
    %s472 = sphi 0, %s471
    %s486 = sphi 0, %s472
    %s490 = sphi 0, %s490
    %s492 = sphi 0, %s490
    %s493 = sphi 0, %s492
    %s507 = sphi 0, %s493
    %s511 = sphi 0, %s511
    %s513 = sphi 0, %s511
    %s514 = sphi 0, %s513
    %s528 = sphi 0, %s514
    %s534 = sphi 0, %s536
    %s537 = sphi 0, %s534
    %s538 = sphi 0, %s537
    %s554 = sphi 0, %s538
  $region4: #{deberta_for_regression_forward.1} parent=0 // loop_header_branch
    %34 = sbr.rel (%p32) target = $region8
  $region5: #{deberta_for_regression_forward.1} parent=0 // loop_body
    %s36 = ssub.s32 %s31, 1
    %s37 = ssub.s32 %s31, 2
    %s38 = sadd.s32 %s31, 1
    %s39 = ssub.s32 %s31, %s38
    %p40 = scmp.eq.s32.totalorder %s39, 0
    %s42 = sadd.s32 %s41, 1
    %s43 = scalar_select %p40, %s41, %s42
    %p46 = pneg %p40
    %p47 = scmp.eq.s32.totalorder %s31, 1
    %p48 = por %p46, %p47
    %p49 = scmp.ne.s32.totalorder %s41, %s44
    %p50 = scmp.eq.s32.totalorder %s31, 0
    %p51 = por %p49, %p50
    %p52 = scmp.ne.s32.totalorder %s41, %s44
    %p53 = scmp.eq.s32.totalorder %s36, 1
    %p54 = por %p52, %p53
    %p55 = scmp.ne.s32.totalorder %s44, %s45
    %p56 = scmp.eq.s32.totalorder %s36, 0
    %p57 = por %p55, %p56
    %p58 = scmp.ne.s32.totalorder %s44, %s45
    %p59 = scmp.eq.s32.totalorder %s37, 1
    %p60 = por %p58, %p59
    %p62 = scmp.ne.s32.totalorder %s45, %s61
    %p63 = scmp.eq.s32.totalorder %s37, 0
    %p64 = por %p62, %p63
    %s65 = ssub.s32 %s31, %s38
    %p66 = scmp.eq.s32.totalorder %s65, 0
    %s68 = sadd.s32 %s67, 1
    %s69 = scalar_select %p66, %s67, %s68
    %p72 = pneg %p66
    %p73 = scmp.eq.s32.totalorder %s31, 1
    %p74 = por %p72, %p73
    %p75 = scmp.ne.s32.totalorder %s67, %s70
    %p76 = scmp.eq.s32.totalorder %s31, 0
    %p77 = por %p75, %p76
    %p78 = scmp.ne.s32.totalorder %s67, %s70
    %p79 = scmp.eq.s32.totalorder %s36, 1
    %p80 = por %p78, %p79
    %p81 = scmp.ne.s32.totalorder %s70, %s71
    %p82 = scmp.eq.s32.totalorder %s36, 0
    %p83 = por %p81, %p82
    %p84 = scmp.ne.s32.totalorder %s70, %s71
    %p85 = scmp.eq.s32.totalorder %s37, 1
    %p86 = por %p84, %p85
    %p88 = scmp.ne.s32.totalorder %s71, %s87
    %p89 = scmp.eq.s32.totalorder %s37, 0
    %p90 = por %p88, %p89
    %s92 = sadd.s32 %s91, 1
    %p95 = scmp.eq.s32.totalorder %s31, 1
    %p96 = scmp.ne.s32.totalorder %s91, %s93
    %p97 = scmp.eq.s32.totalorder %s31, 0
    %p98 = por %p96, %p97
    %p99 = scmp.ne.s32.totalorder %s91, %s93
    %p100 = scmp.eq.s32.totalorder %s36, 1
    %p101 = por %p99, %p100
    %p102 = scmp.ne.s32.totalorder %s93, %s94
    %p103 = scmp.eq.s32.totalorder %s36, 0
    %p104 = por %p102, %p103
    %p105 = scmp.ne.s32.totalorder %s93, %s94
    %p106 = scmp.eq.s32.totalorder %s37, 1
    %p107 = por %p105, %p106
    %p109 = scmp.ne.s32.totalorder %s94, %s108
    %p110 = scmp.eq.s32.totalorder %s37, 0
    %p111 = por %p109, %p110
    %s113 = sadd.s32 %s112, 1
    %p116 = scmp.eq.s32.totalorder %s31, 1
    %p117 = scmp.ne.s32.totalorder %s112, %s114
    %p118 = scmp.eq.s32.totalorder %s31, 0
    %p119 = por %p117, %p118
    %p120 = scmp.ne.s32.totalorder %s112, %s114
    %p121 = scmp.eq.s32.totalorder %s36, 1
    %p122 = por %p120, %p121
    %p123 = scmp.ne.s32.totalorder %s114, %s115
    %p124 = scmp.eq.s32.totalorder %s36, 0
    %p125 = por %p123, %p124
    %p126 = scmp.ne.s32.totalorder %s114, %s115
    %p127 = scmp.eq.s32.totalorder %s37, 1
    %p128 = por %p126, %p127
    %p130 = scmp.ne.s32.totalorder %s115, %s129
    %p131 = scmp.eq.s32.totalorder %s37, 0
    %p132 = por %p130, %p131
    %s134 = sadd.s32 %s133, 1
    %p137 = scmp.eq.s32.totalorder %s31, 1
    %p138 = scmp.ne.s32.totalorder %s133, %s135
    %p139 = scmp.eq.s32.totalorder %s31, 0
    %p140 = por %p138, %p139
    %p141 = scmp.ne.s32.totalorder %s133, %s135
    %p142 = scmp.eq.s32.totalorder %s36, 1
    %p143 = por %p141, %p142
    %p144 = scmp.ne.s32.totalorder %s135, %s136
    %p145 = scmp.eq.s32.totalorder %s36, 0
    %p146 = por %p144, %p145
    %p147 = scmp.ne.s32.totalorder %s135, %s136
    %p148 = scmp.eq.s32.totalorder %s37, 1
    %p149 = por %p147, %p148
    %p151 = scmp.ne.s32.totalorder %s136, %s150
    %p152 = scmp.eq.s32.totalorder %s37, 0
    %p153 = por %p151, %p152
    %s155 = sadd.s32 %s154, 1
    %p158 = scmp.eq.s32.totalorder %s31, 1
    %p159 = scmp.ne.s32.totalorder %s154, %s156
    %p160 = scmp.eq.s32.totalorder %s31, 0
    %p161 = por %p159, %p160
    %p162 = scmp.ne.s32.totalorder %s154, %s156
    %p163 = scmp.eq.s32.totalorder %s36, 1
    %p164 = por %p162, %p163
    %p165 = scmp.ne.s32.totalorder %s156, %s157
    %p166 = scmp.eq.s32.totalorder %s36, 0
    %p167 = por %p165, %p166
    %p168 = scmp.ne.s32.totalorder %s156, %s157
    %p169 = scmp.eq.s32.totalorder %s37, 1
    %p170 = por %p168, %p169
    %p172 = scmp.ne.s32.totalorder %s157, %s171
    %p173 = scmp.eq.s32.totalorder %s37, 0
    %p174 = por %p172, %p173
    %s176 = sadd.s32 %s175, 1
    %p179 = scmp.eq.s32.totalorder %s31, 1
    %p180 = scmp.ne.s32.totalorder %s175, %s177
    %p181 = scmp.eq.s32.totalorder %s31, 0
    %p182 = por %p180, %p181
    %p183 = scmp.ne.s32.totalorder %s175, %s177
    %p184 = scmp.eq.s32.totalorder %s36, 1
    %p185 = por %p183, %p184
    %p186 = scmp.ne.s32.totalorder %s177, %s178
    %p187 = scmp.eq.s32.totalorder %s36, 0
    %p188 = por %p186, %p187
    %p189 = scmp.ne.s32.totalorder %s177, %s178
    %p190 = scmp.eq.s32.totalorder %s37, 1
    %p191 = por %p189, %p190
    %p193 = scmp.ne.s32.totalorder %s178, %s192
    %p194 = scmp.eq.s32.totalorder %s37, 0
    %p195 = por %p193, %p194
    %s197 = sadd.s32 %s196, 1
    %p200 = scmp.eq.s32.totalorder %s31, 1
    %p201 = scmp.ne.s32.totalorder %s196, %s198
    %p202 = scmp.eq.s32.totalorder %s31, 0
    %p203 = por %p201, %p202
    %p204 = scmp.ne.s32.totalorder %s196, %s198
    %p205 = scmp.eq.s32.totalorder %s36, 1
    %p206 = por %p204, %p205
    %p207 = scmp.ne.s32.totalorder %s198, %s199
    %p208 = scmp.eq.s32.totalorder %s36, 0
    %p209 = por %p207, %p208
    %p210 = scmp.ne.s32.totalorder %s198, %s199
    %p211 = scmp.eq.s32.totalorder %s37, 1
    %p212 = por %p210, %p211
    %p214 = scmp.ne.s32.totalorder %s199, %s213
    %p215 = scmp.eq.s32.totalorder %s37, 0
    %p216 = por %p214, %p215
    %s218 = sadd.s32 %s217, 1
    %p221 = scmp.eq.s32.totalorder %s31, 1
    %p222 = scmp.ne.s32.totalorder %s217, %s219
    %p223 = scmp.eq.s32.totalorder %s31, 0
    %p224 = por %p222, %p223
    %p225 = scmp.ne.s32.totalorder %s217, %s219
    %p226 = scmp.eq.s32.totalorder %s36, 1
    %p227 = por %p225, %p226
    %p228 = scmp.ne.s32.totalorder %s219, %s220
    %p229 = scmp.eq.s32.totalorder %s36, 0
    %p230 = por %p228, %p229
    %p231 = scmp.ne.s32.totalorder %s219, %s220
    %p232 = scmp.eq.s32.totalorder %s37, 1
    %p233 = por %p231, %p232
    %p235 = scmp.ne.s32.totalorder %s220, %s234
    %p236 = scmp.eq.s32.totalorder %s37, 0
    %p237 = por %p235, %p236
    %s239 = sadd.s32 %s238, 1
    %p242 = scmp.eq.s32.totalorder %s31, 1
    %p243 = scmp.ne.s32.totalorder %s238, %s240
    %p244 = scmp.eq.s32.totalorder %s31, 0
    %p245 = por %p243, %p244
    %p246 = scmp.ne.s32.totalorder %s238, %s240
    %p247 = scmp.eq.s32.totalorder %s36, 1
    %p248 = por %p246, %p247
    %p249 = scmp.ne.s32.totalorder %s240, %s241
    %p250 = scmp.eq.s32.totalorder %s36, 0
    %p251 = por %p249, %p250
    %p252 = scmp.ne.s32.totalorder %s240, %s241
    %p253 = scmp.eq.s32.totalorder %s37, 1
    %p254 = por %p252, %p253
    %p256 = scmp.ne.s32.totalorder %s241, %s255
    %p257 = scmp.eq.s32.totalorder %s37, 0
    %p258 = por %p256, %p257
    %s260 = sadd.s32 %s259, 1
    %p263 = scmp.eq.s32.totalorder %s31, 1
    %p264 = scmp.ne.s32.totalorder %s259, %s261
    %p265 = scmp.eq.s32.totalorder %s31, 0
    %p266 = por %p264, %p265
    %p267 = scmp.ne.s32.totalorder %s259, %s261
    %p268 = scmp.eq.s32.totalorder %s36, 1
    %p269 = por %p267, %p268
    %p270 = scmp.ne.s32.totalorder %s261, %s262
    %p271 = scmp.eq.s32.totalorder %s36, 0
    %p272 = por %p270, %p271
    %p273 = scmp.ne.s32.totalorder %s261, %s262
    %p274 = scmp.eq.s32.totalorder %s37, 1
    %p275 = por %p273, %p274
    %p277 = scmp.ne.s32.totalorder %s262, %s276
    %p278 = scmp.eq.s32.totalorder %s37, 0
    %p279 = por %p277, %p278
    %s281 = sadd.s32 %s280, 1
    %p284 = scmp.eq.s32.totalorder %s31, 1
    %p285 = scmp.ne.s32.totalorder %s280, %s282
    %p286 = scmp.eq.s32.totalorder %s31, 0
    %p287 = por %p285, %p286
    %p288 = scmp.ne.s32.totalorder %s280, %s282
    %p289 = scmp.eq.s32.totalorder %s36, 1
    %p290 = por %p288, %p289
    %p291 = scmp.ne.s32.totalorder %s282, %s283
    %p292 = scmp.eq.s32.totalorder %s36, 0
    %p293 = por %p291, %p292
    %p294 = scmp.ne.s32.totalorder %s282, %s283
    %p295 = scmp.eq.s32.totalorder %s37, 1
    %p296 = por %p294, %p295
    %p298 = scmp.ne.s32.totalorder %s283, %s297
    %p299 = scmp.eq.s32.totalorder %s37, 0
    %p300 = por %p298, %p299
    %s302 = sadd.s32 %s301, 1
    %p305 = scmp.eq.s32.totalorder %s31, 1
    %p306 = scmp.ne.s32.totalorder %s301, %s303
    %p307 = scmp.eq.s32.totalorder %s31, 0
    %p308 = por %p306, %p307
    %p309 = scmp.ne.s32.totalorder %s301, %s303
    %p310 = scmp.eq.s32.totalorder %s36, 1
    %p311 = por %p309, %p310
    %p312 = scmp.ne.s32.totalorder %s303, %s304
    %p313 = scmp.eq.s32.totalorder %s36, 0
    %p314 = por %p312, %p313
    %p315 = scmp.ne.s32.totalorder %s303, %s304
    %p316 = scmp.eq.s32.totalorder %s37, 1
    %p317 = por %p315, %p316
    %p319 = scmp.ne.s32.totalorder %s304, %s318
    %p320 = scmp.eq.s32.totalorder %s37, 0
    %p321 = por %p319, %p320
    %s323 = sadd.s32 %s322, 1
    %p326 = scmp.eq.s32.totalorder %s31, 1
    %p327 = scmp.ne.s32.totalorder %s322, %s324
    %p328 = scmp.eq.s32.totalorder %s31, 0
    %p329 = por %p327, %p328
    %p330 = scmp.ne.s32.totalorder %s322, %s324
    %p331 = scmp.eq.s32.totalorder %s36, 1
    %p332 = por %p330, %p331
    %p333 = scmp.ne.s32.totalorder %s324, %s325
    %p334 = scmp.eq.s32.totalorder %s36, 0
    %p335 = por %p333, %p334
    %p336 = scmp.ne.s32.totalorder %s324, %s325
    %p337 = scmp.eq.s32.totalorder %s37, 1
    %p338 = por %p336, %p337
    %p340 = scmp.ne.s32.totalorder %s325, %s339
    %p341 = scmp.eq.s32.totalorder %s37, 0
    %p342 = por %p340, %p341
    %s344 = sadd.s32 %s343, 1
    %p347 = scmp.eq.s32.totalorder %s31, 1
    %p348 = scmp.ne.s32.totalorder %s343, %s345
    %p349 = scmp.eq.s32.totalorder %s31, 0
    %p350 = por %p348, %p349
    %p351 = scmp.ne.s32.totalorder %s343, %s345
    %p352 = scmp.eq.s32.totalorder %s36, 1
    %p353 = por %p351, %p352
    %p354 = scmp.ne.s32.totalorder %s345, %s346
    %p355 = scmp.eq.s32.totalorder %s36, 0
    %p356 = por %p354, %p355
    %p357 = scmp.ne.s32.totalorder %s345, %s346
    %p358 = scmp.eq.s32.totalorder %s37, 1
    %p359 = por %p357, %p358
    %p361 = scmp.ne.s32.totalorder %s346, %s360
    %p362 = scmp.eq.s32.totalorder %s37, 0
    %p363 = por %p361, %p362
    %s365 = sadd.s32 %s364, 1
    %p368 = scmp.eq.s32.totalorder %s31, 1
    %p369 = scmp.ne.s32.totalorder %s364, %s366
    %p370 = scmp.eq.s32.totalorder %s31, 0
    %p371 = por %p369, %p370
    %p372 = scmp.ne.s32.totalorder %s364, %s366
    %p373 = scmp.eq.s32.totalorder %s36, 1
    %p374 = por %p372, %p373
    %p375 = scmp.ne.s32.totalorder %s366, %s367
    %p376 = scmp.eq.s32.totalorder %s36, 0
    %p377 = por %p375, %p376
    %p378 = scmp.ne.s32.totalorder %s366, %s367
    %p379 = scmp.eq.s32.totalorder %s37, 1
    %p380 = por %p378, %p379
    %p382 = scmp.ne.s32.totalorder %s367, %s381
    %p383 = scmp.eq.s32.totalorder %s37, 0
    %p384 = por %p382, %p383
    %s386 = sadd.s32 %s385, 1
    %p389 = scmp.eq.s32.totalorder %s31, 1
    %p390 = scmp.ne.s32.totalorder %s385, %s387
    %p391 = scmp.eq.s32.totalorder %s31, 0
    %p392 = por %p390, %p391
    %p393 = scmp.ne.s32.totalorder %s385, %s387
    %p394 = scmp.eq.s32.totalorder %s36, 1
    %p395 = por %p393, %p394
    %p396 = scmp.ne.s32.totalorder %s387, %s388
    %p397 = scmp.eq.s32.totalorder %s36, 0
    %p398 = por %p396, %p397
    %p399 = scmp.ne.s32.totalorder %s387, %s388
    %p400 = scmp.eq.s32.totalorder %s37, 1
    %p401 = por %p399, %p400
    %p403 = scmp.ne.s32.totalorder %s388, %s402
    %p404 = scmp.eq.s32.totalorder %s37, 0
    %p405 = por %p403, %p404
    %s407 = sadd.s32 %s406, 1
    %p410 = scmp.eq.s32.totalorder %s31, 1
    %p411 = scmp.ne.s32.totalorder %s406, %s408
    %p412 = scmp.eq.s32.totalorder %s31, 0
    %p413 = por %p411, %p412
    %p414 = scmp.ne.s32.totalorder %s406, %s408
    %p415 = scmp.eq.s32.totalorder %s36, 1
    %p416 = por %p414, %p415
    %p417 = scmp.ne.s32.totalorder %s408, %s409
    %p418 = scmp.eq.s32.totalorder %s36, 0
    %p419 = por %p417, %p418
    %p420 = scmp.ne.s32.totalorder %s408, %s409
    %p421 = scmp.eq.s32.totalorder %s37, 1
    %p422 = por %p420, %p421
    %p424 = scmp.ne.s32.totalorder %s409, %s423
    %p425 = scmp.eq.s32.totalorder %s37, 0
    %p426 = por %p424, %p425
    %s428 = sadd.s32 %s427, 1
    %p431 = scmp.eq.s32.totalorder %s31, 1
    %p432 = scmp.ne.s32.totalorder %s427, %s429
    %p433 = scmp.eq.s32.totalorder %s31, 0
    %p434 = por %p432, %p433
    %p435 = scmp.ne.s32.totalorder %s427, %s429
    %p436 = scmp.eq.s32.totalorder %s36, 1
    %p437 = por %p435, %p436
    %p438 = scmp.ne.s32.totalorder %s429, %s430
    %p439 = scmp.eq.s32.totalorder %s36, 0
    %p440 = por %p438, %p439
    %p441 = scmp.ne.s32.totalorder %s429, %s430
    %p442 = scmp.eq.s32.totalorder %s37, 1
    %p443 = por %p441, %p442
    %p445 = scmp.ne.s32.totalorder %s430, %s444
    %p446 = scmp.eq.s32.totalorder %s37, 0
    %p447 = por %p445, %p446
    %s449 = sadd.s32 %s448, 1
    %p452 = scmp.eq.s32.totalorder %s31, 1
    %p453 = scmp.ne.s32.totalorder %s448, %s450
    %p454 = scmp.eq.s32.totalorder %s31, 0
    %p455 = por %p453, %p454
    %p456 = scmp.ne.s32.totalorder %s448, %s450
    %p457 = scmp.eq.s32.totalorder %s36, 1
    %p458 = por %p456, %p457
    %p459 = scmp.ne.s32.totalorder %s450, %s451
    %p460 = scmp.eq.s32.totalorder %s36, 0
    %p461 = por %p459, %p460
    %p462 = scmp.ne.s32.totalorder %s450, %s451
    %p463 = scmp.eq.s32.totalorder %s37, 1
    %p464 = por %p462, %p463
    %p466 = scmp.ne.s32.totalorder %s451, %s465
    %p467 = scmp.eq.s32.totalorder %s37, 0
    %p468 = por %p466, %p467
    %s470 = sadd.s32 %s469, 1
    %p473 = scmp.eq.s32.totalorder %s31, 1
    %p474 = scmp.ne.s32.totalorder %s469, %s471
    %p475 = scmp.eq.s32.totalorder %s31, 0
    %p476 = por %p474, %p475
    %p477 = scmp.ne.s32.totalorder %s469, %s471
    %p478 = scmp.eq.s32.totalorder %s36, 1
    %p479 = por %p477, %p478
    %p480 = scmp.ne.s32.totalorder %s471, %s472
    %p481 = scmp.eq.s32.totalorder %s36, 0
    %p482 = por %p480, %p481
    %p483 = scmp.ne.s32.totalorder %s471, %s472
    %p484 = scmp.eq.s32.totalorder %s37, 1
    %p485 = por %p483, %p484
    %p487 = scmp.ne.s32.totalorder %s472, %s486
    %p488 = scmp.eq.s32.totalorder %s37, 0
    %p489 = por %p487, %p488
    %s491 = sadd.s32 %s490, 1
    %p494 = scmp.eq.s32.totalorder %s31, 1
    %p495 = scmp.ne.s32.totalorder %s490, %s492
    %p496 = scmp.eq.s32.totalorder %s31, 0
    %p497 = por %p495, %p496
    %p498 = scmp.ne.s32.totalorder %s490, %s492
    %p499 = scmp.eq.s32.totalorder %s36, 1
    %p500 = por %p498, %p499
    %p501 = scmp.ne.s32.totalorder %s492, %s493
    %p502 = scmp.eq.s32.totalorder %s36, 0
    %p503 = por %p501, %p502
    %p504 = scmp.ne.s32.totalorder %s492, %s493
    %p505 = scmp.eq.s32.totalorder %s37, 1
    %p506 = por %p504, %p505
    %p508 = scmp.ne.s32.totalorder %s493, %s507
    %p509 = scmp.eq.s32.totalorder %s37, 0
    %p510 = por %p508, %p509
    %s512 = sadd.s32 %s511, 1
    %p515 = scmp.eq.s32.totalorder %s31, 1
    %p516 = scmp.ne.s32.totalorder %s511, %s513
    %p517 = scmp.eq.s32.totalorder %s31, 0
    %p518 = por %p516, %p517
    %p519 = scmp.ne.s32.totalorder %s511, %s513
    %p520 = scmp.eq.s32.totalorder %s36, 1
    %p521 = por %p519, %p520
    %p522 = scmp.ne.s32.totalorder %s513, %s514
    %p523 = scmp.eq.s32.totalorder %s36, 0
    %p524 = por %p522, %p523
    %p525 = scmp.ne.s32.totalorder %s513, %s514
    %p526 = scmp.eq.s32.totalorder %s37, 1
    %p527 = por %p525, %p526
    %p529 = scmp.ne.s32.totalorder %s514, %s528
    %p530 = scmp.eq.s32.totalorder %s37, 0
    %p531 = por %p529, %p530
    %s532 = ssub.s32 %s31, %s38
    %p533 = scmp.eq.s32.totalorder %s532, 0
    %s535 = sadd.s32 %s534, 1
    %s536 = scalar_select %p533, %s534, %s535
    %p539 = pneg %p533
    %p540 = scmp.eq.s32.totalorder %s31, 1
    %p541 = por %p539, %p540
    %p542 = scmp.ne.s32.totalorder %s534, %s537
    %p543 = scmp.eq.s32.totalorder %s31, 0
    %p544 = por %p542, %p543
    %p545 = scmp.ne.s32.totalorder %s534, %s537
    %p546 = scmp.eq.s32.totalorder %s36, 1
    %p547 = por %p545, %p546
    %p548 = scmp.ne.s32.totalorder %s537, %s538
    %p549 = scmp.eq.s32.totalorder %s36, 0
    %p550 = por %p548, %p549
    %p551 = scmp.ne.s32.totalorder %s537, %s538
    %p552 = scmp.eq.s32.totalorder %s37, 1
    %p553 = por %p551, %p552
    %p555 = scmp.ne.s32.totalorder %s538, %s554
    %p556 = scmp.eq.s32.totalorder %s37, 0
    %p557 = por %p555, %p556
    %p558 = scmp.le.s32.totalorder 1, %s31
    %p559 = scmp.lt.s32.totalorder %s31, 3
    %p560 = pnand %p558, %p559
    %p561 = pneg %p560
    // Predicated region
    $region9: #{deberta_for_regression_forward.1} parent=5 // pred_check
      _
    $region10: #{deberta_for_regression_forward.1} parent=5 // pred_check_branch
      %563 = sbr.rel (%p560) target = $region12
    $region11: #{deberta_for_regression_forward.1} parent=5 // pred_region
      %s564 = ssub.s32 %s31, 1
      // Predicated region
      $region13: #{deberta_for_regression_forward.1} parent=11 // pred_check
        %p565 = pneg %p104
      $region14: #{deberta_for_regression_forward.1} parent=11 // pred_check_branch
        %567 = sbr.rel (%p565) target = $region16
      $region15: #{deberta_for_regression_forward.1} parent=11 // pred_region
        _
      $region16: #{deberta_for_regression_forward.1} parent=11 // pred_fallthru
        _
      // Predicated region
      $region17: #{deberta_for_regression_forward.1} parent=11 // pred_check
        %p568 = pneg %p125
      $region18: #{deberta_for_regression_forward.1} parent=11 // pred_check_branch
        %570 = sbr.rel (%p568) target = $region20
      $region19: #{deberta_for_regression_forward.1} parent=11 // pred_region
        _
      $region20: #{deberta_for_regression_forward.1} parent=11 // pred_fallthru
        _
      // Predicated region
      $region21: #{deberta_for_regression_forward.1} parent=11 // pred_check
        %p571 = pneg %p146
      $region22: #{deberta_for_regression_forward.1} parent=11 // pred_check_branch
        %573 = sbr.rel (%p571) target = $region24
      $region23: #{deberta_for_regression_forward.1} parent=11 // pred_region
        _
      $region24: #{deberta_for_regression_forward.1} parent=11 // pred_fallthru
        _
      // Predicated region
      $region25: #{deberta_for_regression_forward.1} parent=11 // pred_check
        %p574 = pneg %p167
      $region26: #{deberta_for_regression_forward.1} parent=11 // pred_check_branch
        %576 = sbr.rel (%p574) target = $region28
      $region27: #{deberta_for_regression_forward.1} parent=11 // pred_region
        _
      $region28: #{deberta_for_regression_forward.1} parent=11 // pred_fallthru
        _
      // Predicated region
      $region29: #{deberta_for_regression_forward.1} parent=11 // pred_check
        %p577 = pneg %p188
      $region30: #{deberta_for_regression_forward.1} parent=11 // pred_check_branch
        %579 = sbr.rel (%p577) target = $region32
      $region31: #{deberta_for_regression_forward.1} parent=11 // pred_region
        _
      $region32: #{deberta_for_regression_forward.1} parent=11 // pred_fallthru
        _
      // Predicated region
      $region33: #{deberta_for_regression_forward.1} parent=11 // pred_check
        %p580 = pneg %p209
      $region34: #{deberta_for_regression_forward.1} parent=11 // pred_check_branch
        %582 = sbr.rel (%p580) target = $region36
      $region35: #{deberta_for_regression_forward.1} parent=11 // pred_region
        _
      $region36: #{deberta_for_regression_forward.1} parent=11 // pred_fallthru
        _
      // Predicated region
      $region37: #{deberta_for_regression_forward.1} parent=11 // pred_check
        %p583 = pneg %p230
      $region38: #{deberta_for_regression_forward.1} parent=11 // pred_check_branch
        %585 = sbr.rel (%p583) target = $region40
      $region39: #{deberta_for_regression_forward.1} parent=11 // pred_region
        _
      $region40: #{deberta_for_regression_forward.1} parent=11 // pred_fallthru
        _
      // Predicated region
      $region41: #{deberta_for_regression_forward.1} parent=11 // pred_check
        %p586 = pneg %p251
      $region42: #{deberta_for_regression_forward.1} parent=11 // pred_check_branch
        %588 = sbr.rel (%p586) target = $region44
      $region43: #{deberta_for_regression_forward.1} parent=11 // pred_region
        _
      $region44: #{deberta_for_regression_forward.1} parent=11 // pred_fallthru
        _
      // Predicated region
      $region45: #{deberta_for_regression_forward.1} parent=11 // pred_check
        %p589 = pneg %p272
      $region46: #{deberta_for_regression_forward.1} parent=11 // pred_check_branch
        %591 = sbr.rel (%p589) target = $region48
      $region47: #{deberta_for_regression_forward.1} parent=11 // pred_region
        _
      $region48: #{deberta_for_regression_forward.1} parent=11 // pred_fallthru
        _
      // Predicated region
      $region49: #{deberta_for_regression_forward.1} parent=11 // pred_check
        %p592 = pneg %p293
      $region50: #{deberta_for_regression_forward.1} parent=11 // pred_check_branch
        %594 = sbr.rel (%p592) target = $region52
      $region51: #{deberta_for_regression_forward.1} parent=11 // pred_region
        _
      $region52: #{deberta_for_regression_forward.1} parent=11 // pred_fallthru
        _
      // Predicated region
      $region53: #{deberta_for_regression_forward.1} parent=11 // pred_check
        %p595 = pneg %p314
      $region54: #{deberta_for_regression_forward.1} parent=11 // pred_check_branch
        %597 = sbr.rel (%p595) target = $region56
      $region55: #{deberta_for_regression_forward.1} parent=11 // pred_region
        _
      $region56: #{deberta_for_regression_forward.1} parent=11 // pred_fallthru
        _
      // Predicated region
      $region57: #{deberta_for_regression_forward.1} parent=11 // pred_check
        %p598 = pneg %p335
      $region58: #{deberta_for_regression_forward.1} parent=11 // pred_check_branch
        %600 = sbr.rel (%p598) target = $region60
      $region59: #{deberta_for_regression_forward.1} parent=11 // pred_region
        _
      $region60: #{deberta_for_regression_forward.1} parent=11 // pred_fallthru
        _
      // Predicated region
      $region61: #{deberta_for_regression_forward.1} parent=11 // pred_check
        %p601 = pneg %p356
      $region62: #{deberta_for_regression_forward.1} parent=11 // pred_check_branch
        %603 = sbr.rel (%p601) target = $region64
      $region63: #{deberta_for_regression_forward.1} parent=11 // pred_region
        _
      $region64: #{deberta_for_regression_forward.1} parent=11 // pred_fallthru
        _
      // Predicated region
      $region65: #{deberta_for_regression_forward.1} parent=11 // pred_check
        %p604 = pneg %p377
      $region66: #{deberta_for_regression_forward.1} parent=11 // pred_check_branch
        %606 = sbr.rel (%p604) target = $region68
      $region67: #{deberta_for_regression_forward.1} parent=11 // pred_region
        _
      $region68: #{deberta_for_regression_forward.1} parent=11 // pred_fallthru
        _
      // Predicated region
      $region69: #{deberta_for_regression_forward.1} parent=11 // pred_check
        %p607 = pneg %p398
      $region70: #{deberta_for_regression_forward.1} parent=11 // pred_check_branch
        %609 = sbr.rel (%p607) target = $region72
      $region71: #{deberta_for_regression_forward.1} parent=11 // pred_region
        _
      $region72: #{deberta_for_regression_forward.1} parent=11 // pred_fallthru
        _
      // Predicated region
      $region73: #{deberta_for_regression_forward.1} parent=11 // pred_check
        %p610 = pneg %p419
      $region74: #{deberta_for_regression_forward.1} parent=11 // pred_check_branch
        %612 = sbr.rel (%p610) target = $region76
      $region75: #{deberta_for_regression_forward.1} parent=11 // pred_region
        _
      $region76: #{deberta_for_regression_forward.1} parent=11 // pred_fallthru
        _
      // Predicated region
      $region77: #{deberta_for_regression_forward.1} parent=11 // pred_check
        %p613 = pneg %p440
      $region78: #{deberta_for_regression_forward.1} parent=11 // pred_check_branch
        %615 = sbr.rel (%p613) target = $region80
      $region79: #{deberta_for_regression_forward.1} parent=11 // pred_region
        _
      $region80: #{deberta_for_regression_forward.1} parent=11 // pred_fallthru
        _
      // Predicated region
      $region81: #{deberta_for_regression_forward.1} parent=11 // pred_check
        %p616 = pneg %p461
      $region82: #{deberta_for_regression_forward.1} parent=11 // pred_check_branch
        %618 = sbr.rel (%p616) target = $region84
      $region83: #{deberta_for_regression_forward.1} parent=11 // pred_region
        _
      $region84: #{deberta_for_regression_forward.1} parent=11 // pred_fallthru
        _
      // Predicated region
      $region85: #{deberta_for_regression_forward.1} parent=11 // pred_check
        %p619 = pneg %p482
      $region86: #{deberta_for_regression_forward.1} parent=11 // pred_check_branch
        %621 = sbr.rel (%p619) target = $region88
      $region87: #{deberta_for_regression_forward.1} parent=11 // pred_region
        _
      $region88: #{deberta_for_regression_forward.1} parent=11 // pred_fallthru
        _
      // Predicated region
      $region89: #{deberta_for_regression_forward.1} parent=11 // pred_check
        %p622 = pneg %p503
      $region90: #{deberta_for_regression_forward.1} parent=11 // pred_check_branch
        %624 = sbr.rel (%p622) target = $region92
      $region91: #{deberta_for_regression_forward.1} parent=11 // pred_region
        _
      $region92: #{deberta_for_regression_forward.1} parent=11 // pred_fallthru
        _
      // Predicated region
      $region93: #{deberta_for_regression_forward.1} parent=11 // pred_check
        %p625 = pneg %p524
      $region94: #{deberta_for_regression_forward.1} parent=11 // pred_check_branch
        %627 = sbr.rel (%p625) target = $region96
      $region95: #{deberta_for_regression_forward.1} parent=11 // pred_region
        _
      $region96: #{deberta_for_regression_forward.1} parent=11 // pred_fallthru
        _
    $region12: #{deberta_for_regression_forward.1} parent=5 // pred_fallthru
      _
    %p628 = scmp.lt.s32.totalorder %s31, 2
    // Predicated region
    $region97: #{deberta_for_regression_forward.1} parent=5 // pred_check
      %p629 = pneg %p628
    $region98: #{deberta_for_regression_forward.1} parent=5 // pred_check_branch
      %631 = sbr.rel (%p629) target = $region100
    $region99: #{deberta_for_regression_forward.1} parent=5 // pred_region
      // Predicated region
      $region101: #{deberta_for_regression_forward.1} parent=99 // pred_check
        %p632 = pneg %p51
      $region102: #{deberta_for_regression_forward.1} parent=99 // pred_check_branch
        %634 = sbr.rel (%p632) target = $region104
      $region103: #{deberta_for_regression_forward.1} parent=99 // pred_region
        %p635 = scmp.lt.s32.totalorder %s31, 1
        %s636 = scalar_select %p635, %s31, 1
        %s637 = smul.addr %s636, 8
        %s638 = scalar_lea.vmem %s0, %s637
      $region104: #{deberta_for_regression_forward.1} parent=99 // pred_fallthru
        _
      // Predicated region
      $region105: #{deberta_for_regression_forward.1} parent=99 // pred_check
        %p639 = pneg %p77
      $region106: #{deberta_for_regression_forward.1} parent=99 // pred_check_branch
        %641 = sbr.rel (%p639) target = $region108
      $region107: #{deberta_for_regression_forward.1} parent=99 // pred_region
        %p642 = scmp.lt.s32.totalorder %s31, 1
        %s643 = scalar_select %p642, %s31, 1
        %s644 = scalar_lea.vmem %s1, %s643
      $region108: #{deberta_for_regression_forward.1} parent=99 // pred_fallthru
        _
    $region100: #{deberta_for_regression_forward.1} parent=5 // pred_fallthru
      _
    %p645 = scmp.le.s32.totalorder 1, %s31
    %p646 = scmp.lt.s32.totalorder %s31, 3
    %p647 = pnand %p645, %p646
    %p648 = pneg %p647
    // Predicated region
    $region109: #{deberta_for_regression_forward.1} parent=5 // pred_check
      _
    $region110: #{deberta_for_regression_forward.1} parent=5 // pred_check_branch
      %650 = sbr.rel (%p647) target = $region112
    $region111: #{deberta_for_regression_forward.1} parent=5 // pred_region
      %s651 = ssub.s32 %s31, 1
      %p652 = scmp.lt.s32.totalorder %s36, 1
      %s653 = scalar_select %p652, %s36, 1
      %s654 = smul.addr %s653, 8
      %s655 = scalar_lea.vmem %s0, %s654
      %p656 = pneg %p57
      %p657 = pneg %p54
      %p658 = scmp.lt.s32.totalorder %s36, 1
      %s659 = scalar_select %p658, %s36, 1
      %s660 = scalar_lea.vmem %s1, %s659
      %p661 = pneg %p83
      %p662 = pneg %p80
      %p663 = pneg %p104
      %p664 = pneg %p101
      %p665 = pneg %p125
      %p666 = pneg %p122
      %p667 = pneg %p146
      %p668 = pneg %p143
      %p669 = pneg %p167
      %p670 = pneg %p164
      %p671 = pneg %p188
      %p672 = pneg %p185
      %p673 = pneg %p209
      %p674 = pneg %p206
      %p675 = pneg %p230
      %p676 = pneg %p227
      %p677 = pneg %p251
      %p678 = pneg %p248
      %p679 = pneg %p272
      %p680 = pneg %p269
      %p681 = pneg %p293
      %p682 = pneg %p290
      %p683 = pneg %p314
      %p684 = pneg %p311
      %p685 = pneg %p335
      %p686 = pneg %p332
      %p687 = pneg %p356
      %p688 = pneg %p353
      %p689 = pneg %p377
      %p690 = pneg %p374
      %p691 = pneg %p398
      %p692 = pneg %p395
      %p693 = pneg %p419
      %p694 = pneg %p416
      %p695 = pneg %p440
      %p696 = pneg %p437
      %p697 = pneg %p461
      %p698 = pneg %p458
      %p699 = pneg %p482
      %p700 = pneg %p479
      %p701 = pneg %p503
      %p702 = pneg %p500
      %p703 = pneg %p524
      %p704 = pneg %p521
      %p705 = pneg %p550
      %p706 = pneg %p547
      %p707 = scmp.lt.s32.totalorder %s36, 1
      %s708 = scalar_select %p707, %s36, 1
      %s709 = scalar_lea.vmem %s23, %s708
      %p710 = scmp.lt.s32.totalorder %s36, 1
      %s711 = scalar_select %p710, %s36, 1
      %s712 = smul.addr %s711, 8
      %s713 = scalar_lea.vmem %s0, %s712
      %p714 = scmp.lt.s32.totalorder %s36, 1
      %s715 = scalar_select %p714, %s36, 1
      %s716 = scalar_lea.vmem %s1, %s715
      %p717 = scmp.lt.s32.totalorder %s36, 1
      %s718 = scalar_select %p717, %s36, 1
      %s719 = scalar_lea.vmem %s23, %s718
      %v721 = vld [vmem:[%s713] sm:$0xff]
      %v722 = vlaneseq
      %v723 = vand.u32 %v722, 127
      %724 = vset.pattern.permute.xlu0 0
      %725 = vperm.xlu0 %724, %v721
      %v726 = vpop.permute.xlu0 %725
      %vm727 = vcmp.eq.s32.totalorder %v723, %v726
      %v728 = vsel %vm727, 1, 0
      %v729 = vcvt.s32.f32 %v728
      %v730 = vld [vmem:[%s2] sm:$0xff]
      %v731 = vld [vmem:[%s2 + $0x8] sm:$0xff]
      %v732 = vld [vmem:[%s2 + $0x10] sm:$0xff]
      %v733 = vld [vmem:[%s2 + $0x18] sm:$0xff]
      %v734 = vld [vmem:[%s2 + $0x20] sm:$0xff]
      %v735 = vld [vmem:[%s2 + $0x28] sm:$0xff]
      %v736 = vld [vmem:[%s2 + $0x30] sm:$0xff]
      %v737 = vld [vmem:[%s2 + $0x38] sm:$0xff]
      %vm738 = vcmask 523264
      %v740 = vsel %vm738, %v729, 0
      %742 = vmatprep.subr.mxu0 0.0
      %743 = vmatpush1.msra.mxu0 %v730
      %744 = vmatprep.subr.mxu0 0.0
      %745 = vmatpush1.msra.mxu0 %v731
      %746 = vmatprep.subr.mxu0 0.0
      %747 = vmatpush1.msra.mxu0 %v732
      %748 = vmatprep.subr.mxu0 0.0
      %749 = vmatpush1.msra.mxu0 %v733
      %750 = vmatprep.subr.mxu0 0.0
      %751 = vmatpush1.msra.mxu0 %v734
      %752 = vmatprep.subr.mxu0 0.0
      %753 = vmatpush1.msra.mxu0 %v735
      %754 = vmatprep.subr.mxu0 0.0
      %755 = vmatpush1.msra.mxu0 %v736
      %756 = vmatprep.subr.mxu0 0.0
      %757 = vmatpush1.msra.mxu0 %v737
      %758 = vmatprep.subr.mxu0 0.0
      %759 = vmatpush1.msra.mxu0 0.0
      %760 = vmatprep.subr.mxu0 0.0
      %761 = vmatpush1.msra.mxu0 0.0
      %762 = vmatprep.subr.mxu0 0.0
      %763 = vmatpush1.msra.mxu0 0.0
      %764 = vmatprep.subr.mxu0 0.0
      %765 = vmatpush1.msra.mxu0 0.0
      %766 = vmatprep.subr.mxu0 0.0
      %767 = vmatpush1.msra.mxu0 0.0
      %768 = vmatprep.subr.mxu0 0.0
      %769 = vmatpush1.msra.mxu0 0.0
      %770 = vmatprep.subr.mxu0 0.0
      %771 = vmatpush1.msra.mxu0 0.0
      %772 = vmatprep.subr.mxu0 0.0
      %773 = vmatpush1.msra.mxu0 0.0
      %774 = vmatprep.subr.mxu0 0.0
      %775 = vmatpush1.msra.mxu0 0.0
      %776 = vmatprep.subr.mxu0 0.0
      %777 = vmatpush1.msra.mxu0 0.0
      %778 = vmatprep.subr.mxu0 0.0
      %779 = vmatpush1.msra.mxu0 0.0
      %780 = vmatprep.subr.mxu0 0.0
      %781 = vmatpush1.msra.mxu0 0.0
      %782 = vmatprep.subr.mxu0 0.0
      %783 = vmatpush1.msra.mxu0 0.0
      %784 = vmatprep.subr.mxu0 0.0
      %785 = vmatpush1.msra.mxu0 0.0
      %786 = vmatprep.subr.mxu0 0.0
      %787 = vmatpush1.msra.mxu0 0.0
      %788 = vmatprep.subr.mxu0 0.0
      %789 = vmatpush1.msra.mxu0 0.0
      %790 = vmatprep.subr.mxu0 0.0
      %791 = vmatpush1.msra.mxu0 0.0
      %792 = vmatprep.subr.mxu0 0.0
      %793 = vmatpush1.msra.mxu0 0.0
      %794 = vmatprep.subr.mxu0 0.0
      %795 = vmatpush1.msra.mxu0 0.0
      %796 = vmatprep.subr.mxu0 0.0
      %797 = vmatpush1.msra.mxu0 0.0
      %798 = vmatprep.subr.mxu0 0.0
      %799 = vmatpush1.msra.mxu0 0.0
      %800 = vmatprep.subr.mxu0 0.0
      %801 = vmatpush1.msra.mxu0 0.0
      %802 = vmatprep.subr.mxu0 0.0
      %803 = vmatpush1.msra.mxu0 0.0
      %804 = vmatprep.subr.mxu0 0.0
      %805 = vmatpush1.msra.mxu0 0.0
      %806 = vmatprep.mubr.f32.mxu0 0.0
      %807 = vmatmul.mubr.f32.gmra.mrb[0].mxu0 %v740
      %v808 = vpop.f32.mrb[0].mxu0
      %v809 = vadd.f32 0.0, %v808
      %v810 = vpop.f32.mrb[0].mxu0
      %811 = vdwg.mxu0
      %v812 = vld [vmem:[%s3] sm:$0x1]
      %v813 = vld [vmem:[%s4] sm:$0x1]
      %vm814 = vcmask 261120
      %v815 = vsel %vm814, %v809, 0.0
      %816 = vadd.xlane.f32.xlu0 %v815
      %v817 = vpop.xlane.xlu0 %816
      %v818 = vrcp.pop 32.0
      %v819 = vmul.f32 %v817, %v818
      %v820 = vsub.f32 %v809, %v819
      %v821 = vmul.f32 %v820, %v820
      %v822 = vsel %vm814, %v821, 0.0
      %823 = vadd.xlane.f32.xlu0 %v822
      %v824 = vpop.xlane.xlu0 %823
      %v825 = vmul.f32 %v824, %v818
      %v826 = vadd.f32 %v825, 1e-07
      %v827 = vrsqrt.pop %v826
      %v828 = vmul.f32 %v820, %v827
      %v830 = vlaneseq
      %v831 = vshrl.u32 %v830, 7
      %v832 = vsub.s32 0, %v831
      %v833 = vrot.slane %v812, %v832
      %v835 = vmul.f32 %v828, %v833
      %v837 = vlaneseq
      %v838 = vshrl.u32 %v837, 7
      %v839 = vsub.s32 0, %v838
      %v840 = vrot.slane %v813, %v839
      %v842 = vadd.f32 %v835, %v840
      %v843 = vld [vmem:[%s716] sm:$0x1]
      %v844 = vsub.f32 1.0, %v843
      %v845 = vmul.f32 %v844, -1e+09
      %v846 = vld [vmem:[%s5] sm:$0xff]
      %v847 = vld [vmem:[%s5 + $0x8] sm:$0xff]
      %v848 = vld [vmem:[%s5 + $0x10] sm:$0xff]
      %v849 = vld [vmem:[%s5 + $0x18] sm:$0xff]
      %v850 = vld [vmem:[%s5 + $0x20] sm:$0xff]
      %v851 = vld [vmem:[%s5 + $0x28] sm:$0xff]
      %v852 = vld [vmem:[%s5 + $0x30] sm:$0xff]
      %v853 = vld [vmem:[%s5 + $0x38] sm:$0xff]
      %v854 = vld [vmem:[%s5 + $0x40] sm:$0xff]
      %v855 = vld [vmem:[%s5 + $0x48] sm:$0xff]
      %v856 = vld [vmem:[%s5 + $0x50] sm:$0xff]
      %v857 = vld [vmem:[%s5 + $0x58] sm:$0xff]
      %v858 = vld [vmem:[%s5 + $0x60] sm:$0xff]
      %v859 = vld [vmem:[%s5 + $0x68] sm:$0xff]
      %v860 = vld [vmem:[%s5 + $0x70] sm:$0xff]
      %v861 = vld [vmem:[%s5 + $0x78] sm:$0xff]
      %v862 = vpack.c.bf16 %v847, %v846
      %v863 = vpack.c.bf16 %v849, %v848
      %v864 = vpack.c.bf16 %v851, %v850
      %v865 = vpack.c.bf16 %v853, %v852
      %v866 = vpack.c.bf16 %v855, %v854
      %v867 = vpack.c.bf16 %v857, %v856
      %v868 = vpack.c.bf16 %v859, %v858
      %v869 = vpack.c.bf16 %v861, %v860
      %v870 = vld [vmem:[%s7] sm:$0xff]
      %v871 = vld [vmem:[%s7 + $0x8] sm:$0xff]
      %v872 = vld [vmem:[%s7 + $0x10] sm:$0xff]
      %v873 = vld [vmem:[%s7 + $0x18] sm:$0xff]
      %v874 = vld [vmem:[%s7 + $0x20] sm:$0xff]
      %v875 = vld [vmem:[%s7 + $0x28] sm:$0xff]
      %v876 = vld [vmem:[%s7 + $0x30] sm:$0xff]
      %v877 = vld [vmem:[%s7 + $0x38] sm:$0xff]
      %v878 = vld [vmem:[%s7 + $0x40] sm:$0xff]
      %v879 = vld [vmem:[%s7 + $0x48] sm:$0xff]
      %v880 = vld [vmem:[%s7 + $0x50] sm:$0xff]
      %v881 = vld [vmem:[%s7 + $0x58] sm:$0xff]
      %v882 = vld [vmem:[%s7 + $0x60] sm:$0xff]
      %v883 = vld [vmem:[%s7 + $0x68] sm:$0xff]
      %v884 = vld [vmem:[%s7 + $0x70] sm:$0xff]
      %v885 = vld [vmem:[%s7 + $0x78] sm:$0xff]
      %v886 = vpack.c.bf16 %v871, %v870
      %v887 = vpack.c.bf16 %v873, %v872
      %v888 = vpack.c.bf16 %v875, %v874
      %v889 = vpack.c.bf16 %v877, %v876
      %v890 = vpack.c.bf16 %v879, %v878
      %v891 = vpack.c.bf16 %v881, %v880
      %v892 = vpack.c.bf16 %v883, %v882
      %v893 = vpack.c.bf16 %v885, %v884
      %v894 = vld [vmem:[%s9] sm:$0xff]
      %v895 = vld [vmem:[%s9 + $0x8] sm:$0xff]
      %v896 = vld [vmem:[%s9 + $0x10] sm:$0xff]
      %v897 = vld [vmem:[%s9 + $0x18] sm:$0xff]
      %v898 = vld [vmem:[%s9 + $0x20] sm:$0xff]
      %v899 = vld [vmem:[%s9 + $0x28] sm:$0xff]
      %v900 = vld [vmem:[%s9 + $0x30] sm:$0xff]
      %v901 = vld [vmem:[%s9 + $0x38] sm:$0xff]
      %v902 = vld [vmem:[%s9 + $0x40] sm:$0xff]
      %v903 = vld [vmem:[%s9 + $0x48] sm:$0xff]
      %v904 = vld [vmem:[%s9 + $0x50] sm:$0xff]
      %v905 = vld [vmem:[%s9 + $0x58] sm:$0xff]
      %v906 = vld [vmem:[%s9 + $0x60] sm:$0xff]
      %v907 = vld [vmem:[%s9 + $0x68] sm:$0xff]
      %v908 = vld [vmem:[%s9 + $0x70] sm:$0xff]
      %v909 = vld [vmem:[%s9 + $0x78] sm:$0xff]
      %v910 = vpack.c.bf16 %v895, %v894
      %v911 = vpack.c.bf16 %v897, %v896
      %v912 = vpack.c.bf16 %v899, %v898
      %v913 = vpack.c.bf16 %v901, %v900
      %v914 = vpack.c.bf16 %v903, %v902
      %v915 = vpack.c.bf16 %v905, %v904
      %v916 = vpack.c.bf16 %v907, %v906
      %v917 = vpack.c.bf16 %v909, %v908
      %v918 = vld [vmem:[%s11] sm:$0xff]
      %v919 = vld [vmem:[%s11 + $0x8] sm:$0xff]
      %v920 = vld [vmem:[%s11 + $0x10] sm:$0xff]
      %v921 = vld [vmem:[%s11 + $0x18] sm:$0xff]
      %v922 = vpack.c.bf16 %v918, %v918
      %v923 = vpack.c.bf16 %v919, %v919
      %v924 = vpack.c.bf16 %v920, %v920
      %v925 = vpack.c.bf16 %v921, %v921
      %v926 = vpack.c.bf16 %v842, %v842
      %v927 = vld [vmem:[%s6] sm:$0x1]
      %v928 = vld [vmem:[%s6 + $0x1] sm:$0x1]
      %v929 = vld [vmem:[%s6 + $0x2] sm:$0x1]
      %v930 = vld [vmem:[%s6 + $0x3] sm:$0x1]
      %v935 = vlaneseq
      %v936 = vshrl.u32 %v935, 7
      %v937 = vsub.s32 0, %v936
      %v938 = vrot.slane %v927, %v937
      %v939 = vlaneseq
      %v940 = vshrl.u32 %v939, 7
      %v941 = vsub.s32 0, %v940
      %v942 = vrot.slane %v928, %v941
      %v943 = vlaneseq
      %v944 = vshrl.u32 %v943, 7
      %v945 = vsub.s32 0, %v944
      %v946 = vrot.slane %v929, %v945
      %v947 = vlaneseq
      %v948 = vshrl.u32 %v947, 7
      %v949 = vsub.s32 0, %v948
      %v950 = vrot.slane %v930, %v949
      %v956 = vsel %vm814, %v926, 0
      %958 = vmatprep.subr.bf16.mxu0 0
      %959 = vmatpush1.bf16.msra.mxu0 %v862
      %960 = vmatprep.subr.bf16.mxu0 0
      %961 = vmatpush1.bf16.msra.mxu0 %v863
      %962 = vmatprep.subr.bf16.mxu0 0
      %963 = vmatpush1.bf16.msra.mxu0 0
      %964 = vmatprep.subr.bf16.mxu0 0
      %965 = vmatpush1.bf16.msra.mxu0 0
      %966 = vmatprep.subr.bf16.mxu0 0
      %967 = vmatpush1.bf16.msra.mxu0 0
      %968 = vmatprep.subr.bf16.mxu0 0
      %969 = vmatpush1.bf16.msra.mxu0 0
      %970 = vmatprep.subr.bf16.mxu0 0
      %971 = vmatpush1.bf16.msra.mxu0 0
      %972 = vmatprep.subr.bf16.mxu0 0
      %973 = vmatpush1.bf16.msra.mxu0 0
      %974 = vmatprep.subr.bf16.mxu0 0
      %975 = vmatpush1.bf16.msra.mxu0 0
      %976 = vmatprep.subr.bf16.mxu0 0
      %977 = vmatpush1.bf16.msra.mxu0 0
      %978 = vmatprep.subr.bf16.mxu0 0
      %979 = vmatpush1.bf16.msra.mxu0 0
      %980 = vmatprep.subr.bf16.mxu0 0
      %981 = vmatpush1.bf16.msra.mxu0 0
      %982 = vmatprep.subr.bf16.mxu0 0
      %983 = vmatpush1.bf16.msra.mxu0 0
      %984 = vmatprep.subr.bf16.mxu0 0
      %985 = vmatpush1.bf16.msra.mxu0 0
      %986 = vmatprep.subr.bf16.mxu0 0
      %987 = vmatpush1.bf16.msra.mxu0 0
      %988 = vmatprep.subr.bf16.mxu0 0
      %989 = vmatpush1.bf16.msra.mxu0 0
      %990 = vmatprep.mubr.bf16.mxu0 0
      %991 = vmatmul.mubr.bf16.gmra.mrb[0].mxu0 %v956
      %v992 = vpop.f32.mrb[0].mxu0
      %v993 = vadd.f32 %v938, %v992
      %v994 = vpop.f32.mrb[0].mxu0
      %v995 = vpop.f32.mrb[0].mxu0
      %v996 = vpop.f32.mrb[0].mxu0
      %997 = vdwg.mxu0
      %998 = vmatprep.subr.bf16.mxu0 0
      %999 = vmatpush1.bf16.msra.mxu0 %v864
      %1000 = vmatprep.subr.bf16.mxu0 0
      %1001 = vmatpush1.bf16.msra.mxu0 %v865
      %1002 = vmatprep.subr.bf16.mxu0 0
      %1003 = vmatpush1.bf16.msra.mxu0 0
      %1004 = vmatprep.subr.bf16.mxu0 0
      %1005 = vmatpush1.bf16.msra.mxu0 0
      %1006 = vmatprep.subr.bf16.mxu0 0
      %1007 = vmatpush1.bf16.msra.mxu0 0
      %1008 = vmatprep.subr.bf16.mxu0 0
      %1009 = vmatpush1.bf16.msra.mxu0 0
      %1010 = vmatprep.subr.bf16.mxu0 0
      %1011 = vmatpush1.bf16.msra.mxu0 0
      %1012 = vmatprep.subr.bf16.mxu0 0
      %1013 = vmatpush1.bf16.msra.mxu0 0
      %1014 = vmatprep.subr.bf16.mxu0 0
      %1015 = vmatpush1.bf16.msra.mxu0 0
      %1016 = vmatprep.subr.bf16.mxu0 0
      %1017 = vmatpush1.bf16.msra.mxu0 0
      %1018 = vmatprep.subr.bf16.mxu0 0
      %1019 = vmatpush1.bf16.msra.mxu0 0
      %1020 = vmatprep.subr.bf16.mxu0 0
      %1021 = vmatpush1.bf16.msra.mxu0 0
      %1022 = vmatprep.subr.bf16.mxu0 0
      %1023 = vmatpush1.bf16.msra.mxu0 0
      %1024 = vmatprep.subr.bf16.mxu0 0
      %1025 = vmatpush1.bf16.msra.mxu0 0
      %1026 = vmatprep.subr.bf16.mxu0 0
      %1027 = vmatpush1.bf16.msra.mxu0 0
      %1028 = vmatprep.subr.bf16.mxu0 0
      %1029 = vmatpush1.bf16.msra.mxu0 0
      %1030 = vmatprep.mubr.bf16.mxu0 0
      %1031 = vmatmul.mubr.bf16.gmra.mrb[0].mxu0 %v956
      %v1032 = vpop.f32.mrb[0].mxu0
      %v1033 = vadd.f32 %v942, %v1032
      %v1034 = vpop.f32.mrb[0].mxu0
      %v1035 = vpop.f32.mrb[0].mxu0
      %v1036 = vpop.f32.mrb[0].mxu0
      %1037 = vdwg.mxu0
      %1038 = vmatprep.subr.bf16.mxu0 0
      %1039 = vmatpush1.bf16.msra.mxu0 %v866
      %1040 = vmatprep.subr.bf16.mxu0 0
      %1041 = vmatpush1.bf16.msra.mxu0 %v867
      %1042 = vmatprep.subr.bf16.mxu0 0
      %1043 = vmatpush1.bf16.msra.mxu0 0
      %1044 = vmatprep.subr.bf16.mxu0 0
      %1045 = vmatpush1.bf16.msra.mxu0 0
      %1046 = vmatprep.subr.bf16.mxu0 0
      %1047 = vmatpush1.bf16.msra.mxu0 0
      %1048 = vmatprep.subr.bf16.mxu0 0
      %1049 = vmatpush1.bf16.msra.mxu0 0
      %1050 = vmatprep.subr.bf16.mxu0 0
      %1051 = vmatpush1.bf16.msra.mxu0 0
      %1052 = vmatprep.subr.bf16.mxu0 0
      %1053 = vmatpush1.bf16.msra.mxu0 0
      %1054 = vmatprep.subr.bf16.mxu0 0
      %1055 = vmatpush1.bf16.msra.mxu0 0
      %1056 = vmatprep.subr.bf16.mxu0 0
      %1057 = vmatpush1.bf16.msra.mxu0 0
      %1058 = vmatprep.subr.bf16.mxu0 0
      %1059 = vmatpush1.bf16.msra.mxu0 0
      %1060 = vmatprep.subr.bf16.mxu0 0
      %1061 = vmatpush1.bf16.msra.mxu0 0
      %1062 = vmatprep.subr.bf16.mxu0 0
      %1063 = vmatpush1.bf16.msra.mxu0 0
      %1064 = vmatprep.subr.bf16.mxu0 0
      %1065 = vmatpush1.bf16.msra.mxu0 0
      %1066 = vmatprep.subr.bf16.mxu0 0
      %1067 = vmatpush1.bf16.msra.mxu0 0
      %1068 = vmatprep.subr.bf16.mxu0 0
      %1069 = vmatpush1.bf16.msra.mxu0 0
      %1070 = vmatprep.mubr.bf16.mxu0 0
      %1071 = vmatmul.mubr.bf16.gmra.mrb[0].mxu0 %v956
      %v1072 = vpop.f32.mrb[0].mxu0
      %v1073 = vadd.f32 %v946, %v1072
      %v1074 = vpop.f32.mrb[0].mxu0
      %v1075 = vpop.f32.mrb[0].mxu0
      %v1076 = vpop.f32.mrb[0].mxu0
      %1077 = vdwg.mxu0
      %1078 = vmatprep.subr.bf16.mxu0 0
      %1079 = vmatpush1.bf16.msra.mxu0 %v868
      %1080 = vmatprep.subr.bf16.mxu0 0
      %1081 = vmatpush1.bf16.msra.mxu0 %v869
      %1082 = vmatprep.subr.bf16.mxu0 0
      %1083 = vmatpush1.bf16.msra.mxu0 0
      %1084 = vmatprep.subr.bf16.mxu0 0
      %1085 = vmatpush1.bf16.msra.mxu0 0
      %1086 = vmatprep.subr.bf16.mxu0 0
      %1087 = vmatpush1.bf16.msra.mxu0 0
      %1088 = vmatprep.subr.bf16.mxu0 0
      %1089 = vmatpush1.bf16.msra.mxu0 0
      %1090 = vmatprep.subr.bf16.mxu0 0
      %1091 = vmatpush1.bf16.msra.mxu0 0
      %1092 = vmatprep.subr.bf16.mxu0 0
      %1093 = vmatpush1.bf16.msra.mxu0 0
      %1094 = vmatprep.subr.bf16.mxu0 0
      %1095 = vmatpush1.bf16.msra.mxu0 0
      %1096 = vmatprep.subr.bf16.mxu0 0
      %1097 = vmatpush1.bf16.msra.mxu0 0
      %1098 = vmatprep.subr.bf16.mxu0 0
      %1099 = vmatpush1.bf16.msra.mxu0 0
      %1100 = vmatprep.subr.bf16.mxu0 0
      %1101 = vmatpush1.bf16.msra.mxu0 0
      %1102 = vmatprep.subr.bf16.mxu0 0
      %1103 = vmatpush1.bf16.msra.mxu0 0
      %1104 = vmatprep.subr.bf16.mxu0 0
      %1105 = vmatpush1.bf16.msra.mxu0 0
      %1106 = vmatprep.subr.bf16.mxu0 0
      %1107 = vmatpush1.bf16.msra.mxu0 0
      %1108 = vmatprep.subr.bf16.mxu0 0
      %1109 = vmatpush1.bf16.msra.mxu0 0
      %1110 = vmatprep.mubr.bf16.mxu0 0
      %1111 = vmatmul.mubr.bf16.gmra.mrb[0].mxu0 %v956
      %v1112 = vpop.f32.mrb[0].mxu0
      %v1113 = vadd.f32 %v950, %v1112
      %v1114 = vpop.f32.mrb[0].mxu0
      %v1115 = vpop.f32.mrb[0].mxu0
      %v1116 = vpop.f32.mrb[0].mxu0
      %1117 = vdwg.mxu0
      %v1118 = vld [vmem:[%s8] sm:$0x1]
      %v1119 = vld [vmem:[%s8 + $0x1] sm:$0x1]
      %v1120 = vld [vmem:[%s8 + $0x2] sm:$0x1]
      %v1121 = vld [vmem:[%s8 + $0x3] sm:$0x1]
      %v1126 = vlaneseq
      %v1127 = vshrl.u32 %v1126, 7
      %v1128 = vsub.s32 0, %v1127
      %v1129 = vrot.slane %v1118, %v1128
      %v1130 = vlaneseq
      %v1131 = vshrl.u32 %v1130, 7
      %v1132 = vsub.s32 0, %v1131
      %v1133 = vrot.slane %v1119, %v1132
      %v1134 = vlaneseq
      %v1135 = vshrl.u32 %v1134, 7
      %v1136 = vsub.s32 0, %v1135
      %v1137 = vrot.slane %v1120, %v1136
      %v1138 = vlaneseq
      %v1139 = vshrl.u32 %v1138, 7
      %v1140 = vsub.s32 0, %v1139
      %v1141 = vrot.slane %v1121, %v1140
      %1146 = vmatprep.subr.bf16.mxu0 0
      %1147 = vmatpush1.bf16.msra.mxu0 %v886
      %1148 = vmatprep.subr.bf16.mxu0 0
      %1149 = vmatpush1.bf16.msra.mxu0 %v887
      %1150 = vmatprep.subr.bf16.mxu0 0
      %1151 = vmatpush1.bf16.msra.mxu0 0
      %1152 = vmatprep.subr.bf16.mxu0 0
      %1153 = vmatpush1.bf16.msra.mxu0 0
      %1154 = vmatprep.subr.bf16.mxu0 0
      %1155 = vmatpush1.bf16.msra.mxu0 0
      %1156 = vmatprep.subr.bf16.mxu0 0
      %1157 = vmatpush1.bf16.msra.mxu0 0
      %1158 = vmatprep.subr.bf16.mxu0 0
      %1159 = vmatpush1.bf16.msra.mxu0 0
      %1160 = vmatprep.subr.bf16.mxu0 0
      %1161 = vmatpush1.bf16.msra.mxu0 0
      %1162 = vmatprep.subr.bf16.mxu0 0
      %1163 = vmatpush1.bf16.msra.mxu0 0
      %1164 = vmatprep.subr.bf16.mxu0 0
      %1165 = vmatpush1.bf16.msra.mxu0 0
      %1166 = vmatprep.subr.bf16.mxu0 0
      %1167 = vmatpush1.bf16.msra.mxu0 0
      %1168 = vmatprep.subr.bf16.mxu0 0
      %1169 = vmatpush1.bf16.msra.mxu0 0
      %1170 = vmatprep.subr.bf16.mxu0 0
      %1171 = vmatpush1.bf16.msra.mxu0 0
      %1172 = vmatprep.subr.bf16.mxu0 0
      %1173 = vmatpush1.bf16.msra.mxu0 0
      %1174 = vmatprep.subr.bf16.mxu0 0
      %1175 = vmatpush1.bf16.msra.mxu0 0
      %1176 = vmatprep.subr.bf16.mxu0 0
      %1177 = vmatpush1.bf16.msra.mxu0 0
      %1178 = vmatprep.mubr.bf16.mxu0 0
      %1179 = vmatmul.mubr.bf16.gmra.mrb[0].mxu0 %v956
      %v1180 = vpop.f32.mrb[0].mxu0
      %v1181 = vadd.f32 %v1129, %v1180
      %v1182 = vpop.f32.mrb[0].mxu0
      %v1183 = vpop.f32.mrb[0].mxu0
      %v1184 = vpop.f32.mrb[0].mxu0
      %1185 = vdwg.mxu0
      %1186 = vmatprep.subr.bf16.mxu0 0
      %1187 = vmatpush1.bf16.msra.mxu0 %v888
      %1188 = vmatprep.subr.bf16.mxu0 0
      %1189 = vmatpush1.bf16.msra.mxu0 %v889
      %1190 = vmatprep.subr.bf16.mxu0 0
      %1191 = vmatpush1.bf16.msra.mxu0 0
      %1192 = vmatprep.subr.bf16.mxu0 0
      %1193 = vmatpush1.bf16.msra.mxu0 0
      %1194 = vmatprep.subr.bf16.mxu0 0
      %1195 = vmatpush1.bf16.msra.mxu0 0
      %1196 = vmatprep.subr.bf16.mxu0 0
      %1197 = vmatpush1.bf16.msra.mxu0 0
      %1198 = vmatprep.subr.bf16.mxu0 0
      %1199 = vmatpush1.bf16.msra.mxu0 0
      %1200 = vmatprep.subr.bf16.mxu0 0
      %1201 = vmatpush1.bf16.msra.mxu0 0
      %1202 = vmatprep.subr.bf16.mxu0 0
      %1203 = vmatpush1.bf16.msra.mxu0 0
      %1204 = vmatprep.subr.bf16.mxu0 0
      %1205 = vmatpush1.bf16.msra.mxu0 0
      %1206 = vmatprep.subr.bf16.mxu0 0
      %1207 = vmatpush1.bf16.msra.mxu0 0
      %1208 = vmatprep.subr.bf16.mxu0 0
      %1209 = vmatpush1.bf16.msra.mxu0 0
      %1210 = vmatprep.subr.bf16.mxu0 0
      %1211 = vmatpush1.bf16.msra.mxu0 0
      %1212 = vmatprep.subr.bf16.mxu0 0
      %1213 = vmatpush1.bf16.msra.mxu0 0
      %1214 = vmatprep.subr.bf16.mxu0 0
      %1215 = vmatpush1.bf16.msra.mxu0 0
      %1216 = vmatprep.subr.bf16.mxu0 0
      %1217 = vmatpush1.bf16.msra.mxu0 0
      %1218 = vmatprep.mubr.bf16.mxu0 0
      %1219 = vmatmul.mubr.bf16.gmra.mrb[0].mxu0 %v956
      %v1220 = vpop.f32.mrb[0].mxu0
      %v1221 = vadd.f32 %v1133, %v1220
      %v1222 = vpop.f32.mrb[0].mxu0
      %v1223 = vpop.f32.mrb[0].mxu0
      %v1224 = vpop.f32.mrb[0].mxu0
      %1225 = vdwg.mxu0
      %1226 = vmatprep.subr.bf16.mxu0 0
      %1227 = vmatpush1.bf16.msra.mxu0 %v890
      %1228 = vmatprep.subr.bf16.mxu0 0
      %1229 = vmatpush1.bf16.msra.mxu0 %v891
      %1230 = vmatprep.subr.bf16.mxu0 0
      %1231 = vmatpush1.bf16.msra.mxu0 0
      %1232 = vmatprep.subr.bf16.mxu0 0
      %1233 = vmatpush1.bf16.msra.mxu0 0
      %1234 = vmatprep.subr.bf16.mxu0 0
      %1235 = vmatpush1.bf16.msra.mxu0 0
      %1236 = vmatprep.subr.bf16.mxu0 0
      %1237 = vmatpush1.bf16.msra.mxu0 0
      %1238 = vmatprep.subr.bf16.mxu0 0
      %1239 = vmatpush1.bf16.msra.mxu0 0
      %1240 = vmatprep.subr.bf16.mxu0 0
      %1241 = vmatpush1.bf16.msra.mxu0 0
      %1242 = vmatprep.subr.bf16.mxu0 0
      %1243 = vmatpush1.bf16.msra.mxu0 0
      %1244 = vmatprep.subr.bf16.mxu0 0
      %1245 = vmatpush1.bf16.msra.mxu0 0
      %1246 = vmatprep.subr.bf16.mxu0 0
      %1247 = vmatpush1.bf16.msra.mxu0 0
      %1248 = vmatprep.subr.bf16.mxu0 0
      %1249 = vmatpush1.bf16.msra.mxu0 0
      %1250 = vmatprep.subr.bf16.mxu0 0
      %1251 = vmatpush1.bf16.msra.mxu0 0
      %1252 = vmatprep.subr.bf16.mxu0 0
      %1253 = vmatpush1.bf16.msra.mxu0 0
      %1254 = vmatprep.subr.bf16.mxu0 0
      %1255 = vmatpush1.bf16.msra.mxu0 0
      %1256 = vmatprep.subr.bf16.mxu0 0
      %1257 = vmatpush1.bf16.msra.mxu0 0
      %1258 = vmatprep.mubr.bf16.mxu0 0
      %1259 = vmatmul.mubr.bf16.gmra.mrb[0].mxu0 %v956
      %v1260 = vpop.f32.mrb[0].mxu0
      %v1261 = vadd.f32 %v1137, %v1260
      %v1262 = vpop.f32.mrb[0].mxu0
      %v1263 = vpop.f32.mrb[0].mxu0
      %v1264 = vpop.f32.mrb[0].mxu0
      %1265 = vdwg.mxu0
      %1266 = vmatprep.subr.bf16.mxu0 0
      %1267 = vmatpush1.bf16.msra.mxu0 %v892
      %1268 = vmatprep.subr.bf16.mxu0 0
      %1269 = vmatpush1.bf16.msra.mxu0 %v893
      %1270 = vmatprep.subr.bf16.mxu0 0
      %1271 = vmatpush1.bf16.msra.mxu0 0
      %1272 = vmatprep.subr.bf16.mxu0 0
      %1273 = vmatpush1.bf16.msra.mxu0 0
      %1274 = vmatprep.subr.bf16.mxu0 0
      %1275 = vmatpush1.bf16.msra.mxu0 0
      %1276 = vmatprep.subr.bf16.mxu0 0
      %1277 = vmatpush1.bf16.msra.mxu0 0
      %1278 = vmatprep.subr.bf16.mxu0 0
      %1279 = vmatpush1.bf16.msra.mxu0 0
      %1280 = vmatprep.subr.bf16.mxu0 0
      %1281 = vmatpush1.bf16.msra.mxu0 0
      %1282 = vmatprep.subr.bf16.mxu0 0
      %1283 = vmatpush1.bf16.msra.mxu0 0
      %1284 = vmatprep.subr.bf16.mxu0 0
      %1285 = vmatpush1.bf16.msra.mxu0 0
      %1286 = vmatprep.subr.bf16.mxu0 0
      %1287 = vmatpush1.bf16.msra.mxu0 0
      %1288 = vmatprep.subr.bf16.mxu0 0
      %1289 = vmatpush1.bf16.msra.mxu0 0
      %1290 = vmatprep.subr.bf16.mxu0 0
      %1291 = vmatpush1.bf16.msra.mxu0 0
      %1292 = vmatprep.subr.bf16.mxu0 0
      %1293 = vmatpush1.bf16.msra.mxu0 0
      %1294 = vmatprep.subr.bf16.mxu0 0
      %1295 = vmatpush1.bf16.msra.mxu0 0
      %1296 = vmatprep.subr.bf16.mxu0 0
      %1297 = vmatpush1.bf16.msra.mxu0 0
      %1298 = vmatprep.mubr.bf16.mxu0 0
      %1299 = vmatmul.mubr.bf16.gmra.mrb[0].mxu0 %v956
      %v1300 = vpop.f32.mrb[0].mxu0
      %v1301 = vadd.f32 %v1141, %v1300
      %v1302 = vpop.f32.mrb[0].mxu0
      %v1303 = vpop.f32.mrb[0].mxu0
      %v1304 = vpop.f32.mrb[0].mxu0
      %1305 = vdwg.mxu0
      %v1306 = vld [vmem:[%s10] sm:$0x1]
      %v1307 = vld [vmem:[%s10 + $0x1] sm:$0x1]
      %v1308 = vld [vmem:[%s10 + $0x2] sm:$0x1]
      %v1309 = vld [vmem:[%s10 + $0x3] sm:$0x1]
      %v1314 = vlaneseq
      %v1315 = vshrl.u32 %v1314, 7
      %v1316 = vsub.s32 0, %v1315
      %v1317 = vrot.slane %v1306, %v1316
      %v1318 = vlaneseq
      %v1319 = vshrl.u32 %v1318, 7
      %v1320 = vsub.s32 0, %v1319
      %v1321 = vrot.slane %v1307, %v1320
      %v1322 = vlaneseq
      %v1323 = vshrl.u32 %v1322, 7
      %v1324 = vsub.s32 0, %v1323
      %v1325 = vrot.slane %v1308, %v1324
      %v1326 = vlaneseq
      %v1327 = vshrl.u32 %v1326, 7
      %v1328 = vsub.s32 0, %v1327
      %v1329 = vrot.slane %v1309, %v1328
      %1334 = vmatprep.subr.bf16.mxu0 0
      %1335 = vmatpush1.bf16.msra.mxu0 %v910
      %1336 = vmatprep.subr.bf16.mxu0 0
      %1337 = vmatpush1.bf16.msra.mxu0 %v911
      %1338 = vmatprep.subr.bf16.mxu0 0
      %1339 = vmatpush1.bf16.msra.mxu0 0
      %1340 = vmatprep.subr.bf16.mxu0 0
      %1341 = vmatpush1.bf16.msra.mxu0 0
      %1342 = vmatprep.subr.bf16.mxu0 0
      %1343 = vmatpush1.bf16.msra.mxu0 0
      %1344 = vmatprep.subr.bf16.mxu0 0
      %1345 = vmatpush1.bf16.msra.mxu0 0
      %1346 = vmatprep.subr.bf16.mxu0 0
      %1347 = vmatpush1.bf16.msra.mxu0 0
      %1348 = vmatprep.subr.bf16.mxu0 0
      %1349 = vmatpush1.bf16.msra.mxu0 0
      %1350 = vmatprep.subr.bf16.mxu0 0
      %1351 = vmatpush1.bf16.msra.mxu0 0
      %1352 = vmatprep.subr.bf16.mxu0 0
      %1353 = vmatpush1.bf16.msra.mxu0 0
      %1354 = vmatprep.subr.bf16.mxu0 0
      %1355 = vmatpush1.bf16.msra.mxu0 0
      %1356 = vmatprep.subr.bf16.mxu0 0
      %1357 = vmatpush1.bf16.msra.mxu0 0
      %1358 = vmatprep.subr.bf16.mxu0 0
      %1359 = vmatpush1.bf16.msra.mxu0 0
      %1360 = vmatprep.subr.bf16.mxu0 0
      %1361 = vmatpush1.bf16.msra.mxu0 0
      %1362 = vmatprep.subr.bf16.mxu0 0
      %1363 = vmatpush1.bf16.msra.mxu0 0
      %1364 = vmatprep.subr.bf16.mxu0 0
      %1365 = vmatpush1.bf16.msra.mxu0 0
      %1366 = vmatprep.mubr.bf16.mxu0 0
      %1367 = vmatmul.mubr.bf16.gmra.mrb[0].mxu0 %v956
      %v1368 = vpop.f32.mrb[0].mxu0
      %v1369 = vadd.f32 %v1317, %v1368
      %v1370 = vpop.f32.mrb[0].mxu0
      %v1371 = vpop.f32.mrb[0].mxu0
      %v1372 = vpop.f32.mrb[0].mxu0
      %1373 = vdwg.mxu0
      %1374 = vmatprep.subr.bf16.mxu0 0
      %1375 = vmatpush1.bf16.msra.mxu0 %v912
      %1376 = vmatprep.subr.bf16.mxu0 0
      %1377 = vmatpush1.bf16.msra.mxu0 %v913
      %1378 = vmatprep.subr.bf16.mxu0 0
      %1379 = vmatpush1.bf16.msra.mxu0 0
      %1380 = vmatprep.subr.bf16.mxu0 0
      %1381 = vmatpush1.bf16.msra.mxu0 0
      %1382 = vmatprep.subr.bf16.mxu0 0
      %1383 = vmatpush1.bf16.msra.mxu0 0
      %1384 = vmatprep.subr.bf16.mxu0 0
      %1385 = vmatpush1.bf16.msra.mxu0 0
      %1386 = vmatprep.subr.bf16.mxu0 0
      %1387 = vmatpush1.bf16.msra.mxu0 0
      %1388 = vmatprep.subr.bf16.mxu0 0
      %1389 = vmatpush1.bf16.msra.mxu0 0
      %1390 = vmatprep.subr.bf16.mxu0 0
      %1391 = vmatpush1.bf16.msra.mxu0 0
      %1392 = vmatprep.subr.bf16.mxu0 0
      %1393 = vmatpush1.bf16.msra.mxu0 0
      %1394 = vmatprep.subr.bf16.mxu0 0
      %1395 = vmatpush1.bf16.msra.mxu0 0
      %1396 = vmatprep.subr.bf16.mxu0 0
      %1397 = vmatpush1.bf16.msra.mxu0 0
      %1398 = vmatprep.subr.bf16.mxu0 0
      %1399 = vmatpush1.bf16.msra.mxu0 0
      %1400 = vmatprep.subr.bf16.mxu0 0
      %1401 = vmatpush1.bf16.msra.mxu0 0
      %1402 = vmatprep.subr.bf16.mxu0 0
      %1403 = vmatpush1.bf16.msra.mxu0 0
      %1404 = vmatprep.subr.bf16.mxu0 0
      %1405 = vmatpush1.bf16.msra.mxu0 0
      %1406 = vmatprep.mubr.bf16.mxu0 0
      %1407 = vmatmul.mubr.bf16.gmra.mrb[0].mxu0 %v956
      %v1408 = vpop.f32.mrb[0].mxu0
      %v1409 = vadd.f32 %v1321, %v1408
      %v1410 = vpop.f32.mrb[0].mxu0
      %v1411 = vpop.f32.mrb[0].mxu0
      %v1412 = vpop.f32.mrb[0].mxu0
      %1413 = vdwg.mxu0
      %1414 = vmatprep.subr.bf16.mxu0 0
      %1415 = vmatpush1.bf16.msra.mxu0 %v914
      %1416 = vmatprep.subr.bf16.mxu0 0
      %1417 = vmatpush1.bf16.msra.mxu0 %v915
      %1418 = vmatprep.subr.bf16.mxu0 0
      %1419 = vmatpush1.bf16.msra.mxu0 0
      %1420 = vmatprep.subr.bf16.mxu0 0
      %1421 = vmatpush1.bf16.msra.mxu0 0
      %1422 = vmatprep.subr.bf16.mxu0 0
      %1423 = vmatpush1.bf16.msra.mxu0 0
      %1424 = vmatprep.subr.bf16.mxu0 0
      %1425 = vmatpush1.bf16.msra.mxu0 0
      %1426 = vmatprep.subr.bf16.mxu0 0
      %1427 = vmatpush1.bf16.msra.mxu0 0
      %1428 = vmatprep.subr.bf16.mxu0 0
      %1429 = vmatpush1.bf16.msra.mxu0 0
      %1430 = vmatprep.subr.bf16.mxu0 0
      %1431 = vmatpush1.bf16.msra.mxu0 0
      %1432 = vmatprep.subr.bf16.mxu0 0
      %1433 = vmatpush1.bf16.msra.mxu0 0
      %1434 = vmatprep.subr.bf16.mxu0 0
      %1435 = vmatpush1.bf16.msra.mxu0 0
      %1436 = vmatprep.subr.bf16.mxu0 0
      %1437 = vmatpush1.bf16.msra.mxu0 0
      %1438 = vmatprep.subr.bf16.mxu0 0
      %1439 = vmatpush1.bf16.msra.mxu0 0
      %1440 = vmatprep.subr.bf16.mxu0 0
      %1441 = vmatpush1.bf16.msra.mxu0 0
      %1442 = vmatprep.subr.bf16.mxu0 0
      %1443 = vmatpush1.bf16.msra.mxu0 0
      %1444 = vmatprep.subr.bf16.mxu0 0
      %1445 = vmatpush1.bf16.msra.mxu0 0
      %1446 = vmatprep.mubr.bf16.mxu0 0
      %1447 = vmatmul.mubr.bf16.gmra.mrb[0].mxu0 %v956
      %v1448 = vpop.f32.mrb[0].mxu0
      %v1449 = vadd.f32 %v1325, %v1448
      %v1450 = vpop.f32.mrb[0].mxu0
      %v1451 = vpop.f32.mrb[0].mxu0
      %v1452 = vpop.f32.mrb[0].mxu0
      %1453 = vdwg.mxu0
      %1454 = vmatprep.subr.bf16.mxu0 0
      %1455 = vmatpush1.bf16.msra.mxu0 %v916
      %1456 = vmatprep.subr.bf16.mxu0 0
      %1457 = vmatpush1.bf16.msra.mxu0 %v917
      %1458 = vmatprep.subr.bf16.mxu0 0
      %1459 = vmatpush1.bf16.msra.mxu0 0
      %1460 = vmatprep.subr.bf16.mxu0 0
      %1461 = vmatpush1.bf16.msra.mxu0 0
      %1462 = vmatprep.subr.bf16.mxu0 0
      %1463 = vmatpush1.bf16.msra.mxu0 0
      %1464 = vmatprep.subr.bf16.mxu0 0
      %1465 = vmatpush1.bf16.msra.mxu0 0
      %1466 = vmatprep.subr.bf16.mxu0 0
      %1467 = vmatpush1.bf16.msra.mxu0 0
      %1468 = vmatprep.subr.bf16.mxu0 0
      %1469 = vmatpush1.bf16.msra.mxu0 0
      %1470 = vmatprep.subr.bf16.mxu0 0
      %1471 = vmatpush1.bf16.msra.mxu0 0
      %1472 = vmatprep.subr.bf16.mxu0 0
      %1473 = vmatpush1.bf16.msra.mxu0 0
      %1474 = vmatprep.subr.bf16.mxu0 0
      %1475 = vmatpush1.bf16.msra.mxu0 0
      %1476 = vmatprep.subr.bf16.mxu0 0
      %1477 = vmatpush1.bf16.msra.mxu0 0
      %1478 = vmatprep.subr.bf16.mxu0 0
      %1479 = vmatpush1.bf16.msra.mxu0 0
      %1480 = vmatprep.subr.bf16.mxu0 0
      %1481 = vmatpush1.bf16.msra.mxu0 0
      %1482 = vmatprep.subr.bf16.mxu0 0
      %1483 = vmatpush1.bf16.msra.mxu0 0
      %1484 = vmatprep.subr.bf16.mxu0 0
      %1485 = vmatpush1.bf16.msra.mxu0 0
      %1486 = vmatprep.mubr.bf16.mxu0 0
      %1487 = vmatmul.mubr.bf16.gmra.mrb[0].mxu0 %v956
      %v1488 = vpop.f32.mrb[0].mxu0
      %v1489 = vadd.f32 %v1329, %v1488
      %v1490 = vpop.f32.mrb[0].mxu0
      %v1491 = vpop.f32.mrb[0].mxu0
      %v1492 = vpop.f32.mrb[0].mxu0
      %1493 = vdwg.mxu0
      %v1494 = vpack.c.bf16 %v993, %v993
      %v1495 = vpack.c.bf16 %v1033, %v1033
      %v1496 = vpack.c.bf16 %v1073, %v1073
      %v1497 = vpack.c.bf16 %v1113, %v1113
      %v1498 = vpack.c.bf16 %v1181, %v1181
      %v1499 = vpack.c.bf16 %v1221, %v1221
      %v1500 = vpack.c.bf16 %v1261, %v1261
      %v1501 = vpack.c.bf16 %v1301, %v1301
      %vm1502 = vcmask 64512
      %v1504 = vsel %vm1502, %v1494, 0
      %v1507 = vsel %vm1502, %v1498, 0
      %1509 = vmatprep.subr.bf16.mxu0 0
      %1510 = vmatpush1.bf16.xpose.msra.mxu0 %v1507
      %1511 = vmatprep.subr.bf16.mxu0 0
      %1512 = vmatpush1.bf16.xpose.msra.mxu0 0
      %1513 = vmatprep.subr.bf16.mxu0 0
      %1514 = vmatpush1.bf16.xpose.msra.mxu0 0
      %1515 = vmatprep.subr.bf16.mxu0 0
      %1516 = vmatpush1.bf16.xpose.msra.mxu0 0
      %1517 = vmatprep.subr.bf16.mxu0 0
      %1518 = vmatpush1.bf16.xpose.msra.mxu0 0
      %1519 = vmatprep.subr.bf16.mxu0 0
      %1520 = vmatpush1.bf16.xpose.msra.mxu0 0
      %1521 = vmatprep.subr.bf16.mxu0 0
      %1522 = vmatpush1.bf16.xpose.msra.mxu0 0
      %1523 = vmatprep.subr.bf16.mxu0 0
      %1524 = vmatpush1.bf16.xpose.msra.mxu0 0
      %1525 = vmatprep.subr.bf16.mxu0 0
      %1526 = vmatpush1.bf16.xpose.msra.mxu0 0
      %1527 = vmatprep.subr.bf16.mxu0 0
      %1528 = vmatpush1.bf16.xpose.msra.mxu0 0
      %1529 = vmatprep.subr.bf16.mxu0 0
      %1530 = vmatpush1.bf16.xpose.msra.mxu0 0
      %1531 = vmatprep.subr.bf16.mxu0 0
      %1532 = vmatpush1.bf16.xpose.msra.mxu0 0
      %1533 = vmatprep.subr.bf16.mxu0 0
      %1534 = vmatpush1.bf16.xpose.msra.mxu0 0
      %1535 = vmatprep.subr.bf16.mxu0 0
      %1536 = vmatpush1.bf16.xpose.msra.mxu0 0
      %1537 = vmatprep.subr.bf16.mxu0 0
      %1538 = vmatpush1.bf16.xpose.msra.mxu0 0
      %1539 = vmatprep.subr.bf16.mxu0 0
      %1540 = vmatpush1.bf16.xpose.msra.mxu0 0
      %1541 = vmatprep.mubr.bf16.mxu0 0
      %1542 = vmatmul.mubr.bf16.gmra.mrb[0].mxu0 %v1504
      %v1543 = vpop.f32.mrb[0].mxu0
      %v1544 = vadd.f32 0.0, %v1543
      %v1545 = vpop.f32.mrb[0].mxu0
      %v1546 = vpop.f32.mrb[0].mxu0
      %v1547 = vpop.f32.mrb[0].mxu0
      %1548 = vdwg.mxu0
      %v1550 = vsel %vm1502, %v1495, 0
      %v1553 = vsel %vm1502, %v1499, 0
      %1555 = vmatprep.subr.bf16.mxu0 0
      %1556 = vmatpush1.bf16.xpose.msra.mxu0 %v1553
      %1557 = vmatprep.subr.bf16.mxu0 0
      %1558 = vmatpush1.bf16.xpose.msra.mxu0 0
      %1559 = vmatprep.subr.bf16.mxu0 0
      %1560 = vmatpush1.bf16.xpose.msra.mxu0 0
      %1561 = vmatprep.subr.bf16.mxu0 0
      %1562 = vmatpush1.bf16.xpose.msra.mxu0 0
      %1563 = vmatprep.subr.bf16.mxu0 0
      %1564 = vmatpush1.bf16.xpose.msra.mxu0 0
      %1565 = vmatprep.subr.bf16.mxu0 0
      %1566 = vmatpush1.bf16.xpose.msra.mxu0 0
      %1567 = vmatprep.subr.bf16.mxu0 0
      %1568 = vmatpush1.bf16.xpose.msra.mxu0 0
      %1569 = vmatprep.subr.bf16.mxu0 0
      %1570 = vmatpush1.bf16.xpose.msra.mxu0 0
      %1571 = vmatprep.subr.bf16.mxu0 0
      %1572 = vmatpush1.bf16.xpose.msra.mxu0 0
      %1573 = vmatprep.subr.bf16.mxu0 0
      %1574 = vmatpush1.bf16.xpose.msra.mxu0 0
      %1575 = vmatprep.subr.bf16.mxu0 0
      %1576 = vmatpush1.bf16.xpose.msra.mxu0 0
      %1577 = vmatprep.subr.bf16.mxu0 0
      %1578 = vmatpush1.bf16.xpose.msra.mxu0 0
      %1579 = vmatprep.subr.bf16.mxu0 0
      %1580 = vmatpush1.bf16.xpose.msra.mxu0 0
      %1581 = vmatprep.subr.bf16.mxu0 0
      %1582 = vmatpush1.bf16.xpose.msra.mxu0 0
      %1583 = vmatprep.subr.bf16.mxu0 0
      %1584 = vmatpush1.bf16.xpose.msra.mxu0 0
      %1585 = vmatprep.subr.bf16.mxu0 0
      %1586 = vmatpush1.bf16.xpose.msra.mxu0 0
      %1587 = vmatprep.mubr.bf16.mxu0 0
      %1588 = vmatmul.mubr.bf16.gmra.mrb[0].mxu0 %v1550
      %v1589 = vpop.f32.mrb[0].mxu0
      %v1590 = vadd.f32 0.0, %v1589
      %v1591 = vpop.f32.mrb[0].mxu0
      %v1592 = vpop.f32.mrb[0].mxu0
      %v1593 = vpop.f32.mrb[0].mxu0
      %1594 = vdwg.mxu0
      %v1596 = vsel %vm1502, %v1496, 0
      %v1599 = vsel %vm1502, %v1500, 0
      %1601 = vmatprep.subr.bf16.mxu0 0
      %1602 = vmatpush1.bf16.xpose.msra.mxu0 %v1599
      %1603 = vmatprep.subr.bf16.mxu0 0
      %1604 = vmatpush1.bf16.xpose.msra.mxu0 0
      %1605 = vmatprep.subr.bf16.mxu0 0
      %1606 = vmatpush1.bf16.xpose.msra.mxu0 0
      %1607 = vmatprep.subr.bf16.mxu0 0
      %1608 = vmatpush1.bf16.xpose.msra.mxu0 0
      %1609 = vmatprep.subr.bf16.mxu0 0
      %1610 = vmatpush1.bf16.xpose.msra.mxu0 0
      %1611 = vmatprep.subr.bf16.mxu0 0
      %1612 = vmatpush1.bf16.xpose.msra.mxu0 0
      %1613 = vmatprep.subr.bf16.mxu0 0
      %1614 = vmatpush1.bf16.xpose.msra.mxu0 0
      %1615 = vmatprep.subr.bf16.mxu0 0
      %1616 = vmatpush1.bf16.xpose.msra.mxu0 0
      %1617 = vmatprep.subr.bf16.mxu0 0
      %1618 = vmatpush1.bf16.xpose.msra.mxu0 0
      %1619 = vmatprep.subr.bf16.mxu0 0
      %1620 = vmatpush1.bf16.xpose.msra.mxu0 0
      %1621 = vmatprep.subr.bf16.mxu0 0
      %1622 = vmatpush1.bf16.xpose.msra.mxu0 0
      %1623 = vmatprep.subr.bf16.mxu0 0
      %1624 = vmatpush1.bf16.xpose.msra.mxu0 0
      %1625 = vmatprep.subr.bf16.mxu0 0
      %1626 = vmatpush1.bf16.xpose.msra.mxu0 0
      %1627 = vmatprep.subr.bf16.mxu0 0
      %1628 = vmatpush1.bf16.xpose.msra.mxu0 0
      %1629 = vmatprep.subr.bf16.mxu0 0
      %1630 = vmatpush1.bf16.xpose.msra.mxu0 0
      %1631 = vmatprep.subr.bf16.mxu0 0
      %1632 = vmatpush1.bf16.xpose.msra.mxu0 0
      %1633 = vmatprep.mubr.bf16.mxu0 0
      %1634 = vmatmul.mubr.bf16.gmra.mrb[0].mxu0 %v1596
      %v1635 = vpop.f32.mrb[0].mxu0
      %v1636 = vadd.f32 0.0, %v1635
      %v1637 = vpop.f32.mrb[0].mxu0
      %v1638 = vpop.f32.mrb[0].mxu0
      %v1639 = vpop.f32.mrb[0].mxu0
      %1640 = vdwg.mxu0
      %v1642 = vsel %vm1502, %v1497, 0
      %v1645 = vsel %vm1502, %v1501, 0
      %1647 = vmatprep.subr.bf16.mxu0 0
      %1648 = vmatpush1.bf16.xpose.msra.mxu0 %v1645
      %1649 = vmatprep.subr.bf16.mxu0 0
      %1650 = vmatpush1.bf16.xpose.msra.mxu0 0
      %1651 = vmatprep.subr.bf16.mxu0 0
      %1652 = vmatpush1.bf16.xpose.msra.mxu0 0
      %1653 = vmatprep.subr.bf16.mxu0 0
      %1654 = vmatpush1.bf16.xpose.msra.mxu0 0
      %1655 = vmatprep.subr.bf16.mxu0 0
      %1656 = vmatpush1.bf16.xpose.msra.mxu0 0
      %1657 = vmatprep.subr.bf16.mxu0 0
      %1658 = vmatpush1.bf16.xpose.msra.mxu0 0
      %1659 = vmatprep.subr.bf16.mxu0 0
      %1660 = vmatpush1.bf16.xpose.msra.mxu0 0
      %1661 = vmatprep.subr.bf16.mxu0 0
      %1662 = vmatpush1.bf16.xpose.msra.mxu0 0
      %1663 = vmatprep.subr.bf16.mxu0 0
      %1664 = vmatpush1.bf16.xpose.msra.mxu0 0
      %1665 = vmatprep.subr.bf16.mxu0 0
      %1666 = vmatpush1.bf16.xpose.msra.mxu0 0
      %1667 = vmatprep.subr.bf16.mxu0 0
      %1668 = vmatpush1.bf16.xpose.msra.mxu0 0
      %1669 = vmatprep.subr.bf16.mxu0 0
      %1670 = vmatpush1.bf16.xpose.msra.mxu0 0
      %1671 = vmatprep.subr.bf16.mxu0 0
      %1672 = vmatpush1.bf16.xpose.msra.mxu0 0
      %1673 = vmatprep.subr.bf16.mxu0 0
      %1674 = vmatpush1.bf16.xpose.msra.mxu0 0
      %1675 = vmatprep.subr.bf16.mxu0 0
      %1676 = vmatpush1.bf16.xpose.msra.mxu0 0
      %1677 = vmatprep.subr.bf16.mxu0 0
      %1678 = vmatpush1.bf16.xpose.msra.mxu0 0
      %1679 = vmatprep.mubr.bf16.mxu0 0
      %1680 = vmatmul.mubr.bf16.gmra.mrb[0].mxu0 %v1642
      %v1681 = vpop.f32.mrb[0].mxu0
      %v1682 = vadd.f32 0.0, %v1681
      %v1683 = vpop.f32.mrb[0].mxu0
      %v1684 = vpop.f32.mrb[0].mxu0
      %v1685 = vpop.f32.mrb[0].mxu0
      %1686 = vdwg.mxu0
      %v1687 = vmul.f32 %v1544, 0.35355338
      %v1688 = vmul.f32 %v1590, 0.35355338
      %v1689 = vmul.f32 %v1636, 0.35355338
      %v1690 = vmul.f32 %v1682, 0.35355338
      %v1692 = vlaneseq
      %v1693 = vshrl.u32 %v1692, 7
      %v1694 = vsub.s32 0, %v1693
      %v1695 = vrot.slane %v845, %v1694
      %v1697 = vadd.f32 %v1687, %v1695
      %v1698 = vadd.f32 %v1688, %v1695
      %v1699 = vadd.f32 %v1689, %v1695
      %v1700 = vadd.f32 %v1690, %v1695
      %v1701 = vsel %vm1502, %v1697, -inf
      %1702 = vmax.xlane.f32.xlu0 %v1701
      %v1703 = vpop.xlane.xlu0 %1702
      %v1704 = vsel %vm1502, %v1698, -inf
      %1705 = vmax.xlane.f32.xlu0 %v1704
      %v1706 = vpop.xlane.xlu0 %1705
      %v1707 = vsel %vm1502, %v1699, -inf
      %1708 = vmax.xlane.f32.xlu0 %v1707
      %v1709 = vpop.xlane.xlu0 %1708
      %v1710 = vsel %vm1502, %v1700, -inf
      %1711 = vmax.xlane.f32.xlu0 %v1710
      %v1712 = vpop.xlane.xlu0 %1711
      %v1713 = vsub.f32 %v1697, %v1703
      %v1714 = vsub.f32 %v1698, %v1706
      %v1715 = vsub.f32 %v1699, %v1709
      %v1716 = vsub.f32 %v1700, %v1712
      %v1717 = vmul.f32 %v1713, 1.442695
      %v1718 = vpow.pop %v1717
      %v1719 = vmul.f32 %v1714, 1.442695
      %v1720 = vpow.pop %v1719
      %v1721 = vmul.f32 %v1715, 1.442695
      %v1722 = vpow.pop %v1721
      %v1723 = vmul.f32 %v1716, 1.442695
      %v1724 = vpow.pop %v1723
      %v1725 = vsel %vm1502, %v1718, 0.0
      %1726 = vadd.xlane.f32.xlu0 %v1725
      %v1727 = vpop.xlane.xlu0 %1726
      %v1728 = vsel %vm1502, %v1720, 0.0
      %1729 = vadd.xlane.f32.xlu0 %v1728
      %v1730 = vpop.xlane.xlu0 %1729
      %v1731 = vsel %vm1502, %v1722, 0.0
      %1732 = vadd.xlane.f32.xlu0 %v1731
      %v1733 = vpop.xlane.xlu0 %1732
      %v1734 = vsel %vm1502, %v1724, 0.0
      %1735 = vadd.xlane.f32.xlu0 %v1734
      %v1736 = vpop.xlane.xlu0 %1735
      %v1737 = vrcp.pop %v1727
      %v1738 = vmul.f32 %v1718, %v1737
      %v1739 = vrcp.pop %v1730
      %v1740 = vmul.f32 %v1720, %v1739
      %v1741 = vrcp.pop %v1733
      %v1742 = vmul.f32 %v1722, %v1741
      %v1743 = vrcp.pop %v1736
      %v1744 = vmul.f32 %v1724, %v1743
      %v1745 = vpack.c.bf16 %v1738, %v1738
      %v1746 = vpack.c.bf16 %v1740, %v1740
      %v1747 = vpack.c.bf16 %v1742, %v1742
      %v1748 = vpack.c.bf16 %v1744, %v1744
      %v1749 = vpack.c.bf16 %v1369, %v1369
      %v1750 = vpack.c.bf16 %v1409, %v1409
      %v1751 = vpack.c.bf16 %v1449, %v1449
      %v1752 = vpack.c.bf16 %v1489, %v1489
      %v1754 = vsel %vm1502, %v1745, 0
      %vm1756 = vcmask 1043456
      %v1758 = vsel %vm1756, %v1749, 0
      %1760 = vmatprep.subr.bf16.mxu0 0
      %1761 = vmatpush1.bf16.msra.mxu0 %v1758
      %1762 = vmatprep.subr.bf16.mxu0 0
      %1763 = vmatpush1.bf16.msra.mxu0 0
      %1764 = vmatprep.subr.bf16.mxu0 0
      %1765 = vmatpush1.bf16.msra.mxu0 0
      %1766 = vmatprep.subr.bf16.mxu0 0
      %1767 = vmatpush1.bf16.msra.mxu0 0
      %1768 = vmatprep.subr.bf16.mxu0 0
      %1769 = vmatpush1.bf16.msra.mxu0 0
      %1770 = vmatprep.subr.bf16.mxu0 0
      %1771 = vmatpush1.bf16.msra.mxu0 0
      %1772 = vmatprep.subr.bf16.mxu0 0
      %1773 = vmatpush1.bf16.msra.mxu0 0
      %1774 = vmatprep.subr.bf16.mxu0 0
      %1775 = vmatpush1.bf16.msra.mxu0 0
      %1776 = vmatprep.subr.bf16.mxu0 0
      %1777 = vmatpush1.bf16.msra.mxu0 0
      %1778 = vmatprep.subr.bf16.mxu0 0
      %1779 = vmatpush1.bf16.msra.mxu0 0
      %1780 = vmatprep.subr.bf16.mxu0 0
      %1781 = vmatpush1.bf16.msra.mxu0 0
      %1782 = vmatprep.subr.bf16.mxu0 0
      %1783 = vmatpush1.bf16.msra.mxu0 0
      %1784 = vmatprep.subr.bf16.mxu0 0
      %1785 = vmatpush1.bf16.msra.mxu0 0
      %1786 = vmatprep.subr.bf16.mxu0 0
      %1787 = vmatpush1.bf16.msra.mxu0 0
      %1788 = vmatprep.subr.bf16.mxu0 0
      %1789 = vmatpush1.bf16.msra.mxu0 0
      %1790 = vmatprep.subr.bf16.mxu0 0
      %1791 = vmatpush1.bf16.msra.mxu0 0
      %1792 = vmatprep.mubr.bf16.mxu0 0
      %1793 = vmatmul.mubr.bf16.gmra.mrb[0].mxu0 %v1754
      %v1794 = vpop.f32.mrb[0].mxu0
      %v1795 = vadd.f32 0.0, %v1794
      %v1796 = vpop.f32.mrb[0].mxu0
      %v1797 = vpop.f32.mrb[0].mxu0
      %v1798 = vpop.f32.mrb[0].mxu0
      %1799 = vdwg.mxu0
      %v1801 = vsel %vm1502, %v1746, 0
      %v1804 = vsel %vm1756, %v1750, 0
      %1806 = vmatprep.subr.bf16.mxu0 0
      %1807 = vmatpush1.bf16.msra.mxu0 %v1804
      %1808 = vmatprep.subr.bf16.mxu0 0
      %1809 = vmatpush1.bf16.msra.mxu0 0
      %1810 = vmatprep.subr.bf16.mxu0 0
      %1811 = vmatpush1.bf16.msra.mxu0 0
      %1812 = vmatprep.subr.bf16.mxu0 0
      %1813 = vmatpush1.bf16.msra.mxu0 0
      %1814 = vmatprep.subr.bf16.mxu0 0
      %1815 = vmatpush1.bf16.msra.mxu0 0
      %1816 = vmatprep.subr.bf16.mxu0 0
      %1817 = vmatpush1.bf16.msra.mxu0 0
      %1818 = vmatprep.subr.bf16.mxu0 0
      %1819 = vmatpush1.bf16.msra.mxu0 0
      %1820 = vmatprep.subr.bf16.mxu0 0
      %1821 = vmatpush1.bf16.msra.mxu0 0
      %1822 = vmatprep.subr.bf16.mxu0 0
      %1823 = vmatpush1.bf16.msra.mxu0 0
      %1824 = vmatprep.subr.bf16.mxu0 0
      %1825 = vmatpush1.bf16.msra.mxu0 0
      %1826 = vmatprep.subr.bf16.mxu0 0
      %1827 = vmatpush1.bf16.msra.mxu0 0
      %1828 = vmatprep.subr.bf16.mxu0 0
      %1829 = vmatpush1.bf16.msra.mxu0 0
      %1830 = vmatprep.subr.bf16.mxu0 0
      %1831 = vmatpush1.bf16.msra.mxu0 0
      %1832 = vmatprep.subr.bf16.mxu0 0
      %1833 = vmatpush1.bf16.msra.mxu0 0
      %1834 = vmatprep.subr.bf16.mxu0 0
      %1835 = vmatpush1.bf16.msra.mxu0 0
      %1836 = vmatprep.subr.bf16.mxu0 0
      %1837 = vmatpush1.bf16.msra.mxu0 0
      %1838 = vmatprep.mubr.bf16.mxu0 0
      %1839 = vmatmul.mubr.bf16.gmra.mrb[0].mxu0 %v1801
      %v1840 = vpop.f32.mrb[0].mxu0
      %v1841 = vadd.f32 0.0, %v1840
      %v1842 = vpop.f32.mrb[0].mxu0
      %v1843 = vpop.f32.mrb[0].mxu0
      %v1844 = vpop.f32.mrb[0].mxu0
      %1845 = vdwg.mxu0
      %v1847 = vsel %vm1502, %v1747, 0
      %v1850 = vsel %vm1756, %v1751, 0
      %1852 = vmatprep.subr.bf16.mxu0 0
      %1853 = vmatpush1.bf16.msra.mxu0 %v1850
      %1854 = vmatprep.subr.bf16.mxu0 0
      %1855 = vmatpush1.bf16.msra.mxu0 0
      %1856 = vmatprep.subr.bf16.mxu0 0
      %1857 = vmatpush1.bf16.msra.mxu0 0
      %1858 = vmatprep.subr.bf16.mxu0 0
      %1859 = vmatpush1.bf16.msra.mxu0 0
      %1860 = vmatprep.subr.bf16.mxu0 0
      %1861 = vmatpush1.bf16.msra.mxu0 0
      %1862 = vmatprep.subr.bf16.mxu0 0
      %1863 = vmatpush1.bf16.msra.mxu0 0
      %1864 = vmatprep.subr.bf16.mxu0 0
      %1865 = vmatpush1.bf16.msra.mxu0 0
      %1866 = vmatprep.subr.bf16.mxu0 0
      %1867 = vmatpush1.bf16.msra.mxu0 0
      %1868 = vmatprep.subr.bf16.mxu0 0
      %1869 = vmatpush1.bf16.msra.mxu0 0
      %1870 = vmatprep.subr.bf16.mxu0 0
      %1871 = vmatpush1.bf16.msra.mxu0 0
      %1872 = vmatprep.subr.bf16.mxu0 0
      %1873 = vmatpush1.bf16.msra.mxu0 0
      %1874 = vmatprep.subr.bf16.mxu0 0
      %1875 = vmatpush1.bf16.msra.mxu0 0
      %1876 = vmatprep.subr.bf16.mxu0 0
      %1877 = vmatpush1.bf16.msra.mxu0 0
      %1878 = vmatprep.subr.bf16.mxu0 0
      %1879 = vmatpush1.bf16.msra.mxu0 0
      %1880 = vmatprep.subr.bf16.mxu0 0
      %1881 = vmatpush1.bf16.msra.mxu0 0
      %1882 = vmatprep.subr.bf16.mxu0 0
      %1883 = vmatpush1.bf16.msra.mxu0 0
      %1884 = vmatprep.mubr.bf16.mxu0 0
      %1885 = vmatmul.mubr.bf16.gmra.mrb[0].mxu0 %v1847
      %v1886 = vpop.f32.mrb[0].mxu0
      %v1887 = vadd.f32 0.0, %v1886
      %v1888 = vpop.f32.mrb[0].mxu0
      %v1889 = vpop.f32.mrb[0].mxu0
      %v1890 = vpop.f32.mrb[0].mxu0
      %1891 = vdwg.mxu0
      %v1893 = vsel %vm1502, %v1748, 0
      %v1896 = vsel %vm1756, %v1752, 0
      %1898 = vmatprep.subr.bf16.mxu0 0
      %1899 = vmatpush1.bf16.msra.mxu0 %v1896
      %1900 = vmatprep.subr.bf16.mxu0 0
      %1901 = vmatpush1.bf16.msra.mxu0 0
      %1902 = vmatprep.subr.bf16.mxu0 0
      %1903 = vmatpush1.bf16.msra.mxu0 0
      %1904 = vmatprep.subr.bf16.mxu0 0
      %1905 = vmatpush1.bf16.msra.mxu0 0
      %1906 = vmatprep.subr.bf16.mxu0 0
      %1907 = vmatpush1.bf16.msra.mxu0 0
      %1908 = vmatprep.subr.bf16.mxu0 0
      %1909 = vmatpush1.bf16.msra.mxu0 0
      %1910 = vmatprep.subr.bf16.mxu0 0
      %1911 = vmatpush1.bf16.msra.mxu0 0
      %1912 = vmatprep.subr.bf16.mxu0 0
      %1913 = vmatpush1.bf16.msra.mxu0 0
      %1914 = vmatprep.subr.bf16.mxu0 0
      %1915 = vmatpush1.bf16.msra.mxu0 0
      %1916 = vmatprep.subr.bf16.mxu0 0
      %1917 = vmatpush1.bf16.msra.mxu0 0
      %1918 = vmatprep.subr.bf16.mxu0 0
      %1919 = vmatpush1.bf16.msra.mxu0 0
      %1920 = vmatprep.subr.bf16.mxu0 0
      %1921 = vmatpush1.bf16.msra.mxu0 0
      %1922 = vmatprep.subr.bf16.mxu0 0
      %1923 = vmatpush1.bf16.msra.mxu0 0
      %1924 = vmatprep.subr.bf16.mxu0 0
      %1925 = vmatpush1.bf16.msra.mxu0 0
      %1926 = vmatprep.subr.bf16.mxu0 0
      %1927 = vmatpush1.bf16.msra.mxu0 0
      %1928 = vmatprep.subr.bf16.mxu0 0
      %1929 = vmatpush1.bf16.msra.mxu0 0
      %1930 = vmatprep.mubr.bf16.mxu0 0
      %1931 = vmatmul.mubr.bf16.gmra.mrb[0].mxu0 %v1893
      %v1932 = vpop.f32.mrb[0].mxu0
      %v1933 = vadd.f32 0.0, %v1932
      %v1934 = vpop.f32.mrb[0].mxu0
      %v1935 = vpop.f32.mrb[0].mxu0
      %v1936 = vpop.f32.mrb[0].mxu0
      %1937 = vdwg.mxu0
      %v1938 = vpack.c.bf16 %v1795, %v1795
      %v1939 = vpack.c.bf16 %v1841, %v1841
      %v1940 = vpack.c.bf16 %v1887, %v1887
      %v1941 = vpack.c.bf16 %v1933, %v1933
      %v1943 = vsel %vm1502, %v1938, 0
      %v1946 = vsel %vm1756, %v922, 0
      %1948 = vmatprep.subr.bf16.mxu0 0
      %1949 = vmatpush1.bf16.msra.mxu0 %v1946
      %1950 = vmatprep.subr.bf16.mxu0 0
      %1951 = vmatpush1.bf16.msra.mxu0 0
      %1952 = vmatprep.subr.bf16.mxu0 0
      %1953 = vmatpush1.bf16.msra.mxu0 0
      %1954 = vmatprep.subr.bf16.mxu0 0
      %1955 = vmatpush1.bf16.msra.mxu0 0
      %1956 = vmatprep.subr.bf16.mxu0 0
      %1957 = vmatpush1.bf16.msra.mxu0 0
      %1958 = vmatprep.subr.bf16.mxu0 0
      %1959 = vmatpush1.bf16.msra.mxu0 0
      %1960 = vmatprep.subr.bf16.mxu0 0
      %1961 = vmatpush1.bf16.msra.mxu0 0
      %1962 = vmatprep.subr.bf16.mxu0 0
      %1963 = vmatpush1.bf16.msra.mxu0 0
      %1964 = vmatprep.subr.bf16.mxu0 0
      %1965 = vmatpush1.bf16.msra.mxu0 0
      %1966 = vmatprep.subr.bf16.mxu0 0
      %1967 = vmatpush1.bf16.msra.mxu0 0
      %1968 = vmatprep.subr.bf16.mxu0 0
      %1969 = vmatpush1.bf16.msra.mxu0 0
      %1970 = vmatprep.subr.bf16.mxu0 0
      %1971 = vmatpush1.bf16.msra.mxu0 0
      %1972 = vmatprep.subr.bf16.mxu0 0
      %1973 = vmatpush1.bf16.msra.mxu0 0
      %1974 = vmatprep.subr.bf16.mxu0 0
      %1975 = vmatpush1.bf16.msra.mxu0 0
      %1976 = vmatprep.subr.bf16.mxu0 0
      %1977 = vmatpush1.bf16.msra.mxu0 0
      %1978 = vmatprep.subr.bf16.mxu0 0
      %1979 = vmatpush1.bf16.msra.mxu0 0
      %1980 = vmatprep.mubr.bf16.mxu0 0
      %1981 = vmatmul.mubr.bf16.gmra.mrb[0].mxu0 %v1943
      %v1982 = vpop.f32.mrb[0].mxu0
      %v1983 = vadd.f32 0.0, %v1982
      %v1984 = vpop.f32.mrb[0].mxu0
      %v1985 = vpop.f32.mrb[0].mxu0
      %v1986 = vpop.f32.mrb[0].mxu0
      %1987 = vdwg.mxu0
      %v1989 = vsel %vm1502, %v1939, 0
      %v1992 = vsel %vm1756, %v923, 0
      %1994 = vmatprep.subr.bf16.mxu0 0
      %1995 = vmatpush1.bf16.msra.mxu0 %v1992
      %1996 = vmatprep.subr.bf16.mxu0 0
      %1997 = vmatpush1.bf16.msra.mxu0 0
      %1998 = vmatprep.subr.bf16.mxu0 0
      %1999 = vmatpush1.bf16.msra.mxu0 0
      %2000 = vmatprep.subr.bf16.mxu0 0
      %2001 = vmatpush1.bf16.msra.mxu0 0
      %2002 = vmatprep.subr.bf16.mxu0 0
      %2003 = vmatpush1.bf16.msra.mxu0 0
      %2004 = vmatprep.subr.bf16.mxu0 0
      %2005 = vmatpush1.bf16.msra.mxu0 0
      %2006 = vmatprep.subr.bf16.mxu0 0
      %2007 = vmatpush1.bf16.msra.mxu0 0
      %2008 = vmatprep.subr.bf16.mxu0 0
      %2009 = vmatpush1.bf16.msra.mxu0 0
      %2010 = vmatprep.subr.bf16.mxu0 0
      %2011 = vmatpush1.bf16.msra.mxu0 0
      %2012 = vmatprep.subr.bf16.mxu0 0
      %2013 = vmatpush1.bf16.msra.mxu0 0
      %2014 = vmatprep.subr.bf16.mxu0 0
      %2015 = vmatpush1.bf16.msra.mxu0 0
      %2016 = vmatprep.subr.bf16.mxu0 0
      %2017 = vmatpush1.bf16.msra.mxu0 0
      %2018 = vmatprep.subr.bf16.mxu0 0
      %2019 = vmatpush1.bf16.msra.mxu0 0
      %2020 = vmatprep.subr.bf16.mxu0 0
      %2021 = vmatpush1.bf16.msra.mxu0 0
      %2022 = vmatprep.subr.bf16.mxu0 0
      %2023 = vmatpush1.bf16.msra.mxu0 0
      %2024 = vmatprep.subr.bf16.mxu0 0
      %2025 = vmatpush1.bf16.msra.mxu0 0
      %2026 = vmatprep.mubr.bf16.mxu0 0
      %2027 = vmatmul.mubr.bf16.gmra.mrb[0].mxu0 %v1989
      %v2028 = vpop.f32.mrb[0].mxu0
      %v2029 = vadd.f32 0.0, %v2028
      %v2030 = vpop.f32.mrb[0].mxu0
      %v2031 = vpop.f32.mrb[0].mxu0
      %v2032 = vpop.f32.mrb[0].mxu0
      %2033 = vdwg.mxu0
      %v2035 = vsel %vm1502, %v1940, 0
      %v2038 = vsel %vm1756, %v924, 0
      %2040 = vmatprep.subr.bf16.mxu0 0
      %2041 = vmatpush1.bf16.msra.mxu0 %v2038
      %2042 = vmatprep.subr.bf16.mxu0 0
      %2043 = vmatpush1.bf16.msra.mxu0 0
      %2044 = vmatprep.subr.bf16.mxu0 0
      %2045 = vmatpush1.bf16.msra.mxu0 0
      %2046 = vmatprep.subr.bf16.mxu0 0
      %2047 = vmatpush1.bf16.msra.mxu0 0
      %2048 = vmatprep.subr.bf16.mxu0 0
      %2049 = vmatpush1.bf16.msra.mxu0 0
      %2050 = vmatprep.subr.bf16.mxu0 0
      %2051 = vmatpush1.bf16.msra.mxu0 0
      %2052 = vmatprep.subr.bf16.mxu0 0
      %2053 = vmatpush1.bf16.msra.mxu0 0
      %2054 = vmatprep.subr.bf16.mxu0 0
      %2055 = vmatpush1.bf16.msra.mxu0 0
      %2056 = vmatprep.subr.bf16.mxu0 0
      %2057 = vmatpush1.bf16.msra.mxu0 0
      %2058 = vmatprep.subr.bf16.mxu0 0
      %2059 = vmatpush1.bf16.msra.mxu0 0
      %2060 = vmatprep.subr.bf16.mxu0 0
      %2061 = vmatpush1.bf16.msra.mxu0 0
      %2062 = vmatprep.subr.bf16.mxu0 0
      %2063 = vmatpush1.bf16.msra.mxu0 0
      %2064 = vmatprep.subr.bf16.mxu0 0
      %2065 = vmatpush1.bf16.msra.mxu0 0
      %2066 = vmatprep.subr.bf16.mxu0 0
      %2067 = vmatpush1.bf16.msra.mxu0 0
      %2068 = vmatprep.subr.bf16.mxu0 0
      %2069 = vmatpush1.bf16.msra.mxu0 0
      %2070 = vmatprep.subr.bf16.mxu0 0
      %2071 = vmatpush1.bf16.msra.mxu0 0
      %2072 = vmatprep.mubr.bf16.mxu0 0
      %2073 = vmatmul.mubr.bf16.gmra.mrb[0].mxu0 %v2035
      %v2074 = vpop.f32.mrb[0].mxu0
      %v2075 = vadd.f32 0.0, %v2074
      %v2076 = vpop.f32.mrb[0].mxu0
      %v2077 = vpop.f32.mrb[0].mxu0
      %v2078 = vpop.f32.mrb[0].mxu0
      %2079 = vdwg.mxu0
      %v2081 = vsel %vm1502, %v1941, 0
      %v2084 = vsel %vm1756, %v925, 0
      %2086 = vmatprep.subr.bf16.mxu0 0
      %2087 = vmatpush1.bf16.msra.mxu0 %v2084
      %2088 = vmatprep.subr.bf16.mxu0 0
      %2089 = vmatpush1.bf16.msra.mxu0 0
      %2090 = vmatprep.subr.bf16.mxu0 0
      %2091 = vmatpush1.bf16.msra.mxu0 0
      %2092 = vmatprep.subr.bf16.mxu0 0
      %2093 = vmatpush1.bf16.msra.mxu0 0
      %2094 = vmatprep.subr.bf16.mxu0 0
      %2095 = vmatpush1.bf16.msra.mxu0 0
      %2096 = vmatprep.subr.bf16.mxu0 0
      %2097 = vmatpush1.bf16.msra.mxu0 0
      %2098 = vmatprep.subr.bf16.mxu0 0
      %2099 = vmatpush1.bf16.msra.mxu0 0
      %2100 = vmatprep.subr.bf16.mxu0 0
      %2101 = vmatpush1.bf16.msra.mxu0 0
      %2102 = vmatprep.subr.bf16.mxu0 0
      %2103 = vmatpush1.bf16.msra.mxu0 0
      %2104 = vmatprep.subr.bf16.mxu0 0
      %2105 = vmatpush1.bf16.msra.mxu0 0
      %2106 = vmatprep.subr.bf16.mxu0 0
      %2107 = vmatpush1.bf16.msra.mxu0 0
      %2108 = vmatprep.subr.bf16.mxu0 0
      %2109 = vmatpush1.bf16.msra.mxu0 0
      %2110 = vmatprep.subr.bf16.mxu0 0
      %2111 = vmatpush1.bf16.msra.mxu0 0
      %2112 = vmatprep.subr.bf16.mxu0 0
      %2113 = vmatpush1.bf16.msra.mxu0 0
      %2114 = vmatprep.subr.bf16.mxu0 0
      %2115 = vmatpush1.bf16.msra.mxu0 0
      %2116 = vmatprep.subr.bf16.mxu0 0
      %2117 = vmatpush1.bf16.msra.mxu0 0
      %2118 = vmatprep.mubr.bf16.mxu0 0
      %2119 = vmatmul.mubr.bf16.gmra.mrb[0].mxu0 %v2081
      %v2120 = vpop.f32.mrb[0].mxu0
      %v2121 = vadd.f32 0.0, %v2120
      %v2122 = vpop.f32.mrb[0].mxu0
      %v2123 = vpop.f32.mrb[0].mxu0
      %v2124 = vpop.f32.mrb[0].mxu0
      %2125 = vdwg.mxu0
      %v2126 = vsel %vm814, %v1983, 0.0
      %v2127 = vsel %vm814, %v2029, 0.0
      %v2128 = vadd.f32 %v2126, %v2127
      %v2129 = vsel %vm814, %v2075, 0.0
      %v2130 = vadd.f32 %v2128, %v2129
      %v2131 = vsel %vm814, %v2121, 0.0
      %v2132 = vadd.f32 %v2130, %v2131
      %v2133 = vld [vmem:[%s12] sm:$0x1]
      %v2135 = vlaneseq
      %v2136 = vshrl.u32 %v2135, 7
      %v2137 = vsub.s32 0, %v2136
      %v2138 = vrot.slane %v2133, %v2137
      %v2140 = vadd.f32 %v2132, %v2138
      %v2141 = vadd.f32 %v2140, %v842
      %v2142 = vld [vmem:[%s13] sm:$0x1]
      %v2143 = vld [vmem:[%s14] sm:$0x1]
      %v2144 = vsel %vm814, %v2141, 0.0
      %2145 = vadd.xlane.f32.xlu0 %v2144
      %v2146 = vpop.xlane.xlu0 %2145
      %v2147 = vmul.f32 %v2146, %v818
      %v2148 = vsub.f32 %v2141, %v2147
      %v2149 = vmul.f32 %v2148, %v2148
      %v2150 = vsel %vm814, %v2149, 0.0
      %2151 = vadd.xlane.f32.xlu0 %v2150
      %v2152 = vpop.xlane.xlu0 %2151
      %v2153 = vmul.f32 %v2152, %v818
      %v2154 = vadd.f32 %v2153, 1e-07
      %v2155 = vrsqrt.pop %v2154
      %v2156 = vmul.f32 %v2148, %v2155
      %v2158 = vlaneseq
      %v2159 = vshrl.u32 %v2158, 7
      %v2160 = vsub.s32 0, %v2159
      %v2161 = vrot.slane %v2142, %v2160
      %v2163 = vmul.f32 %v2156, %v2161
      %v2165 = vlaneseq
      %v2166 = vshrl.u32 %v2165, 7
      %v2167 = vsub.s32 0, %v2166
      %v2168 = vrot.slane %v2143, %v2167
      %v2170 = vadd.f32 %v2163, %v2168
      %v2171 = vpack.c.bf16 %v2170, %v2170
      %v2172 = vld [vmem:[%s15] sm:$0xff]
      %v2173 = vld [vmem:[%s15 + $0x8] sm:$0xff]
      %v2174 = vld [vmem:[%s15 + $0x10] sm:$0xff]
      %v2175 = vld [vmem:[%s15 + $0x18] sm:$0xff]
      %v2176 = vpack.c.bf16 %v2173, %v2172
      %v2177 = vpack.c.bf16 %v2175, %v2174
      %v2178 = vld [vmem:[%s16] sm:$0x1]
      %v2180 = vlaneseq
      %v2181 = vshrl.u32 %v2180, 7
      %v2182 = vsub.s32 0, %v2181
      %v2183 = vrot.slane %v2178, %v2182
      %v2186 = vsel %vm814, %v2171, 0
      %2188 = vmatprep.subr.bf16.mxu0 0
      %2189 = vmatpush1.bf16.msra.mxu0 %v2176
      %2190 = vmatprep.subr.bf16.mxu0 0
      %2191 = vmatpush1.bf16.msra.mxu0 %v2177
      %2192 = vmatprep.subr.bf16.mxu0 0
      %2193 = vmatpush1.bf16.msra.mxu0 0
      %2194 = vmatprep.subr.bf16.mxu0 0
      %2195 = vmatpush1.bf16.msra.mxu0 0
      %2196 = vmatprep.subr.bf16.mxu0 0
      %2197 = vmatpush1.bf16.msra.mxu0 0
      %2198 = vmatprep.subr.bf16.mxu0 0
      %2199 = vmatpush1.bf16.msra.mxu0 0
      %2200 = vmatprep.subr.bf16.mxu0 0
      %2201 = vmatpush1.bf16.msra.mxu0 0
      %2202 = vmatprep.subr.bf16.mxu0 0
      %2203 = vmatpush1.bf16.msra.mxu0 0
      %2204 = vmatprep.subr.bf16.mxu0 0
      %2205 = vmatpush1.bf16.msra.mxu0 0
      %2206 = vmatprep.subr.bf16.mxu0 0
      %2207 = vmatpush1.bf16.msra.mxu0 0
      %2208 = vmatprep.subr.bf16.mxu0 0
      %2209 = vmatpush1.bf16.msra.mxu0 0
      %2210 = vmatprep.subr.bf16.mxu0 0
      %2211 = vmatpush1.bf16.msra.mxu0 0
      %2212 = vmatprep.subr.bf16.mxu0 0
      %2213 = vmatpush1.bf16.msra.mxu0 0
      %2214 = vmatprep.subr.bf16.mxu0 0
      %2215 = vmatpush1.bf16.msra.mxu0 0
      %2216 = vmatprep.subr.bf16.mxu0 0
      %2217 = vmatpush1.bf16.msra.mxu0 0
      %2218 = vmatprep.subr.bf16.mxu0 0
      %2219 = vmatpush1.bf16.msra.mxu0 0
      %2220 = vmatprep.mubr.bf16.mxu0 0
      %2221 = vmatmul.mubr.bf16.gmra.mrb[0].mxu0 %v2186
      %v2222 = vpop.f32.mrb[0].mxu0
      %v2223 = vadd.f32 %v2183, %v2222
      %v2224 = vpop.f32.mrb[0].mxu0
      %v2225 = vpop.f32.mrb[0].mxu0
      %v2226 = vpop.f32.mrb[0].mxu0
      %2227 = vdwg.mxu0
      %v2228 = vmul.f32 %v2223, 0.5
      %v2229 = vmul.f32 %v2223, 0.70710677
      %v2230 = verf.f32.pop %v2229
      %v2231 = vadd.f32 %v2230, 1.0
      %v2232 = vmul.f32 %v2228, %v2231
      %v2233 = vpack.c.bf16 %v2232, %v2232
      %v2234 = vld [vmem:[%s17] sm:$0xff]
      %v2235 = vld [vmem:[%s17 + $0x8] sm:$0xff]
      %v2236 = vld [vmem:[%s17 + $0x10] sm:$0xff]
      %v2237 = vld [vmem:[%s17 + $0x18] sm:$0xff]
      %v2238 = vld [vmem:[%s17 + $0x20] sm:$0xff]
      %v2239 = vld [vmem:[%s17 + $0x28] sm:$0xff]
      %v2240 = vld [vmem:[%s17 + $0x30] sm:$0xff]
      %v2241 = vld [vmem:[%s17 + $0x38] sm:$0xff]
      %v2242 = vpack.c.bf16 %v2235, %v2234
      %v2243 = vpack.c.bf16 %v2237, %v2236
      %v2244 = vpack.c.bf16 %v2239, %v2238
      %v2245 = vpack.c.bf16 %v2241, %v2240
      %v2246 = vld [vmem:[%s18] sm:$0x1]
      %v2248 = vlaneseq
      %v2249 = vshrl.u32 %v2248, 7
      %v2250 = vsub.s32 0, %v2249
      %v2251 = vrot.slane %v2246, %v2250
      %v2254 = vsel %vm738, %v2233, 0
      %2256 = vmatprep.subr.bf16.mxu0 0
      %2257 = vmatpush1.bf16.msra.mxu0 %v2242
      %2258 = vmatprep.subr.bf16.mxu0 0
      %2259 = vmatpush1.bf16.msra.mxu0 %v2243
      %2260 = vmatprep.subr.bf16.mxu0 0
      %2261 = vmatpush1.bf16.msra.mxu0 %v2244
      %2262 = vmatprep.subr.bf16.mxu0 0
      %2263 = vmatpush1.bf16.msra.mxu0 %v2245
      %2264 = vmatprep.subr.bf16.mxu0 0
      %2265 = vmatpush1.bf16.msra.mxu0 0
      %2266 = vmatprep.subr.bf16.mxu0 0
      %2267 = vmatpush1.bf16.msra.mxu0 0
      %2268 = vmatprep.subr.bf16.mxu0 0
      %2269 = vmatpush1.bf16.msra.mxu0 0
      %2270 = vmatprep.subr.bf16.mxu0 0
      %2271 = vmatpush1.bf16.msra.mxu0 0
      %2272 = vmatprep.subr.bf16.mxu0 0
      %2273 = vmatpush1.bf16.msra.mxu0 0
      %2274 = vmatprep.subr.bf16.mxu0 0
      %2275 = vmatpush1.bf16.msra.mxu0 0
      %2276 = vmatprep.subr.bf16.mxu0 0
      %2277 = vmatpush1.bf16.msra.mxu0 0
      %2278 = vmatprep.subr.bf16.mxu0 0
      %2279 = vmatpush1.bf16.msra.mxu0 0
      %2280 = vmatprep.subr.bf16.mxu0 0
      %2281 = vmatpush1.bf16.msra.mxu0 0
      %2282 = vmatprep.subr.bf16.mxu0 0
      %2283 = vmatpush1.bf16.msra.mxu0 0
      %2284 = vmatprep.subr.bf16.mxu0 0
      %2285 = vmatpush1.bf16.msra.mxu0 0
      %2286 = vmatprep.subr.bf16.mxu0 0
      %2287 = vmatpush1.bf16.msra.mxu0 0
      %2288 = vmatprep.mubr.bf16.mxu0 0
      %2289 = vmatmul.mubr.bf16.gmra.mrb[0].mxu0 %v2254
      %v2290 = vpop.f32.mrb[0].mxu0
      %v2291 = vadd.f32 %v2251, %v2290
      %v2292 = vpop.f32.mrb[0].mxu0
      %v2293 = vpop.f32.mrb[0].mxu0
      %v2294 = vpop.f32.mrb[0].mxu0
      %2295 = vdwg.mxu0
      %v2296 = vadd.f32 %v2291, %v2170
      %v2297 = vld [vmem:[%s19] sm:$0x1]
      %v2298 = vld [vmem:[%s20] sm:$0x1]
      %v2299 = vsel %vm814, %v2296, 0.0
      %2300 = vadd.xlane.f32.xlu0 %v2299
      %v2301 = vpop.xlane.xlu0 %2300
      %v2302 = vmul.f32 %v2301, %v818
      %v2303 = vsub.f32 %v2296, %v2302
      %v2304 = vmul.f32 %v2303, %v2303
      %v2305 = vsel %vm814, %v2304, 0.0
      %2306 = vadd.xlane.f32.xlu0 %v2305
      %v2307 = vpop.xlane.xlu0 %2306
      %v2308 = vmul.f32 %v2307, %v818
      %v2309 = vadd.f32 %v2308, 1e-07
      %v2310 = vrsqrt.pop %v2309
      %v2311 = vmul.f32 %v2303, %v2310
      %v2313 = vlaneseq
      %v2314 = vshrl.u32 %v2313, 7
      %v2315 = vsub.s32 0, %v2314
      %v2316 = vrot.slane %v2297, %v2315
      %v2318 = vmul.f32 %v2311, %v2316
      %v2320 = vlaneseq
      %v2321 = vshrl.u32 %v2320, 7
      %v2322 = vsub.s32 0, %v2321
      %v2323 = vrot.slane %v2298, %v2322
      %v2325 = vadd.f32 %v2318, %v2323
      %s2326 = scalar_lea.vmem %s5, 128
      %v2327 = vld [vmem:[%s2326] sm:$0xff]
      %v2328 = vld [vmem:[%s2326 + $0x8] sm:$0xff]
      %v2329 = vld [vmem:[%s2326 + $0x10] sm:$0xff]
      %v2330 = vld [vmem:[%s2326 + $0x18] sm:$0xff]
      %v2331 = vld [vmem:[%s2326 + $0x20] sm:$0xff]
      %v2332 = vld [vmem:[%s2326 + $0x28] sm:$0xff]
      %v2333 = vld [vmem:[%s2326 + $0x30] sm:$0xff]
      %v2334 = vld [vmem:[%s2326 + $0x38] sm:$0xff]
      %v2335 = vld [vmem:[%s2326 + $0x40] sm:$0xff]
      %v2336 = vld [vmem:[%s2326 + $0x48] sm:$0xff]
      %v2337 = vld [vmem:[%s2326 + $0x50] sm:$0xff]
      %v2338 = vld [vmem:[%s2326 + $0x58] sm:$0xff]
      %v2339 = vld [vmem:[%s2326 + $0x60] sm:$0xff]
      %v2340 = vld [vmem:[%s2326 + $0x68] sm:$0xff]
      %v2341 = vld [vmem:[%s2326 + $0x70] sm:$0xff]
      %v2342 = vld [vmem:[%s2326 + $0x78] sm:$0xff]
      %v2343 = vpack.c.bf16 %v2328, %v2327
      %v2344 = vpack.c.bf16 %v2330, %v2329
      %v2345 = vpack.c.bf16 %v2332, %v2331
      %v2346 = vpack.c.bf16 %v2334, %v2333
      %v2347 = vpack.c.bf16 %v2336, %v2335
      %v2348 = vpack.c.bf16 %v2338, %v2337
      %v2349 = vpack.c.bf16 %v2340, %v2339
      %v2350 = vpack.c.bf16 %v2342, %v2341
      %s2351 = scalar_lea.vmem %s7, 128
      %v2352 = vld [vmem:[%s2351] sm:$0xff]
      %v2353 = vld [vmem:[%s2351 + $0x8] sm:$0xff]
      %v2354 = vld [vmem:[%s2351 + $0x10] sm:$0xff]
      %v2355 = vld [vmem:[%s2351 + $0x18] sm:$0xff]
      %v2356 = vld [vmem:[%s2351 + $0x20] sm:$0xff]
      %v2357 = vld [vmem:[%s2351 + $0x28] sm:$0xff]
      %v2358 = vld [vmem:[%s2351 + $0x30] sm:$0xff]
      %v2359 = vld [vmem:[%s2351 + $0x38] sm:$0xff]
      %v2360 = vld [vmem:[%s2351 + $0x40] sm:$0xff]
      %v2361 = vld [vmem:[%s2351 + $0x48] sm:$0xff]
      %v2362 = vld [vmem:[%s2351 + $0x50] sm:$0xff]
      %v2363 = vld [vmem:[%s2351 + $0x58] sm:$0xff]
      %v2364 = vld [vmem:[%s2351 + $0x60] sm:$0xff]
      %v2365 = vld [vmem:[%s2351 + $0x68] sm:$0xff]
      %v2366 = vld [vmem:[%s2351 + $0x70] sm:$0xff]
      %v2367 = vld [vmem:[%s2351 + $0x78] sm:$0xff]
      %v2368 = vpack.c.bf16 %v2353, %v2352
      %v2369 = vpack.c.bf16 %v2355, %v2354
      %v2370 = vpack.c.bf16 %v2357, %v2356
      %v2371 = vpack.c.bf16 %v2359, %v2358
      %v2372 = vpack.c.bf16 %v2361, %v2360
      %v2373 = vpack.c.bf16 %v2363, %v2362
      %v2374 = vpack.c.bf16 %v2365, %v2364
      %v2375 = vpack.c.bf16 %v2367, %v2366
      %s2376 = scalar_lea.vmem %s9, 128
      %v2377 = vld [vmem:[%s2376] sm:$0xff]
      %v2378 = vld [vmem:[%s2376 + $0x8] sm:$0xff]
      %v2379 = vld [vmem:[%s2376 + $0x10] sm:$0xff]
      %v2380 = vld [vmem:[%s2376 + $0x18] sm:$0xff]
      %v2381 = vld [vmem:[%s2376 + $0x20] sm:$0xff]
      %v2382 = vld [vmem:[%s2376 + $0x28] sm:$0xff]
      %v2383 = vld [vmem:[%s2376 + $0x30] sm:$0xff]
      %v2384 = vld [vmem:[%s2376 + $0x38] sm:$0xff]
      %v2385 = vld [vmem:[%s2376 + $0x40] sm:$0xff]
      %v2386 = vld [vmem:[%s2376 + $0x48] sm:$0xff]
      %v2387 = vld [vmem:[%s2376 + $0x50] sm:$0xff]
      %v2388 = vld [vmem:[%s2376 + $0x58] sm:$0xff]
      %v2389 = vld [vmem:[%s2376 + $0x60] sm:$0xff]
      %v2390 = vld [vmem:[%s2376 + $0x68] sm:$0xff]
      %v2391 = vld [vmem:[%s2376 + $0x70] sm:$0xff]
      %v2392 = vld [vmem:[%s2376 + $0x78] sm:$0xff]
      %v2393 = vpack.c.bf16 %v2378, %v2377
      %v2394 = vpack.c.bf16 %v2380, %v2379
      %v2395 = vpack.c.bf16 %v2382, %v2381
      %v2396 = vpack.c.bf16 %v2384, %v2383
      %v2397 = vpack.c.bf16 %v2386, %v2385
      %v2398 = vpack.c.bf16 %v2388, %v2387
      %v2399 = vpack.c.bf16 %v2390, %v2389
      %v2400 = vpack.c.bf16 %v2392, %v2391
      %s2401 = scalar_lea.vmem %s11, 32
      %v2402 = vld [vmem:[%s2401] sm:$0xff]
      %v2403 = vld [vmem:[%s2401 + $0x8] sm:$0xff]
      %v2404 = vld [vmem:[%s2401 + $0x10] sm:$0xff]
      %v2405 = vld [vmem:[%s2401 + $0x18] sm:$0xff]
      %v2406 = vpack.c.bf16 %v2402, %v2402
      %v2407 = vpack.c.bf16 %v2403, %v2403
      %v2408 = vpack.c.bf16 %v2404, %v2404
      %v2409 = vpack.c.bf16 %v2405, %v2405
      %v2410 = vpack.c.bf16 %v2325, %v2325
      %s2411 = scalar_lea.vmem %s6, 4
      %v2412 = vld [vmem:[%s2411] sm:$0x1]
      %v2413 = vld [vmem:[%s2411 + $0x1] sm:$0x1]
      %v2414 = vld [vmem:[%s2411 + $0x2] sm:$0x1]
      %v2415 = vld [vmem:[%s2411 + $0x3] sm:$0x1]
      %v2420 = vlaneseq
      %v2421 = vshrl.u32 %v2420, 7
      %v2422 = vsub.s32 0, %v2421
      %v2423 = vrot.slane %v2412, %v2422
      %v2424 = vlaneseq
      %v2425 = vshrl.u32 %v2424, 7
      %v2426 = vsub.s32 0, %v2425
      %v2427 = vrot.slane %v2413, %v2426
      %v2428 = vlaneseq
      %v2429 = vshrl.u32 %v2428, 7
      %v2430 = vsub.s32 0, %v2429
      %v2431 = vrot.slane %v2414, %v2430
      %v2432 = vlaneseq
      %v2433 = vshrl.u32 %v2432, 7
      %v2434 = vsub.s32 0, %v2433
      %v2435 = vrot.slane %v2415, %v2434
      %v2441 = vsel %vm814, %v2410, 0
      %2443 = vmatprep.subr.bf16.mxu0 0
      %2444 = vmatpush1.bf16.msra.mxu0 %v2343
      %2445 = vmatprep.subr.bf16.mxu0 0
      %2446 = vmatpush1.bf16.msra.mxu0 %v2344
      %2447 = vmatprep.subr.bf16.mxu0 0
      %2448 = vmatpush1.bf16.msra.mxu0 0
      %2449 = vmatprep.subr.bf16.mxu0 0
      %2450 = vmatpush1.bf16.msra.mxu0 0
      %2451 = vmatprep.subr.bf16.mxu0 0
      %2452 = vmatpush1.bf16.msra.mxu0 0
      %2453 = vmatprep.subr.bf16.mxu0 0
      %2454 = vmatpush1.bf16.msra.mxu0 0
      %2455 = vmatprep.subr.bf16.mxu0 0
      %2456 = vmatpush1.bf16.msra.mxu0 0
      %2457 = vmatprep.subr.bf16.mxu0 0
      %2458 = vmatpush1.bf16.msra.mxu0 0
      %2459 = vmatprep.subr.bf16.mxu0 0
      %2460 = vmatpush1.bf16.msra.mxu0 0
      %2461 = vmatprep.subr.bf16.mxu0 0
      %2462 = vmatpush1.bf16.msra.mxu0 0
      %2463 = vmatprep.subr.bf16.mxu0 0
      %2464 = vmatpush1.bf16.msra.mxu0 0
      %2465 = vmatprep.subr.bf16.mxu0 0
      %2466 = vmatpush1.bf16.msra.mxu0 0
      %2467 = vmatprep.subr.bf16.mxu0 0
      %2468 = vmatpush1.bf16.msra.mxu0 0
      %2469 = vmatprep.subr.bf16.mxu0 0
      %2470 = vmatpush1.bf16.msra.mxu0 0
      %2471 = vmatprep.subr.bf16.mxu0 0
      %2472 = vmatpush1.bf16.msra.mxu0 0
      %2473 = vmatprep.subr.bf16.mxu0 0
      %2474 = vmatpush1.bf16.msra.mxu0 0
      %2475 = vmatprep.mubr.bf16.mxu0 0
      %2476 = vmatmul.mubr.bf16.gmra.mrb[0].mxu0 %v2441
      %v2477 = vpop.f32.mrb[0].mxu0
      %v2478 = vadd.f32 %v2423, %v2477
      %v2479 = vpop.f32.mrb[0].mxu0
      %v2480 = vpop.f32.mrb[0].mxu0
      %v2481 = vpop.f32.mrb[0].mxu0
      %2482 = vdwg.mxu0
      %2483 = vmatprep.subr.bf16.mxu0 0
      %2484 = vmatpush1.bf16.msra.mxu0 %v2345
      %2485 = vmatprep.subr.bf16.mxu0 0
      %2486 = vmatpush1.bf16.msra.mxu0 %v2346
      %2487 = vmatprep.subr.bf16.mxu0 0
      %2488 = vmatpush1.bf16.msra.mxu0 0
      %2489 = vmatprep.subr.bf16.mxu0 0
      %2490 = vmatpush1.bf16.msra.mxu0 0
      %2491 = vmatprep.subr.bf16.mxu0 0
      %2492 = vmatpush1.bf16.msra.mxu0 0
      %2493 = vmatprep.subr.bf16.mxu0 0
      %2494 = vmatpush1.bf16.msra.mxu0 0
      %2495 = vmatprep.subr.bf16.mxu0 0
      %2496 = vmatpush1.bf16.msra.mxu0 0
      %2497 = vmatprep.subr.bf16.mxu0 0
      %2498 = vmatpush1.bf16.msra.mxu0 0
      %2499 = vmatprep.subr.bf16.mxu0 0
      %2500 = vmatpush1.bf16.msra.mxu0 0
      %2501 = vmatprep.subr.bf16.mxu0 0
      %2502 = vmatpush1.bf16.msra.mxu0 0
      %2503 = vmatprep.subr.bf16.mxu0 0
      %2504 = vmatpush1.bf16.msra.mxu0 0
      %2505 = vmatprep.subr.bf16.mxu0 0
      %2506 = vmatpush1.bf16.msra.mxu0 0
      %2507 = vmatprep.subr.bf16.mxu0 0
      %2508 = vmatpush1.bf16.msra.mxu0 0
      %2509 = vmatprep.subr.bf16.mxu0 0
      %2510 = vmatpush1.bf16.msra.mxu0 0
      %2511 = vmatprep.subr.bf16.mxu0 0
      %2512 = vmatpush1.bf16.msra.mxu0 0
      %2513 = vmatprep.subr.bf16.mxu0 0
      %2514 = vmatpush1.bf16.msra.mxu0 0
      %2515 = vmatprep.mubr.bf16.mxu0 0
      %2516 = vmatmul.mubr.bf16.gmra.mrb[0].mxu0 %v2441
      %v2517 = vpop.f32.mrb[0].mxu0
      %v2518 = vadd.f32 %v2427, %v2517
      %v2519 = vpop.f32.mrb[0].mxu0
      %v2520 = vpop.f32.mrb[0].mxu0
      %v2521 = vpop.f32.mrb[0].mxu0
      %2522 = vdwg.mxu0
      %2523 = vmatprep.subr.bf16.mxu0 0
      %2524 = vmatpush1.bf16.msra.mxu0 %v2347
      %2525 = vmatprep.subr.bf16.mxu0 0
      %2526 = vmatpush1.bf16.msra.mxu0 %v2348
      %2527 = vmatprep.subr.bf16.mxu0 0
      %2528 = vmatpush1.bf16.msra.mxu0 0
      %2529 = vmatprep.subr.bf16.mxu0 0
      %2530 = vmatpush1.bf16.msra.mxu0 0
      %2531 = vmatprep.subr.bf16.mxu0 0
      %2532 = vmatpush1.bf16.msra.mxu0 0
      %2533 = vmatprep.subr.bf16.mxu0 0
      %2534 = vmatpush1.bf16.msra.mxu0 0
      %2535 = vmatprep.subr.bf16.mxu0 0
      %2536 = vmatpush1.bf16.msra.mxu0 0
      %2537 = vmatprep.subr.bf16.mxu0 0
      %2538 = vmatpush1.bf16.msra.mxu0 0
      %2539 = vmatprep.subr.bf16.mxu0 0
      %2540 = vmatpush1.bf16.msra.mxu0 0
      %2541 = vmatprep.subr.bf16.mxu0 0
      %2542 = vmatpush1.bf16.msra.mxu0 0
      %2543 = vmatprep.subr.bf16.mxu0 0
      %2544 = vmatpush1.bf16.msra.mxu0 0
      %2545 = vmatprep.subr.bf16.mxu0 0
      %2546 = vmatpush1.bf16.msra.mxu0 0
      %2547 = vmatprep.subr.bf16.mxu0 0
      %2548 = vmatpush1.bf16.msra.mxu0 0
      %2549 = vmatprep.subr.bf16.mxu0 0
      %2550 = vmatpush1.bf16.msra.mxu0 0
      %2551 = vmatprep.subr.bf16.mxu0 0
      %2552 = vmatpush1.bf16.msra.mxu0 0
      %2553 = vmatprep.subr.bf16.mxu0 0
      %2554 = vmatpush1.bf16.msra.mxu0 0
      %2555 = vmatprep.mubr.bf16.mxu0 0
      %2556 = vmatmul.mubr.bf16.gmra.mrb[0].mxu0 %v2441
      %v2557 = vpop.f32.mrb[0].mxu0
      %v2558 = vadd.f32 %v2431, %v2557
      %v2559 = vpop.f32.mrb[0].mxu0
      %v2560 = vpop.f32.mrb[0].mxu0
      %v2561 = vpop.f32.mrb[0].mxu0
      %2562 = vdwg.mxu0
      %2563 = vmatprep.subr.bf16.mxu0 0
      %2564 = vmatpush1.bf16.msra.mxu0 %v2349
      %2565 = vmatprep.subr.bf16.mxu0 0
      %2566 = vmatpush1.bf16.msra.mxu0 %v2350
      %2567 = vmatprep.subr.bf16.mxu0 0
      %2568 = vmatpush1.bf16.msra.mxu0 0
      %2569 = vmatprep.subr.bf16.mxu0 0
      %2570 = vmatpush1.bf16.msra.mxu0 0
      %2571 = vmatprep.subr.bf16.mxu0 0
      %2572 = vmatpush1.bf16.msra.mxu0 0
      %2573 = vmatprep.subr.bf16.mxu0 0
      %2574 = vmatpush1.bf16.msra.mxu0 0
      %2575 = vmatprep.subr.bf16.mxu0 0
      %2576 = vmatpush1.bf16.msra.mxu0 0
      %2577 = vmatprep.subr.bf16.mxu0 0
      %2578 = vmatpush1.bf16.msra.mxu0 0
      %2579 = vmatprep.subr.bf16.mxu0 0
      %2580 = vmatpush1.bf16.msra.mxu0 0
      %2581 = vmatprep.subr.bf16.mxu0 0
      %2582 = vmatpush1.bf16.msra.mxu0 0
      %2583 = vmatprep.subr.bf16.mxu0 0
      %2584 = vmatpush1.bf16.msra.mxu0 0
      %2585 = vmatprep.subr.bf16.mxu0 0
      %2586 = vmatpush1.bf16.msra.mxu0 0
      %2587 = vmatprep.subr.bf16.mxu0 0
      %2588 = vmatpush1.bf16.msra.mxu0 0
      %2589 = vmatprep.subr.bf16.mxu0 0
      %2590 = vmatpush1.bf16.msra.mxu0 0
      %2591 = vmatprep.subr.bf16.mxu0 0
      %2592 = vmatpush1.bf16.msra.mxu0 0
      %2593 = vmatprep.subr.bf16.mxu0 0
      %2594 = vmatpush1.bf16.msra.mxu0 0
      %2595 = vmatprep.mubr.bf16.mxu0 0
      %2596 = vmatmul.mubr.bf16.gmra.mrb[0].mxu0 %v2441
      %v2597 = vpop.f32.mrb[0].mxu0
      %v2598 = vadd.f32 %v2435, %v2597
      %v2599 = vpop.f32.mrb[0].mxu0
      %v2600 = vpop.f32.mrb[0].mxu0
      %v2601 = vpop.f32.mrb[0].mxu0
      %2602 = vdwg.mxu0
      %s2603 = scalar_lea.vmem %s8, 4
      %v2604 = vld [vmem:[%s2603] sm:$0x1]
      %v2605 = vld [vmem:[%s2603 + $0x1] sm:$0x1]
      %v2606 = vld [vmem:[%s2603 + $0x2] sm:$0x1]
      %v2607 = vld [vmem:[%s2603 + $0x3] sm:$0x1]
      %v2612 = vlaneseq
      %v2613 = vshrl.u32 %v2612, 7
      %v2614 = vsub.s32 0, %v2613
      %v2615 = vrot.slane %v2604, %v2614
      %v2616 = vlaneseq
      %v2617 = vshrl.u32 %v2616, 7
      %v2618 = vsub.s32 0, %v2617
      %v2619 = vrot.slane %v2605, %v2618
      %v2620 = vlaneseq
      %v2621 = vshrl.u32 %v2620, 7
      %v2622 = vsub.s32 0, %v2621
      %v2623 = vrot.slane %v2606, %v2622
      %v2624 = vlaneseq
      %v2625 = vshrl.u32 %v2624, 7
      %v2626 = vsub.s32 0, %v2625
      %v2627 = vrot.slane %v2607, %v2626
      %2632 = vmatprep.subr.bf16.mxu0 0
      %2633 = vmatpush1.bf16.msra.mxu0 %v2368
      %2634 = vmatprep.subr.bf16.mxu0 0
      %2635 = vmatpush1.bf16.msra.mxu0 %v2369
      %2636 = vmatprep.subr.bf16.mxu0 0
      %2637 = vmatpush1.bf16.msra.mxu0 0
      %2638 = vmatprep.subr.bf16.mxu0 0
      %2639 = vmatpush1.bf16.msra.mxu0 0
      %2640 = vmatprep.subr.bf16.mxu0 0
      %2641 = vmatpush1.bf16.msra.mxu0 0
      %2642 = vmatprep.subr.bf16.mxu0 0
      %2643 = vmatpush1.bf16.msra.mxu0 0
      %2644 = vmatprep.subr.bf16.mxu0 0
      %2645 = vmatpush1.bf16.msra.mxu0 0
      %2646 = vmatprep.subr.bf16.mxu0 0
      %2647 = vmatpush1.bf16.msra.mxu0 0
      %2648 = vmatprep.subr.bf16.mxu0 0
      %2649 = vmatpush1.bf16.msra.mxu0 0
      %2650 = vmatprep.subr.bf16.mxu0 0
      %2651 = vmatpush1.bf16.msra.mxu0 0
      %2652 = vmatprep.subr.bf16.mxu0 0
      %2653 = vmatpush1.bf16.msra.mxu0 0
      %2654 = vmatprep.subr.bf16.mxu0 0
      %2655 = vmatpush1.bf16.msra.mxu0 0
      %2656 = vmatprep.subr.bf16.mxu0 0
      %2657 = vmatpush1.bf16.msra.mxu0 0
      %2658 = vmatprep.subr.bf16.mxu0 0
      %2659 = vmatpush1.bf16.msra.mxu0 0
      %2660 = vmatprep.subr.bf16.mxu0 0
      %2661 = vmatpush1.bf16.msra.mxu0 0
      %2662 = vmatprep.subr.bf16.mxu0 0
      %2663 = vmatpush1.bf16.msra.mxu0 0
      %2664 = vmatprep.mubr.bf16.mxu0 0
      %2665 = vmatmul.mubr.bf16.gmra.mrb[0].mxu0 %v2441
      %v2666 = vpop.f32.mrb[0].mxu0
      %v2667 = vadd.f32 %v2615, %v2666
      %v2668 = vpop.f32.mrb[0].mxu0
      %v2669 = vpop.f32.mrb[0].mxu0
      %v2670 = vpop.f32.mrb[0].mxu0
      %2671 = vdwg.mxu0
      %2672 = vmatprep.subr.bf16.mxu0 0
      %2673 = vmatpush1.bf16.msra.mxu0 %v2370
      %2674 = vmatprep.subr.bf16.mxu0 0
      %2675 = vmatpush1.bf16.msra.mxu0 %v2371
      %2676 = vmatprep.subr.bf16.mxu0 0
      %2677 = vmatpush1.bf16.msra.mxu0 0
      %2678 = vmatprep.subr.bf16.mxu0 0
      %2679 = vmatpush1.bf16.msra.mxu0 0
      %2680 = vmatprep.subr.bf16.mxu0 0
      %2681 = vmatpush1.bf16.msra.mxu0 0
      %2682 = vmatprep.subr.bf16.mxu0 0
      %2683 = vmatpush1.bf16.msra.mxu0 0
      %2684 = vmatprep.subr.bf16.mxu0 0
      %2685 = vmatpush1.bf16.msra.mxu0 0
      %2686 = vmatprep.subr.bf16.mxu0 0
      %2687 = vmatpush1.bf16.msra.mxu0 0
      %2688 = vmatprep.subr.bf16.mxu0 0
      %2689 = vmatpush1.bf16.msra.mxu0 0
      %2690 = vmatprep.subr.bf16.mxu0 0
      %2691 = vmatpush1.bf16.msra.mxu0 0
      %2692 = vmatprep.subr.bf16.mxu0 0
      %2693 = vmatpush1.bf16.msra.mxu0 0
      %2694 = vmatprep.subr.bf16.mxu0 0
      %2695 = vmatpush1.bf16.msra.mxu0 0
      %2696 = vmatprep.subr.bf16.mxu0 0
      %2697 = vmatpush1.bf16.msra.mxu0 0
      %2698 = vmatprep.subr.bf16.mxu0 0
      %2699 = vmatpush1.bf16.msra.mxu0 0
      %2700 = vmatprep.subr.bf16.mxu0 0
      %2701 = vmatpush1.bf16.msra.mxu0 0
      %2702 = vmatprep.subr.bf16.mxu0 0
      %2703 = vmatpush1.bf16.msra.mxu0 0
      %2704 = vmatprep.mubr.bf16.mxu0 0
      %2705 = vmatmul.mubr.bf16.gmra.mrb[0].mxu0 %v2441
      %v2706 = vpop.f32.mrb[0].mxu0
      %v2707 = vadd.f32 %v2619, %v2706
      %v2708 = vpop.f32.mrb[0].mxu0
      %v2709 = vpop.f32.mrb[0].mxu0
      %v2710 = vpop.f32.mrb[0].mxu0
      %2711 = vdwg.mxu0
      %2712 = vmatprep.subr.bf16.mxu0 0
      %2713 = vmatpush1.bf16.msra.mxu0 %v2372
      %2714 = vmatprep.subr.bf16.mxu0 0
      %2715 = vmatpush1.bf16.msra.mxu0 %v2373
      %2716 = vmatprep.subr.bf16.mxu0 0
      %2717 = vmatpush1.bf16.msra.mxu0 0
      %2718 = vmatprep.subr.bf16.mxu0 0
      %2719 = vmatpush1.bf16.msra.mxu0 0
      %2720 = vmatprep.subr.bf16.mxu0 0
      %2721 = vmatpush1.bf16.msra.mxu0 0
      %2722 = vmatprep.subr.bf16.mxu0 0
      %2723 = vmatpush1.bf16.msra.mxu0 0
      %2724 = vmatprep.subr.bf16.mxu0 0
      %2725 = vmatpush1.bf16.msra.mxu0 0
      %2726 = vmatprep.subr.bf16.mxu0 0
      %2727 = vmatpush1.bf16.msra.mxu0 0
      %2728 = vmatprep.subr.bf16.mxu0 0
      %2729 = vmatpush1.bf16.msra.mxu0 0
      %2730 = vmatprep.subr.bf16.mxu0 0
      %2731 = vmatpush1.bf16.msra.mxu0 0
      %2732 = vmatprep.subr.bf16.mxu0 0
      %2733 = vmatpush1.bf16.msra.mxu0 0
      %2734 = vmatprep.subr.bf16.mxu0 0
      %2735 = vmatpush1.bf16.msra.mxu0 0
      %2736 = vmatprep.subr.bf16.mxu0 0
      %2737 = vmatpush1.bf16.msra.mxu0 0
      %2738 = vmatprep.subr.bf16.mxu0 0
      %2739 = vmatpush1.bf16.msra.mxu0 0
      %2740 = vmatprep.subr.bf16.mxu0 0
      %2741 = vmatpush1.bf16.msra.mxu0 0
      %2742 = vmatprep.subr.bf16.mxu0 0
      %2743 = vmatpush1.bf16.msra.mxu0 0
      %2744 = vmatprep.mubr.bf16.mxu0 0
      %2745 = vmatmul.mubr.bf16.gmra.mrb[0].mxu0 %v2441
      %v2746 = vpop.f32.mrb[0].mxu0
      %v2747 = vadd.f32 %v2623, %v2746
      %v2748 = vpop.f32.mrb[0].mxu0
      %v2749 = vpop.f32.mrb[0].mxu0
      %v2750 = vpop.f32.mrb[0].mxu0
      %2751 = vdwg.mxu0
      %2752 = vmatprep.subr.bf16.mxu0 0
      %2753 = vmatpush1.bf16.msra.mxu0 %v2374
      %2754 = vmatprep.subr.bf16.mxu0 0
      %2755 = vmatpush1.bf16.msra.mxu0 %v2375
      %2756 = vmatprep.subr.bf16.mxu0 0
      %2757 = vmatpush1.bf16.msra.mxu0 0
      %2758 = vmatprep.subr.bf16.mxu0 0
      %2759 = vmatpush1.bf16.msra.mxu0 0
      %2760 = vmatprep.subr.bf16.mxu0 0
      %2761 = vmatpush1.bf16.msra.mxu0 0
      %2762 = vmatprep.subr.bf16.mxu0 0
      %2763 = vmatpush1.bf16.msra.mxu0 0
      %2764 = vmatprep.subr.bf16.mxu0 0
      %2765 = vmatpush1.bf16.msra.mxu0 0
      %2766 = vmatprep.subr.bf16.mxu0 0
      %2767 = vmatpush1.bf16.msra.mxu0 0
      %2768 = vmatprep.subr.bf16.mxu0 0
      %2769 = vmatpush1.bf16.msra.mxu0 0
      %2770 = vmatprep.subr.bf16.mxu0 0
      %2771 = vmatpush1.bf16.msra.mxu0 0
      %2772 = vmatprep.subr.bf16.mxu0 0
      %2773 = vmatpush1.bf16.msra.mxu0 0
      %2774 = vmatprep.subr.bf16.mxu0 0
      %2775 = vmatpush1.bf16.msra.mxu0 0
      %2776 = vmatprep.subr.bf16.mxu0 0
      %2777 = vmatpush1.bf16.msra.mxu0 0
      %2778 = vmatprep.subr.bf16.mxu0 0
      %2779 = vmatpush1.bf16.msra.mxu0 0
      %2780 = vmatprep.subr.bf16.mxu0 0
      %2781 = vmatpush1.bf16.msra.mxu0 0
      %2782 = vmatprep.subr.bf16.mxu0 0
      %2783 = vmatpush1.bf16.msra.mxu0 0
      %2784 = vmatprep.mubr.bf16.mxu0 0
      %2785 = vmatmul.mubr.bf16.gmra.mrb[0].mxu0 %v2441
      %v2786 = vpop.f32.mrb[0].mxu0
      %v2787 = vadd.f32 %v2627, %v2786
      %v2788 = vpop.f32.mrb[0].mxu0
      %v2789 = vpop.f32.mrb[0].mxu0
      %v2790 = vpop.f32.mrb[0].mxu0
      %2791 = vdwg.mxu0
      %s2792 = scalar_lea.vmem %s10, 4
      %v2793 = vld [vmem:[%s2792] sm:$0x1]
      %v2794 = vld [vmem:[%s2792 + $0x1] sm:$0x1]
      %v2795 = vld [vmem:[%s2792 + $0x2] sm:$0x1]
      %v2796 = vld [vmem:[%s2792 + $0x3] sm:$0x1]
      %v2801 = vlaneseq
      %v2802 = vshrl.u32 %v2801, 7
      %v2803 = vsub.s32 0, %v2802
      %v2804 = vrot.slane %v2793, %v2803
      %v2805 = vlaneseq
      %v2806 = vshrl.u32 %v2805, 7
      %v2807 = vsub.s32 0, %v2806
      %v2808 = vrot.slane %v2794, %v2807
      %v2809 = vlaneseq
      %v2810 = vshrl.u32 %v2809, 7
      %v2811 = vsub.s32 0, %v2810
      %v2812 = vrot.slane %v2795, %v2811
      %v2813 = vlaneseq
      %v2814 = vshrl.u32 %v2813, 7
      %v2815 = vsub.s32 0, %v2814
      %v2816 = vrot.slane %v2796, %v2815
      %2821 = vmatprep.subr.bf16.mxu0 0
      %2822 = vmatpush1.bf16.msra.mxu0 %v2393
      %2823 = vmatprep.subr.bf16.mxu0 0
      %2824 = vmatpush1.bf16.msra.mxu0 %v2394
      %2825 = vmatprep.subr.bf16.mxu0 0
      %2826 = vmatpush1.bf16.msra.mxu0 0
      %2827 = vmatprep.subr.bf16.mxu0 0
      %2828 = vmatpush1.bf16.msra.mxu0 0
      %2829 = vmatprep.subr.bf16.mxu0 0
      %2830 = vmatpush1.bf16.msra.mxu0 0
      %2831 = vmatprep.subr.bf16.mxu0 0
      %2832 = vmatpush1.bf16.msra.mxu0 0
      %2833 = vmatprep.subr.bf16.mxu0 0
      %2834 = vmatpush1.bf16.msra.mxu0 0
      %2835 = vmatprep.subr.bf16.mxu0 0
      %2836 = vmatpush1.bf16.msra.mxu0 0
      %2837 = vmatprep.subr.bf16.mxu0 0
      %2838 = vmatpush1.bf16.msra.mxu0 0
      %2839 = vmatprep.subr.bf16.mxu0 0
      %2840 = vmatpush1.bf16.msra.mxu0 0
      %2841 = vmatprep.subr.bf16.mxu0 0
      %2842 = vmatpush1.bf16.msra.mxu0 0
      %2843 = vmatprep.subr.bf16.mxu0 0
      %2844 = vmatpush1.bf16.msra.mxu0 0
      %2845 = vmatprep.subr.bf16.mxu0 0
      %2846 = vmatpush1.bf16.msra.mxu0 0
      %2847 = vmatprep.subr.bf16.mxu0 0
      %2848 = vmatpush1.bf16.msra.mxu0 0
      %2849 = vmatprep.subr.bf16.mxu0 0
      %2850 = vmatpush1.bf16.msra.mxu0 0
      %2851 = vmatprep.subr.bf16.mxu0 0
      %2852 = vmatpush1.bf16.msra.mxu0 0
      %2853 = vmatprep.mubr.bf16.mxu0 0
      %2854 = vmatmul.mubr.bf16.gmra.mrb[0].mxu0 %v2441
      %v2855 = vpop.f32.mrb[0].mxu0
      %v2856 = vadd.f32 %v2804, %v2855
      %v2857 = vpop.f32.mrb[0].mxu0
      %v2858 = vpop.f32.mrb[0].mxu0
      %v2859 = vpop.f32.mrb[0].mxu0
      %2860 = vdwg.mxu0
      %2861 = vmatprep.subr.bf16.mxu0 0
      %2862 = vmatpush1.bf16.msra.mxu0 %v2395
      %2863 = vmatprep.subr.bf16.mxu0 0
      %2864 = vmatpush1.bf16.msra.mxu0 %v2396
      %2865 = vmatprep.subr.bf16.mxu0 0
      %2866 = vmatpush1.bf16.msra.mxu0 0
      %2867 = vmatprep.subr.bf16.mxu0 0
      %2868 = vmatpush1.bf16.msra.mxu0 0
      %2869 = vmatprep.subr.bf16.mxu0 0
      %2870 = vmatpush1.bf16.msra.mxu0 0
      %2871 = vmatprep.subr.bf16.mxu0 0
      %2872 = vmatpush1.bf16.msra.mxu0 0
      %2873 = vmatprep.subr.bf16.mxu0 0
      %2874 = vmatpush1.bf16.msra.mxu0 0
      %2875 = vmatprep.subr.bf16.mxu0 0
      %2876 = vmatpush1.bf16.msra.mxu0 0
      %2877 = vmatprep.subr.bf16.mxu0 0
      %2878 = vmatpush1.bf16.msra.mxu0 0
      %2879 = vmatprep.subr.bf16.mxu0 0
      %2880 = vmatpush1.bf16.msra.mxu0 0
      %2881 = vmatprep.subr.bf16.mxu0 0
      %2882 = vmatpush1.bf16.msra.mxu0 0
      %2883 = vmatprep.subr.bf16.mxu0 0
      %2884 = vmatpush1.bf16.msra.mxu0 0
      %2885 = vmatprep.subr.bf16.mxu0 0
      %2886 = vmatpush1.bf16.msra.mxu0 0
      %2887 = vmatprep.subr.bf16.mxu0 0
      %2888 = vmatpush1.bf16.msra.mxu0 0
      %2889 = vmatprep.subr.bf16.mxu0 0
      %2890 = vmatpush1.bf16.msra.mxu0 0
      %2891 = vmatprep.subr.bf16.mxu0 0
      %2892 = vmatpush1.bf16.msra.mxu0 0
      %2893 = vmatprep.mubr.bf16.mxu0 0
      %2894 = vmatmul.mubr.bf16.gmra.mrb[0].mxu0 %v2441
      %v2895 = vpop.f32.mrb[0].mxu0
      %v2896 = vadd.f32 %v2808, %v2895
      %v2897 = vpop.f32.mrb[0].mxu0
      %v2898 = vpop.f32.mrb[0].mxu0
      %v2899 = vpop.f32.mrb[0].mxu0
      %2900 = vdwg.mxu0
      %2901 = vmatprep.subr.bf16.mxu0 0
      %2902 = vmatpush1.bf16.msra.mxu0 %v2397
      %2903 = vmatprep.subr.bf16.mxu0 0
      %2904 = vmatpush1.bf16.msra.mxu0 %v2398
      %2905 = vmatprep.subr.bf16.mxu0 0
      %2906 = vmatpush1.bf16.msra.mxu0 0
      %2907 = vmatprep.subr.bf16.mxu0 0
      %2908 = vmatpush1.bf16.msra.mxu0 0
      %2909 = vmatprep.subr.bf16.mxu0 0
      %2910 = vmatpush1.bf16.msra.mxu0 0
      %2911 = vmatprep.subr.bf16.mxu0 0
      %2912 = vmatpush1.bf16.msra.mxu0 0
      %2913 = vmatprep.subr.bf16.mxu0 0
      %2914 = vmatpush1.bf16.msra.mxu0 0
      %2915 = vmatprep.subr.bf16.mxu0 0
      %2916 = vmatpush1.bf16.msra.mxu0 0
      %2917 = vmatprep.subr.bf16.mxu0 0
      %2918 = vmatpush1.bf16.msra.mxu0 0
      %2919 = vmatprep.subr.bf16.mxu0 0
      %2920 = vmatpush1.bf16.msra.mxu0 0
      %2921 = vmatprep.subr.bf16.mxu0 0
      %2922 = vmatpush1.bf16.msra.mxu0 0
      %2923 = vmatprep.subr.bf16.mxu0 0
      %2924 = vmatpush1.bf16.msra.mxu0 0
      %2925 = vmatprep.subr.bf16.mxu0 0
      %2926 = vmatpush1.bf16.msra.mxu0 0
      %2927 = vmatprep.subr.bf16.mxu0 0
      %2928 = vmatpush1.bf16.msra.mxu0 0
      %2929 = vmatprep.subr.bf16.mxu0 0
      %2930 = vmatpush1.bf16.msra.mxu0 0
      %2931 = vmatprep.subr.bf16.mxu0 0
      %2932 = vmatpush1.bf16.msra.mxu0 0
      %2933 = vmatprep.mubr.bf16.mxu0 0
      %2934 = vmatmul.mubr.bf16.gmra.mrb[0].mxu0 %v2441
      %v2935 = vpop.f32.mrb[0].mxu0
      %v2936 = vadd.f32 %v2812, %v2935
      %v2937 = vpop.f32.mrb[0].mxu0
      %v2938 = vpop.f32.mrb[0].mxu0
      %v2939 = vpop.f32.mrb[0].mxu0
      %2940 = vdwg.mxu0
      %2941 = vmatprep.subr.bf16.mxu0 0
      %2942 = vmatpush1.bf16.msra.mxu0 %v2399
      %2943 = vmatprep.subr.bf16.mxu0 0
      %2944 = vmatpush1.bf16.msra.mxu0 %v2400
      %2945 = vmatprep.subr.bf16.mxu0 0
      %2946 = vmatpush1.bf16.msra.mxu0 0
      %2947 = vmatprep.subr.bf16.mxu0 0
      %2948 = vmatpush1.bf16.msra.mxu0 0
      %2949 = vmatprep.subr.bf16.mxu0 0
      %2950 = vmatpush1.bf16.msra.mxu0 0
      %2951 = vmatprep.subr.bf16.mxu0 0
      %2952 = vmatpush1.bf16.msra.mxu0 0
      %2953 = vmatprep.subr.bf16.mxu0 0
      %2954 = vmatpush1.bf16.msra.mxu0 0
      %2955 = vmatprep.subr.bf16.mxu0 0
      %2956 = vmatpush1.bf16.msra.mxu0 0
      %2957 = vmatprep.subr.bf16.mxu0 0
      %2958 = vmatpush1.bf16.msra.mxu0 0
      %2959 = vmatprep.subr.bf16.mxu0 0
      %2960 = vmatpush1.bf16.msra.mxu0 0
      %2961 = vmatprep.subr.bf16.mxu0 0
      %2962 = vmatpush1.bf16.msra.mxu0 0
      %2963 = vmatprep.subr.bf16.mxu0 0
      %2964 = vmatpush1.bf16.msra.mxu0 0
      %2965 = vmatprep.subr.bf16.mxu0 0
      %2966 = vmatpush1.bf16.msra.mxu0 0
      %2967 = vmatprep.subr.bf16.mxu0 0
      %2968 = vmatpush1.bf16.msra.mxu0 0
      %2969 = vmatprep.subr.bf16.mxu0 0
      %2970 = vmatpush1.bf16.msra.mxu0 0
      %2971 = vmatprep.subr.bf16.mxu0 0
      %2972 = vmatpush1.bf16.msra.mxu0 0
      %2973 = vmatprep.mubr.bf16.mxu0 0
      %2974 = vmatmul.mubr.bf16.gmra.mrb[0].mxu0 %v2441
      %v2975 = vpop.f32.mrb[0].mxu0
      %v2976 = vadd.f32 %v2816, %v2975
      %v2977 = vpop.f32.mrb[0].mxu0
      %v2978 = vpop.f32.mrb[0].mxu0
      %v2979 = vpop.f32.mrb[0].mxu0
      %2980 = vdwg.mxu0
      %v2981 = vpack.c.bf16 %v2478, %v2478
      %v2982 = vpack.c.bf16 %v2518, %v2518
      %v2983 = vpack.c.bf16 %v2558, %v2558
      %v2984 = vpack.c.bf16 %v2598, %v2598
      %v2985 = vpack.c.bf16 %v2667, %v2667
      %v2986 = vpack.c.bf16 %v2707, %v2707
      %v2987 = vpack.c.bf16 %v2747, %v2747
      %v2988 = vpack.c.bf16 %v2787, %v2787
      %v2990 = vsel %vm1502, %v2981, 0
      %v2993 = vsel %vm1502, %v2985, 0
      %2995 = vmatprep.subr.bf16.mxu0 0
      %2996 = vmatpush1.bf16.xpose.msra.mxu0 %v2993
      %2997 = vmatprep.subr.bf16.mxu0 0
      %2998 = vmatpush1.bf16.xpose.msra.mxu0 0
      %2999 = vmatprep.subr.bf16.mxu0 0
      %3000 = vmatpush1.bf16.xpose.msra.mxu0 0
      %3001 = vmatprep.subr.bf16.mxu0 0
      %3002 = vmatpush1.bf16.xpose.msra.mxu0 0
      %3003 = vmatprep.subr.bf16.mxu0 0
      %3004 = vmatpush1.bf16.xpose.msra.mxu0 0
      %3005 = vmatprep.subr.bf16.mxu0 0
      %3006 = vmatpush1.bf16.xpose.msra.mxu0 0
      %3007 = vmatprep.subr.bf16.mxu0 0
      %3008 = vmatpush1.bf16.xpose.msra.mxu0 0
      %3009 = vmatprep.subr.bf16.mxu0 0
      %3010 = vmatpush1.bf16.xpose.msra.mxu0 0
      %3011 = vmatprep.subr.bf16.mxu0 0
      %3012 = vmatpush1.bf16.xpose.msra.mxu0 0
      %3013 = vmatprep.subr.bf16.mxu0 0
      %3014 = vmatpush1.bf16.xpose.msra.mxu0 0
      %3015 = vmatprep.subr.bf16.mxu0 0
      %3016 = vmatpush1.bf16.xpose.msra.mxu0 0
      %3017 = vmatprep.subr.bf16.mxu0 0
      %3018 = vmatpush1.bf16.xpose.msra.mxu0 0
      %3019 = vmatprep.subr.bf16.mxu0 0
      %3020 = vmatpush1.bf16.xpose.msra.mxu0 0
      %3021 = vmatprep.subr.bf16.mxu0 0
      %3022 = vmatpush1.bf16.xpose.msra.mxu0 0
      %3023 = vmatprep.subr.bf16.mxu0 0
      %3024 = vmatpush1.bf16.xpose.msra.mxu0 0
      %3025 = vmatprep.subr.bf16.mxu0 0
      %3026 = vmatpush1.bf16.xpose.msra.mxu0 0
      %3027 = vmatprep.mubr.bf16.mxu0 0
      %3028 = vmatmul.mubr.bf16.gmra.mrb[0].mxu0 %v2990
      %v3029 = vpop.f32.mrb[0].mxu0
      %v3030 = vadd.f32 0.0, %v3029
      %v3031 = vpop.f32.mrb[0].mxu0
      %v3032 = vpop.f32.mrb[0].mxu0
      %v3033 = vpop.f32.mrb[0].mxu0
      %3034 = vdwg.mxu0
      %v3036 = vsel %vm1502, %v2982, 0
      %v3039 = vsel %vm1502, %v2986, 0
      %3041 = vmatprep.subr.bf16.mxu0 0
      %3042 = vmatpush1.bf16.xpose.msra.mxu0 %v3039
      %3043 = vmatprep.subr.bf16.mxu0 0
      %3044 = vmatpush1.bf16.xpose.msra.mxu0 0
      %3045 = vmatprep.subr.bf16.mxu0 0
      %3046 = vmatpush1.bf16.xpose.msra.mxu0 0
      %3047 = vmatprep.subr.bf16.mxu0 0
      %3048 = vmatpush1.bf16.xpose.msra.mxu0 0
      %3049 = vmatprep.subr.bf16.mxu0 0
      %3050 = vmatpush1.bf16.xpose.msra.mxu0 0
      %3051 = vmatprep.subr.bf16.mxu0 0
      %3052 = vmatpush1.bf16.xpose.msra.mxu0 0
      %3053 = vmatprep.subr.bf16.mxu0 0
      %3054 = vmatpush1.bf16.xpose.msra.mxu0 0
      %3055 = vmatprep.subr.bf16.mxu0 0
      %3056 = vmatpush1.bf16.xpose.msra.mxu0 0
      %3057 = vmatprep.subr.bf16.mxu0 0
      %3058 = vmatpush1.bf16.xpose.msra.mxu0 0
      %3059 = vmatprep.subr.bf16.mxu0 0
      %3060 = vmatpush1.bf16.xpose.msra.mxu0 0
      %3061 = vmatprep.subr.bf16.mxu0 0
      %3062 = vmatpush1.bf16.xpose.msra.mxu0 0
      %3063 = vmatprep.subr.bf16.mxu0 0
      %3064 = vmatpush1.bf16.xpose.msra.mxu0 0
      %3065 = vmatprep.subr.bf16.mxu0 0
      %3066 = vmatpush1.bf16.xpose.msra.mxu0 0
      %3067 = vmatprep.subr.bf16.mxu0 0
      %3068 = vmatpush1.bf16.xpose.msra.mxu0 0
      %3069 = vmatprep.subr.bf16.mxu0 0
      %3070 = vmatpush1.bf16.xpose.msra.mxu0 0
      %3071 = vmatprep.subr.bf16.mxu0 0
      %3072 = vmatpush1.bf16.xpose.msra.mxu0 0
      %3073 = vmatprep.mubr.bf16.mxu0 0
      %3074 = vmatmul.mubr.bf16.gmra.mrb[0].mxu0 %v3036
      %v3075 = vpop.f32.mrb[0].mxu0
      %v3076 = vadd.f32 0.0, %v3075
      %v3077 = vpop.f32.mrb[0].mxu0
      %v3078 = vpop.f32.mrb[0].mxu0
      %v3079 = vpop.f32.mrb[0].mxu0
      %3080 = vdwg.mxu0
      %v3082 = vsel %vm1502, %v2983, 0
      %v3085 = vsel %vm1502, %v2987, 0
      %3087 = vmatprep.subr.bf16.mxu0 0
      %3088 = vmatpush1.bf16.xpose.msra.mxu0 %v3085
      %3089 = vmatprep.subr.bf16.mxu0 0
      %3090 = vmatpush1.bf16.xpose.msra.mxu0 0
      %3091 = vmatprep.subr.bf16.mxu0 0
      %3092 = vmatpush1.bf16.xpose.msra.mxu0 0
      %3093 = vmatprep.subr.bf16.mxu0 0
      %3094 = vmatpush1.bf16.xpose.msra.mxu0 0
      %3095 = vmatprep.subr.bf16.mxu0 0
      %3096 = vmatpush1.bf16.xpose.msra.mxu0 0
      %3097 = vmatprep.subr.bf16.mxu0 0
      %3098 = vmatpush1.bf16.xpose.msra.mxu0 0
      %3099 = vmatprep.subr.bf16.mxu0 0
      %3100 = vmatpush1.bf16.xpose.msra.mxu0 0
      %3101 = vmatprep.subr.bf16.mxu0 0
      %3102 = vmatpush1.bf16.xpose.msra.mxu0 0
      %3103 = vmatprep.subr.bf16.mxu0 0
      %3104 = vmatpush1.bf16.xpose.msra.mxu0 0
      %3105 = vmatprep.subr.bf16.mxu0 0
      %3106 = vmatpush1.bf16.xpose.msra.mxu0 0
      %3107 = vmatprep.subr.bf16.mxu0 0
      %3108 = vmatpush1.bf16.xpose.msra.mxu0 0
      %3109 = vmatprep.subr.bf16.mxu0 0
      %3110 = vmatpush1.bf16.xpose.msra.mxu0 0
      %3111 = vmatprep.subr.bf16.mxu0 0
      %3112 = vmatpush1.bf16.xpose.msra.mxu0 0
      %3113 = vmatprep.subr.bf16.mxu0 0
      %3114 = vmatpush1.bf16.xpose.msra.mxu0 0
      %3115 = vmatprep.subr.bf16.mxu0 0
      %3116 = vmatpush1.bf16.xpose.msra.mxu0 0
      %3117 = vmatprep.subr.bf16.mxu0 0
      %3118 = vmatpush1.bf16.xpose.msra.mxu0 0
      %3119 = vmatprep.mubr.bf16.mxu0 0
      %3120 = vmatmul.mubr.bf16.gmra.mrb[0].mxu0 %v3082
      %v3121 = vpop.f32.mrb[0].mxu0
      %v3122 = vadd.f32 0.0, %v3121
      %v3123 = vpop.f32.mrb[0].mxu0
      %v3124 = vpop.f32.mrb[0].mxu0
      %v3125 = vpop.f32.mrb[0].mxu0
      %3126 = vdwg.mxu0
      %v3128 = vsel %vm1502, %v2984, 0
      %v3131 = vsel %vm1502, %v2988, 0
      %3133 = vmatprep.subr.bf16.mxu0 0
      %3134 = vmatpush1.bf16.xpose.msra.mxu0 %v3131
      %3135 = vmatprep.subr.bf16.mxu0 0
      %3136 = vmatpush1.bf16.xpose.msra.mxu0 0
      %3137 = vmatprep.subr.bf16.mxu0 0
      %3138 = vmatpush1.bf16.xpose.msra.mxu0 0
      %3139 = vmatprep.subr.bf16.mxu0 0
      %3140 = vmatpush1.bf16.xpose.msra.mxu0 0
      %3141 = vmatprep.subr.bf16.mxu0 0
      %3142 = vmatpush1.bf16.xpose.msra.mxu0 0
      %3143 = vmatprep.subr.bf16.mxu0 0
      %3144 = vmatpush1.bf16.xpose.msra.mxu0 0
      %3145 = vmatprep.subr.bf16.mxu0 0
      %3146 = vmatpush1.bf16.xpose.msra.mxu0 0
      %3147 = vmatprep.subr.bf16.mxu0 0
      %3148 = vmatpush1.bf16.xpose.msra.mxu0 0
      %3149 = vmatprep.subr.bf16.mxu0 0
      %3150 = vmatpush1.bf16.xpose.msra.mxu0 0
      %3151 = vmatprep.subr.bf16.mxu0 0
      %3152 = vmatpush1.bf16.xpose.msra.mxu0 0
      %3153 = vmatprep.subr.bf16.mxu0 0
      %3154 = vmatpush1.bf16.xpose.msra.mxu0 0
      %3155 = vmatprep.subr.bf16.mxu0 0
      %3156 = vmatpush1.bf16.xpose.msra.mxu0 0
      %3157 = vmatprep.subr.bf16.mxu0 0
      %3158 = vmatpush1.bf16.xpose.msra.mxu0 0
      %3159 = vmatprep.subr.bf16.mxu0 0
      %3160 = vmatpush1.bf16.xpose.msra.mxu0 0
      %3161 = vmatprep.subr.bf16.mxu0 0
      %3162 = vmatpush1.bf16.xpose.msra.mxu0 0
      %3163 = vmatprep.subr.bf16.mxu0 0
      %3164 = vmatpush1.bf16.xpose.msra.mxu0 0
      %3165 = vmatprep.mubr.bf16.mxu0 0
      %3166 = vmatmul.mubr.bf16.gmra.mrb[0].mxu0 %v3128
      %v3167 = vpop.f32.mrb[0].mxu0
      %v3168 = vadd.f32 0.0, %v3167
      %v3169 = vpop.f32.mrb[0].mxu0
      %v3170 = vpop.f32.mrb[0].mxu0
      %v3171 = vpop.f32.mrb[0].mxu0
      %3172 = vdwg.mxu0
      %v3173 = vmul.f32 %v3030, 0.35355338
      %v3174 = vmul.f32 %v3076, 0.35355338
      %v3175 = vmul.f32 %v3122, 0.35355338
      %v3176 = vmul.f32 %v3168, 0.35355338
      %v3177 = vadd.f32 %v3173, %v1695
      %v3178 = vadd.f32 %v3174, %v1695
      %v3179 = vadd.f32 %v3175, %v1695
      %v3180 = vadd.f32 %v3176, %v1695
      %v3181 = vsel %vm1502, %v3177, -inf
      %3182 = vmax.xlane.f32.xlu0 %v3181
      %v3183 = vpop.xlane.xlu0 %3182
      %v3184 = vsel %vm1502, %v3178, -inf
      %3185 = vmax.xlane.f32.xlu0 %v3184
      %v3186 = vpop.xlane.xlu0 %3185
      %v3187 = vsel %vm1502, %v3179, -inf
      %3188 = vmax.xlane.f32.xlu0 %v3187
      %v3189 = vpop.xlane.xlu0 %3188
      %v3190 = vsel %vm1502, %v3180, -inf
      %3191 = vmax.xlane.f32.xlu0 %v3190
      %v3192 = vpop.xlane.xlu0 %3191
      %v3193 = vsub.f32 %v3177, %v3183
      %v3194 = vsub.f32 %v3178, %v3186
      %v3195 = vsub.f32 %v3179, %v3189
      %v3196 = vsub.f32 %v3180, %v3192
      %v3197 = vmul.f32 %v3193, 1.442695
      %v3198 = vpow.pop %v3197
      %v3199 = vmul.f32 %v3194, 1.442695
      %v3200 = vpow.pop %v3199
      %v3201 = vmul.f32 %v3195, 1.442695
      %v3202 = vpow.pop %v3201
      %v3203 = vmul.f32 %v3196, 1.442695
      %v3204 = vpow.pop %v3203
      %v3205 = vsel %vm1502, %v3198, 0.0
      %3206 = vadd.xlane.f32.xlu0 %v3205
      %v3207 = vpop.xlane.xlu0 %3206
      %v3208 = vsel %vm1502, %v3200, 0.0
      %3209 = vadd.xlane.f32.xlu0 %v3208
      %v3210 = vpop.xlane.xlu0 %3209
      %v3211 = vsel %vm1502, %v3202, 0.0
      %3212 = vadd.xlane.f32.xlu0 %v3211
      %v3213 = vpop.xlane.xlu0 %3212
      %v3214 = vsel %vm1502, %v3204, 0.0
      %3215 = vadd.xlane.f32.xlu0 %v3214
      %v3216 = vpop.xlane.xlu0 %3215
      %v3217 = vrcp.pop %v3207
      %v3218 = vmul.f32 %v3198, %v3217
      %v3219 = vrcp.pop %v3210
      %v3220 = vmul.f32 %v3200, %v3219
      %v3221 = vrcp.pop %v3213
      %v3222 = vmul.f32 %v3202, %v3221
      %v3223 = vrcp.pop %v3216
      %v3224 = vmul.f32 %v3204, %v3223
      %v3225 = vpack.c.bf16 %v3218, %v3218
      %v3226 = vpack.c.bf16 %v3220, %v3220
      %v3227 = vpack.c.bf16 %v3222, %v3222
      %v3228 = vpack.c.bf16 %v3224, %v3224
      %v3229 = vpack.c.bf16 %v2856, %v2856
      %v3230 = vpack.c.bf16 %v2896, %v2896
      %v3231 = vpack.c.bf16 %v2936, %v2936
      %v3232 = vpack.c.bf16 %v2976, %v2976
      %v3234 = vsel %vm1502, %v3225, 0
      %v3237 = vsel %vm1756, %v3229, 0
      %3239 = vmatprep.subr.bf16.mxu0 0
      %3240 = vmatpush1.bf16.msra.mxu0 %v3237
      %3241 = vmatprep.subr.bf16.mxu0 0
      %3242 = vmatpush1.bf16.msra.mxu0 0
      %3243 = vmatprep.subr.bf16.mxu0 0
      %3244 = vmatpush1.bf16.msra.mxu0 0
      %3245 = vmatprep.subr.bf16.mxu0 0
      %3246 = vmatpush1.bf16.msra.mxu0 0
      %3247 = vmatprep.subr.bf16.mxu0 0
      %3248 = vmatpush1.bf16.msra.mxu0 0
      %3249 = vmatprep.subr.bf16.mxu0 0
      %3250 = vmatpush1.bf16.msra.mxu0 0
      %3251 = vmatprep.subr.bf16.mxu0 0
      %3252 = vmatpush1.bf16.msra.mxu0 0
      %3253 = vmatprep.subr.bf16.mxu0 0
      %3254 = vmatpush1.bf16.msra.mxu0 0
      %3255 = vmatprep.subr.bf16.mxu0 0
      %3256 = vmatpush1.bf16.msra.mxu0 0
      %3257 = vmatprep.subr.bf16.mxu0 0
      %3258 = vmatpush1.bf16.msra.mxu0 0
      %3259 = vmatprep.subr.bf16.mxu0 0
      %3260 = vmatpush1.bf16.msra.mxu0 0
      %3261 = vmatprep.subr.bf16.mxu0 0
      %3262 = vmatpush1.bf16.msra.mxu0 0
      %3263 = vmatprep.subr.bf16.mxu0 0
      %3264 = vmatpush1.bf16.msra.mxu0 0
      %3265 = vmatprep.subr.bf16.mxu0 0
      %3266 = vmatpush1.bf16.msra.mxu0 0
      %3267 = vmatprep.subr.bf16.mxu0 0
      %3268 = vmatpush1.bf16.msra.mxu0 0
      %3269 = vmatprep.subr.bf16.mxu0 0
      %3270 = vmatpush1.bf16.msra.mxu0 0
      %3271 = vmatprep.mubr.bf16.mxu0 0
      %3272 = vmatmul.mubr.bf16.gmra.mrb[0].mxu0 %v3234
      %v3273 = vpop.f32.mrb[0].mxu0
      %v3274 = vadd.f32 0.0, %v3273
      %v3275 = vpop.f32.mrb[0].mxu0
      %v3276 = vpop.f32.mrb[0].mxu0
      %v3277 = vpop.f32.mrb[0].mxu0
      %3278 = vdwg.mxu0
      %v3280 = vsel %vm1502, %v3226, 0
      %v3283 = vsel %vm1756, %v3230, 0
      %3285 = vmatprep.subr.bf16.mxu0 0
      %3286 = vmatpush1.bf16.msra.mxu0 %v3283
      %3287 = vmatprep.subr.bf16.mxu0 0
      %3288 = vmatpush1.bf16.msra.mxu0 0
      %3289 = vmatprep.subr.bf16.mxu0 0
      %3290 = vmatpush1.bf16.msra.mxu0 0
      %3291 = vmatprep.subr.bf16.mxu0 0
      %3292 = vmatpush1.bf16.msra.mxu0 0
      %3293 = vmatprep.subr.bf16.mxu0 0
      %3294 = vmatpush1.bf16.msra.mxu0 0
      %3295 = vmatprep.subr.bf16.mxu0 0
      %3296 = vmatpush1.bf16.msra.mxu0 0
      %3297 = vmatprep.subr.bf16.mxu0 0
      %3298 = vmatpush1.bf16.msra.mxu0 0
      %3299 = vmatprep.subr.bf16.mxu0 0
      %3300 = vmatpush1.bf16.msra.mxu0 0
      %3301 = vmatprep.subr.bf16.mxu0 0
      %3302 = vmatpush1.bf16.msra.mxu0 0
      %3303 = vmatprep.subr.bf16.mxu0 0
      %3304 = vmatpush1.bf16.msra.mxu0 0
      %3305 = vmatprep.subr.bf16.mxu0 0
      %3306 = vmatpush1.bf16.msra.mxu0 0
      %3307 = vmatprep.subr.bf16.mxu0 0
      %3308 = vmatpush1.bf16.msra.mxu0 0
      %3309 = vmatprep.subr.bf16.mxu0 0
      %3310 = vmatpush1.bf16.msra.mxu0 0
      %3311 = vmatprep.subr.bf16.mxu0 0
      %3312 = vmatpush1.bf16.msra.mxu0 0
      %3313 = vmatprep.subr.bf16.mxu0 0
      %3314 = vmatpush1.bf16.msra.mxu0 0
      %3315 = vmatprep.subr.bf16.mxu0 0
      %3316 = vmatpush1.bf16.msra.mxu0 0
      %3317 = vmatprep.mubr.bf16.mxu0 0
      %3318 = vmatmul.mubr.bf16.gmra.mrb[0].mxu0 %v3280
      %v3319 = vpop.f32.mrb[0].mxu0
      %v3320 = vadd.f32 0.0, %v3319
      %v3321 = vpop.f32.mrb[0].mxu0
      %v3322 = vpop.f32.mrb[0].mxu0
      %v3323 = vpop.f32.mrb[0].mxu0
      %3324 = vdwg.mxu0
      %v3326 = vsel %vm1502, %v3227, 0
      %v3329 = vsel %vm1756, %v3231, 0
      %3331 = vmatprep.subr.bf16.mxu0 0
      %3332 = vmatpush1.bf16.msra.mxu0 %v3329
      %3333 = vmatprep.subr.bf16.mxu0 0
      %3334 = vmatpush1.bf16.msra.mxu0 0
      %3335 = vmatprep.subr.bf16.mxu0 0
      %3336 = vmatpush1.bf16.msra.mxu0 0
      %3337 = vmatprep.subr.bf16.mxu0 0
      %3338 = vmatpush1.bf16.msra.mxu0 0
      %3339 = vmatprep.subr.bf16.mxu0 0
      %3340 = vmatpush1.bf16.msra.mxu0 0
      %3341 = vmatprep.subr.bf16.mxu0 0
      %3342 = vmatpush1.bf16.msra.mxu0 0
      %3343 = vmatprep.subr.bf16.mxu0 0
      %3344 = vmatpush1.bf16.msra.mxu0 0
      %3345 = vmatprep.subr.bf16.mxu0 0
      %3346 = vmatpush1.bf16.msra.mxu0 0
      %3347 = vmatprep.subr.bf16.mxu0 0
      %3348 = vmatpush1.bf16.msra.mxu0 0
      %3349 = vmatprep.subr.bf16.mxu0 0
      %3350 = vmatpush1.bf16.msra.mxu0 0
      %3351 = vmatprep.subr.bf16.mxu0 0
      %3352 = vmatpush1.bf16.msra.mxu0 0
      %3353 = vmatprep.subr.bf16.mxu0 0
      %3354 = vmatpush1.bf16.msra.mxu0 0
      %3355 = vmatprep.subr.bf16.mxu0 0
      %3356 = vmatpush1.bf16.msra.mxu0 0
      %3357 = vmatprep.subr.bf16.mxu0 0
      %3358 = vmatpush1.bf16.msra.mxu0 0
      %3359 = vmatprep.subr.bf16.mxu0 0
      %3360 = vmatpush1.bf16.msra.mxu0 0
      %3361 = vmatprep.subr.bf16.mxu0 0
      %3362 = vmatpush1.bf16.msra.mxu0 0
      %3363 = vmatprep.mubr.bf16.mxu0 0
      %3364 = vmatmul.mubr.bf16.gmra.mrb[0].mxu0 %v3326
      %v3365 = vpop.f32.mrb[0].mxu0
      %v3366 = vadd.f32 0.0, %v3365
      %v3367 = vpop.f32.mrb[0].mxu0
      %v3368 = vpop.f32.mrb[0].mxu0
      %v3369 = vpop.f32.mrb[0].mxu0
      %3370 = vdwg.mxu0
      %v3372 = vsel %vm1502, %v3228, 0
      %v3375 = vsel %vm1756, %v3232, 0
      %3377 = vmatprep.subr.bf16.mxu0 0
      %3378 = vmatpush1.bf16.msra.mxu0 %v3375
      %3379 = vmatprep.subr.bf16.mxu0 0
      %3380 = vmatpush1.bf16.msra.mxu0 0
      %3381 = vmatprep.subr.bf16.mxu0 0
      %3382 = vmatpush1.bf16.msra.mxu0 0
      %3383 = vmatprep.subr.bf16.mxu0 0
      %3384 = vmatpush1.bf16.msra.mxu0 0
      %3385 = vmatprep.subr.bf16.mxu0 0
      %3386 = vmatpush1.bf16.msra.mxu0 0
      %3387 = vmatprep.subr.bf16.mxu0 0
      %3388 = vmatpush1.bf16.msra.mxu0 0
      %3389 = vmatprep.subr.bf16.mxu0 0
      %3390 = vmatpush1.bf16.msra.mxu0 0
      %3391 = vmatprep.subr.bf16.mxu0 0
      %3392 = vmatpush1.bf16.msra.mxu0 0
      %3393 = vmatprep.subr.bf16.mxu0 0
      %3394 = vmatpush1.bf16.msra.mxu0 0
      %3395 = vmatprep.subr.bf16.mxu0 0
      %3396 = vmatpush1.bf16.msra.mxu0 0
      %3397 = vmatprep.subr.bf16.mxu0 0
      %3398 = vmatpush1.bf16.msra.mxu0 0
      %3399 = vmatprep.subr.bf16.mxu0 0
      %3400 = vmatpush1.bf16.msra.mxu0 0
      %3401 = vmatprep.subr.bf16.mxu0 0
      %3402 = vmatpush1.bf16.msra.mxu0 0
      %3403 = vmatprep.subr.bf16.mxu0 0
      %3404 = vmatpush1.bf16.msra.mxu0 0
      %3405 = vmatprep.subr.bf16.mxu0 0
      %3406 = vmatpush1.bf16.msra.mxu0 0
      %3407 = vmatprep.subr.bf16.mxu0 0
      %3408 = vmatpush1.bf16.msra.mxu0 0
      %3409 = vmatprep.mubr.bf16.mxu0 0
      %3410 = vmatmul.mubr.bf16.gmra.mrb[0].mxu0 %v3372
      %v3411 = vpop.f32.mrb[0].mxu0
      %v3412 = vadd.f32 0.0, %v3411
      %v3413 = vpop.f32.mrb[0].mxu0
      %v3414 = vpop.f32.mrb[0].mxu0
      %v3415 = vpop.f32.mrb[0].mxu0
      %3416 = vdwg.mxu0
      %v3417 = vpack.c.bf16 %v3274, %v3274
      %v3418 = vpack.c.bf16 %v3320, %v3320
      %v3419 = vpack.c.bf16 %v3366, %v3366
      %v3420 = vpack.c.bf16 %v3412, %v3412
      %v3422 = vsel %vm1502, %v3417, 0
      %v3425 = vsel %vm1756, %v2406, 0
      %3427 = vmatprep.subr.bf16.mxu0 0
      %3428 = vmatpush1.bf16.msra.mxu0 %v3425
      %3429 = vmatprep.subr.bf16.mxu0 0
      %3430 = vmatpush1.bf16.msra.mxu0 0
      %3431 = vmatprep.subr.bf16.mxu0 0
      %3432 = vmatpush1.bf16.msra.mxu0 0
      %3433 = vmatprep.subr.bf16.mxu0 0
      %3434 = vmatpush1.bf16.msra.mxu0 0
      %3435 = vmatprep.subr.bf16.mxu0 0
      %3436 = vmatpush1.bf16.msra.mxu0 0
      %3437 = vmatprep.subr.bf16.mxu0 0
      %3438 = vmatpush1.bf16.msra.mxu0 0
      %3439 = vmatprep.subr.bf16.mxu0 0
      %3440 = vmatpush1.bf16.msra.mxu0 0
      %3441 = vmatprep.subr.bf16.mxu0 0
      %3442 = vmatpush1.bf16.msra.mxu0 0
      %3443 = vmatprep.subr.bf16.mxu0 0
      %3444 = vmatpush1.bf16.msra.mxu0 0
      %3445 = vmatprep.subr.bf16.mxu0 0
      %3446 = vmatpush1.bf16.msra.mxu0 0
      %3447 = vmatprep.subr.bf16.mxu0 0
      %3448 = vmatpush1.bf16.msra.mxu0 0
      %3449 = vmatprep.subr.bf16.mxu0 0
      %3450 = vmatpush1.bf16.msra.mxu0 0
      %3451 = vmatprep.subr.bf16.mxu0 0
      %3452 = vmatpush1.bf16.msra.mxu0 0
      %3453 = vmatprep.subr.bf16.mxu0 0
      %3454 = vmatpush1.bf16.msra.mxu0 0
      %3455 = vmatprep.subr.bf16.mxu0 0
      %3456 = vmatpush1.bf16.msra.mxu0 0
      %3457 = vmatprep.subr.bf16.mxu0 0
      %3458 = vmatpush1.bf16.msra.mxu0 0
      %3459 = vmatprep.mubr.bf16.mxu0 0
      %3460 = vmatmul.mubr.bf16.gmra.mrb[0].mxu0 %v3422
      %v3461 = vpop.f32.mrb[0].mxu0
      %v3462 = vadd.f32 0.0, %v3461
      %v3463 = vpop.f32.mrb[0].mxu0
      %v3464 = vpop.f32.mrb[0].mxu0
      %v3465 = vpop.f32.mrb[0].mxu0
      %3466 = vdwg.mxu0
      %v3468 = vsel %vm1502, %v3418, 0
      %v3471 = vsel %vm1756, %v2407, 0
      %3473 = vmatprep.subr.bf16.mxu0 0
      %3474 = vmatpush1.bf16.msra.mxu0 %v3471
      %3475 = vmatprep.subr.bf16.mxu0 0
      %3476 = vmatpush1.bf16.msra.mxu0 0
      %3477 = vmatprep.subr.bf16.mxu0 0
      %3478 = vmatpush1.bf16.msra.mxu0 0
      %3479 = vmatprep.subr.bf16.mxu0 0
      %3480 = vmatpush1.bf16.msra.mxu0 0
      %3481 = vmatprep.subr.bf16.mxu0 0
      %3482 = vmatpush1.bf16.msra.mxu0 0
      %3483 = vmatprep.subr.bf16.mxu0 0
      %3484 = vmatpush1.bf16.msra.mxu0 0
      %3485 = vmatprep.subr.bf16.mxu0 0
      %3486 = vmatpush1.bf16.msra.mxu0 0
      %3487 = vmatprep.subr.bf16.mxu0 0
      %3488 = vmatpush1.bf16.msra.mxu0 0
      %3489 = vmatprep.subr.bf16.mxu0 0
      %3490 = vmatpush1.bf16.msra.mxu0 0
      %3491 = vmatprep.subr.bf16.mxu0 0
      %3492 = vmatpush1.bf16.msra.mxu0 0
      %3493 = vmatprep.subr.bf16.mxu0 0
      %3494 = vmatpush1.bf16.msra.mxu0 0
      %3495 = vmatprep.subr.bf16.mxu0 0
      %3496 = vmatpush1.bf16.msra.mxu0 0
      %3497 = vmatprep.subr.bf16.mxu0 0
      %3498 = vmatpush1.bf16.msra.mxu0 0
      %3499 = vmatprep.subr.bf16.mxu0 0
      %3500 = vmatpush1.bf16.msra.mxu0 0
      %3501 = vmatprep.subr.bf16.mxu0 0
      %3502 = vmatpush1.bf16.msra.mxu0 0
      %3503 = vmatprep.subr.bf16.mxu0 0
      %3504 = vmatpush1.bf16.msra.mxu0 0
      %3505 = vmatprep.mubr.bf16.mxu0 0
      %3506 = vmatmul.mubr.bf16.gmra.mrb[0].mxu0 %v3468
      %v3507 = vpop.f32.mrb[0].mxu0
      %v3508 = vadd.f32 0.0, %v3507
      %v3509 = vpop.f32.mrb[0].mxu0
      %v3510 = vpop.f32.mrb[0].mxu0
      %v3511 = vpop.f32.mrb[0].mxu0
      %3512 = vdwg.mxu0
      %v3514 = vsel %vm1502, %v3419, 0
      %v3517 = vsel %vm1756, %v2408, 0
      %3519 = vmatprep.subr.bf16.mxu0 0
      %3520 = vmatpush1.bf16.msra.mxu0 %v3517
      %3521 = vmatprep.subr.bf16.mxu0 0
      %3522 = vmatpush1.bf16.msra.mxu0 0
      %3523 = vmatprep.subr.bf16.mxu0 0
      %3524 = vmatpush1.bf16.msra.mxu0 0
      %3525 = vmatprep.subr.bf16.mxu0 0
      %3526 = vmatpush1.bf16.msra.mxu0 0
      %3527 = vmatprep.subr.bf16.mxu0 0
      %3528 = vmatpush1.bf16.msra.mxu0 0
      %3529 = vmatprep.subr.bf16.mxu0 0
      %3530 = vmatpush1.bf16.msra.mxu0 0
      %3531 = vmatprep.subr.bf16.mxu0 0
      %3532 = vmatpush1.bf16.msra.mxu0 0
      %3533 = vmatprep.subr.bf16.mxu0 0
      %3534 = vmatpush1.bf16.msra.mxu0 0
      %3535 = vmatprep.subr.bf16.mxu0 0
      %3536 = vmatpush1.bf16.msra.mxu0 0
      %3537 = vmatprep.subr.bf16.mxu0 0
      %3538 = vmatpush1.bf16.msra.mxu0 0
      %3539 = vmatprep.subr.bf16.mxu0 0
      %3540 = vmatpush1.bf16.msra.mxu0 0
      %3541 = vmatprep.subr.bf16.mxu0 0
      %3542 = vmatpush1.bf16.msra.mxu0 0
      %3543 = vmatprep.subr.bf16.mxu0 0
      %3544 = vmatpush1.bf16.msra.mxu0 0
      %3545 = vmatprep.subr.bf16.mxu0 0
      %3546 = vmatpush1.bf16.msra.mxu0 0
      %3547 = vmatprep.subr.bf16.mxu0 0
      %3548 = vmatpush1.bf16.msra.mxu0 0
      %3549 = vmatprep.subr.bf16.mxu0 0
      %3550 = vmatpush1.bf16.msra.mxu0 0
      %3551 = vmatprep.mubr.bf16.mxu0 0
      %3552 = vmatmul.mubr.bf16.gmra.mrb[0].mxu0 %v3514
      %v3553 = vpop.f32.mrb[0].mxu0
      %v3554 = vadd.f32 0.0, %v3553
      %v3555 = vpop.f32.mrb[0].mxu0
      %v3556 = vpop.f32.mrb[0].mxu0
      %v3557 = vpop.f32.mrb[0].mxu0
      %3558 = vdwg.mxu0
      %v3560 = vsel %vm1502, %v3420, 0
      %v3563 = vsel %vm1756, %v2409, 0
      %3565 = vmatprep.subr.bf16.mxu0 0
      %3566 = vmatpush1.bf16.msra.mxu0 %v3563
      %3567 = vmatprep.subr.bf16.mxu0 0
      %3568 = vmatpush1.bf16.msra.mxu0 0
      %3569 = vmatprep.subr.bf16.mxu0 0
      %3570 = vmatpush1.bf16.msra.mxu0 0
      %3571 = vmatprep.subr.bf16.mxu0 0
      %3572 = vmatpush1.bf16.msra.mxu0 0
      %3573 = vmatprep.subr.bf16.mxu0 0
      %3574 = vmatpush1.bf16.msra.mxu0 0
      %3575 = vmatprep.subr.bf16.mxu0 0
      %3576 = vmatpush1.bf16.msra.mxu0 0
      %3577 = vmatprep.subr.bf16.mxu0 0
      %3578 = vmatpush1.bf16.msra.mxu0 0
      %3579 = vmatprep.subr.bf16.mxu0 0
      %3580 = vmatpush1.bf16.msra.mxu0 0
      %3581 = vmatprep.subr.bf16.mxu0 0
      %3582 = vmatpush1.bf16.msra.mxu0 0
      %3583 = vmatprep.subr.bf16.mxu0 0
      %3584 = vmatpush1.bf16.msra.mxu0 0
      %3585 = vmatprep.subr.bf16.mxu0 0
      %3586 = vmatpush1.bf16.msra.mxu0 0
      %3587 = vmatprep.subr.bf16.mxu0 0
      %3588 = vmatpush1.bf16.msra.mxu0 0
      %3589 = vmatprep.subr.bf16.mxu0 0
      %3590 = vmatpush1.bf16.msra.mxu0 0
      %3591 = vmatprep.subr.bf16.mxu0 0
      %3592 = vmatpush1.bf16.msra.mxu0 0
      %3593 = vmatprep.subr.bf16.mxu0 0
      %3594 = vmatpush1.bf16.msra.mxu0 0
      %3595 = vmatprep.subr.bf16.mxu0 0
      %3596 = vmatpush1.bf16.msra.mxu0 0
      %3597 = vmatprep.mubr.bf16.mxu0 0
      %3598 = vmatmul.mubr.bf16.gmra.mrb[0].mxu0 %v3560
      %v3599 = vpop.f32.mrb[0].mxu0
      %v3600 = vadd.f32 0.0, %v3599
      %v3601 = vpop.f32.mrb[0].mxu0
      %v3602 = vpop.f32.mrb[0].mxu0
      %v3603 = vpop.f32.mrb[0].mxu0
      %3604 = vdwg.mxu0
      %v3605 = vsel %vm814, %v3462, 0.0
      %v3606 = vsel %vm814, %v3508, 0.0
      %v3607 = vadd.f32 %v3605, %v3606
      %v3608 = vsel %vm814, %v3554, 0.0
      %v3609 = vadd.f32 %v3607, %v3608
      %v3610 = vsel %vm814, %v3600, 0.0
      %v3611 = vadd.f32 %v3609, %v3610
      %s3612 = scalar_lea.vmem %s12, 1
      %v3613 = vld [vmem:[%s3612] sm:$0x1]
      %v3615 = vlaneseq
      %v3616 = vshrl.u32 %v3615, 7
      %v3617 = vsub.s32 0, %v3616
      %v3618 = vrot.slane %v3613, %v3617
      %v3620 = vadd.f32 %v3611, %v3618
      %v3621 = vadd.f32 %v3620, %v2325
      %s3622 = scalar_lea.vmem %s13, 1
      %v3623 = vld [vmem:[%s3622] sm:$0x1]
      %s3624 = scalar_lea.vmem %s14, 1
      %v3625 = vld [vmem:[%s3624] sm:$0x1]
      %v3626 = vsel %vm814, %v3621, 0.0
      %3627 = vadd.xlane.f32.xlu0 %v3626
      %v3628 = vpop.xlane.xlu0 %3627
      %v3629 = vmul.f32 %v3628, %v818
      %v3630 = vsub.f32 %v3621, %v3629
      %v3631 = vmul.f32 %v3630, %v3630
      %v3632 = vsel %vm814, %v3631, 0.0
      %3633 = vadd.xlane.f32.xlu0 %v3632
      %v3634 = vpop.xlane.xlu0 %3633
      %v3635 = vmul.f32 %v3634, %v818
      %v3636 = vadd.f32 %v3635, 1e-07
      %v3637 = vrsqrt.pop %v3636
      %v3638 = vmul.f32 %v3630, %v3637
      %v3640 = vlaneseq
      %v3641 = vshrl.u32 %v3640, 7
      %v3642 = vsub.s32 0, %v3641
      %v3643 = vrot.slane %v3623, %v3642
      %v3645 = vmul.f32 %v3638, %v3643
      %v3647 = vlaneseq
      %v3648 = vshrl.u32 %v3647, 7
      %v3649 = vsub.s32 0, %v3648
      %v3650 = vrot.slane %v3625, %v3649
      %v3652 = vadd.f32 %v3645, %v3650
      %v3653 = vpack.c.bf16 %v3652, %v3652
      %s3654 = scalar_lea.vmem %s15, 32
      %v3655 = vld [vmem:[%s3654] sm:$0xff]
      %v3656 = vld [vmem:[%s3654 + $0x8] sm:$0xff]
      %v3657 = vld [vmem:[%s3654 + $0x10] sm:$0xff]
      %v3658 = vld [vmem:[%s3654 + $0x18] sm:$0xff]
      %v3659 = vpack.c.bf16 %v3656, %v3655
      %v3660 = vpack.c.bf16 %v3658, %v3657
      %s3661 = scalar_lea.vmem %s16, 1
      %v3662 = vld [vmem:[%s3661] sm:$0x1]
      %v3664 = vlaneseq
      %v3665 = vshrl.u32 %v3664, 7
      %v3666 = vsub.s32 0, %v3665
      %v3667 = vrot.slane %v3662, %v3666
      %v3670 = vsel %vm814, %v3653, 0
      %3672 = vmatprep.subr.bf16.mxu0 0
      %3673 = vmatpush1.bf16.msra.mxu0 %v3659
      %3674 = vmatprep.subr.bf16.mxu0 0
      %3675 = vmatpush1.bf16.msra.mxu0 %v3660
      %3676 = vmatprep.subr.bf16.mxu0 0
      %3677 = vmatpush1.bf16.msra.mxu0 0
      %3678 = vmatprep.subr.bf16.mxu0 0
      %3679 = vmatpush1.bf16.msra.mxu0 0
      %3680 = vmatprep.subr.bf16.mxu0 0
      %3681 = vmatpush1.bf16.msra.mxu0 0
      %3682 = vmatprep.subr.bf16.mxu0 0
      %3683 = vmatpush1.bf16.msra.mxu0 0
      %3684 = vmatprep.subr.bf16.mxu0 0
      %3685 = vmatpush1.bf16.msra.mxu0 0
      %3686 = vmatprep.subr.bf16.mxu0 0
      %3687 = vmatpush1.bf16.msra.mxu0 0
      %3688 = vmatprep.subr.bf16.mxu0 0
      %3689 = vmatpush1.bf16.msra.mxu0 0
      %3690 = vmatprep.subr.bf16.mxu0 0
      %3691 = vmatpush1.bf16.msra.mxu0 0
      %3692 = vmatprep.subr.bf16.mxu0 0
      %3693 = vmatpush1.bf16.msra.mxu0 0
      %3694 = vmatprep.subr.bf16.mxu0 0
      %3695 = vmatpush1.bf16.msra.mxu0 0
      %3696 = vmatprep.subr.bf16.mxu0 0
      %3697 = vmatpush1.bf16.msra.mxu0 0
      %3698 = vmatprep.subr.bf16.mxu0 0
      %3699 = vmatpush1.bf16.msra.mxu0 0
      %3700 = vmatprep.subr.bf16.mxu0 0
      %3701 = vmatpush1.bf16.msra.mxu0 0
      %3702 = vmatprep.subr.bf16.mxu0 0
      %3703 = vmatpush1.bf16.msra.mxu0 0
      %3704 = vmatprep.mubr.bf16.mxu0 0
      %3705 = vmatmul.mubr.bf16.gmra.mrb[0].mxu0 %v3670
      %v3706 = vpop.f32.mrb[0].mxu0
      %v3707 = vadd.f32 %v3667, %v3706
      %v3708 = vpop.f32.mrb[0].mxu0
      %v3709 = vpop.f32.mrb[0].mxu0
      %v3710 = vpop.f32.mrb[0].mxu0
      %3711 = vdwg.mxu0
      %v3712 = vmul.f32 %v3707, 0.5
      %v3713 = vmul.f32 %v3707, 0.70710677
      %v3714 = verf.f32.pop %v3713
      %v3715 = vadd.f32 %v3714, 1.0
      %v3716 = vmul.f32 %v3712, %v3715
      %v3717 = vpack.c.bf16 %v3716, %v3716
      %s3718 = scalar_lea.vmem %s17, 64
      %v3719 = vld [vmem:[%s3718] sm:$0xff]
      %v3720 = vld [vmem:[%s3718 + $0x8] sm:$0xff]
      %v3721 = vld [vmem:[%s3718 + $0x10] sm:$0xff]
      %v3722 = vld [vmem:[%s3718 + $0x18] sm:$0xff]
      %v3723 = vld [vmem:[%s3718 + $0x20] sm:$0xff]
      %v3724 = vld [vmem:[%s3718 + $0x28] sm:$0xff]
      %v3725 = vld [vmem:[%s3718 + $0x30] sm:$0xff]
      %v3726 = vld [vmem:[%s3718 + $0x38] sm:$0xff]
      %v3727 = vpack.c.bf16 %v3720, %v3719
      %v3728 = vpack.c.bf16 %v3722, %v3721
      %v3729 = vpack.c.bf16 %v3724, %v3723
      %v3730 = vpack.c.bf16 %v3726, %v3725
      %s3731 = scalar_lea.vmem %s18, 1
      %v3732 = vld [vmem:[%s3731] sm:$0x1]
      %v3734 = vlaneseq
      %v3735 = vshrl.u32 %v3734, 7
      %v3736 = vsub.s32 0, %v3735
      %v3737 = vrot.slane %v3732, %v3736
      %v3740 = vsel %vm738, %v3717, 0
      %3742 = vmatprep.subr.bf16.mxu0 0
      %3743 = vmatpush1.bf16.msra.mxu0 %v3727
      %3744 = vmatprep.subr.bf16.mxu0 0
      %3745 = vmatpush1.bf16.msra.mxu0 %v3728
      %3746 = vmatprep.subr.bf16.mxu0 0
      %3747 = vmatpush1.bf16.msra.mxu0 %v3729
      %3748 = vmatprep.subr.bf16.mxu0 0
      %3749 = vmatpush1.bf16.msra.mxu0 %v3730
      %3750 = vmatprep.subr.bf16.mxu0 0
      %3751 = vmatpush1.bf16.msra.mxu0 0
      %3752 = vmatprep.subr.bf16.mxu0 0
      %3753 = vmatpush1.bf16.msra.mxu0 0
      %3754 = vmatprep.subr.bf16.mxu0 0
      %3755 = vmatpush1.bf16.msra.mxu0 0
      %3756 = vmatprep.subr.bf16.mxu0 0
      %3757 = vmatpush1.bf16.msra.mxu0 0
      %3758 = vmatprep.subr.bf16.mxu0 0
      %3759 = vmatpush1.bf16.msra.mxu0 0
      %3760 = vmatprep.subr.bf16.mxu0 0
      %3761 = vmatpush1.bf16.msra.mxu0 0
      %3762 = vmatprep.subr.bf16.mxu0 0
      %3763 = vmatpush1.bf16.msra.mxu0 0
      %3764 = vmatprep.subr.bf16.mxu0 0
      %3765 = vmatpush1.bf16.msra.mxu0 0
      %3766 = vmatprep.subr.bf16.mxu0 0
      %3767 = vmatpush1.bf16.msra.mxu0 0
      %3768 = vmatprep.subr.bf16.mxu0 0
      %3769 = vmatpush1.bf16.msra.mxu0 0
      %3770 = vmatprep.subr.bf16.mxu0 0
      %3771 = vmatpush1.bf16.msra.mxu0 0
      %3772 = vmatprep.subr.bf16.mxu0 0
      %3773 = vmatpush1.bf16.msra.mxu0 0
      %3774 = vmatprep.mubr.bf16.mxu0 0
      %3775 = vmatmul.mubr.bf16.gmra.mrb[0].mxu0 %v3740
      %v3776 = vpop.f32.mrb[0].mxu0
      %v3777 = vadd.f32 %v3737, %v3776
      %v3778 = vpop.f32.mrb[0].mxu0
      %v3779 = vpop.f32.mrb[0].mxu0
      %v3780 = vpop.f32.mrb[0].mxu0
      %3781 = vdwg.mxu0
      %v3782 = vadd.f32 %v3777, %v3652
      %s3783 = scalar_lea.vmem %s19, 1
      %v3784 = vld [vmem:[%s3783] sm:$0x1]
      %s3785 = scalar_lea.vmem %s20, 1
      %v3786 = vld [vmem:[%s3785] sm:$0x1]
      %v3787 = vsel %vm814, %v3782, 0.0
      %3788 = vadd.xlane.f32.xlu0 %v3787
      %v3789 = vpop.xlane.xlu0 %3788
      %v3790 = vmul.f32 %v3789, %v818
      %v3791 = vsub.f32 %v3782, %v3790
      %v3792 = vmul.f32 %v3791, %v3791
      %v3793 = vsel %vm814, %v3792, 0.0
      %3794 = vadd.xlane.f32.xlu0 %v3793
      %v3795 = vpop.xlane.xlu0 %3794
      %v3796 = vmul.f32 %v3795, %v818
      %v3797 = vadd.f32 %v3796, 1e-07
      %v3798 = vrsqrt.pop %v3797
      %v3799 = vmul.f32 %v3791, %v3798
      %v3801 = vlaneseq
      %v3802 = vshrl.u32 %v3801, 7
      %v3803 = vsub.s32 0, %v3802
      %v3804 = vrot.slane %v3784, %v3803
      %v3806 = vmul.f32 %v3799, %v3804
      %v3808 = vlaneseq
      %v3809 = vshrl.u32 %v3808, 7
      %v3810 = vsub.s32 0, %v3809
      %v3811 = vrot.slane %v3786, %v3810
      %v3813 = vadd.f32 %v3806, %v3811
      %v3815 = vsel %vm1502, %v843, 0
      %3817 = vmatprep.subr.mxu0 0.0
      %3818 = vmatpush1.msra.mxu0 %v3813
      %3819 = vmatprep.subr.mxu0 0.0
      %3820 = vmatpush1.msra.mxu0 0.0
      %3821 = vmatprep.subr.mxu0 0.0
      %3822 = vmatpush1.msra.mxu0 0.0
      %3823 = vmatprep.subr.mxu0 0.0
      %3824 = vmatpush1.msra.mxu0 0.0
      %3825 = vmatprep.subr.mxu0 0.0
      %3826 = vmatpush1.msra.mxu0 0.0
      %3827 = vmatprep.subr.mxu0 0.0
      %3828 = vmatpush1.msra.mxu0 0.0
      %3829 = vmatprep.subr.mxu0 0.0
      %3830 = vmatpush1.msra.mxu0 0.0
      %3831 = vmatprep.subr.mxu0 0.0
      %3832 = vmatpush1.msra.mxu0 0.0
      %3833 = vmatprep.subr.mxu0 0.0
      %3834 = vmatpush1.msra.mxu0 0.0
      %3835 = vmatprep.subr.mxu0 0.0
      %3836 = vmatpush1.msra.mxu0 0.0
      %3837 = vmatprep.subr.mxu0 0.0
      %3838 = vmatpush1.msra.mxu0 0.0
      %3839 = vmatprep.subr.mxu0 0.0
      %3840 = vmatpush1.msra.mxu0 0.0
      %3841 = vmatprep.subr.mxu0 0.0
      %3842 = vmatpush1.msra.mxu0 0.0
      %3843 = vmatprep.subr.mxu0 0.0
      %3844 = vmatpush1.msra.mxu0 0.0
      %3845 = vmatprep.subr.mxu0 0.0
      %3846 = vmatpush1.msra.mxu0 0.0
      %3847 = vmatprep.subr.mxu0 0.0
      %3848 = vmatpush1.msra.mxu0 0.0
      %3849 = vmatprep.subr.mxu0 0.0
      %3850 = vmatpush1.msra.mxu0 0.0
      %3851 = vmatprep.subr.mxu0 0.0
      %3852 = vmatpush1.msra.mxu0 0.0
      %3853 = vmatprep.subr.mxu0 0.0
      %3854 = vmatpush1.msra.mxu0 0.0
      %3855 = vmatprep.subr.mxu0 0.0
      %3856 = vmatpush1.msra.mxu0 0.0
      %3857 = vmatprep.subr.mxu0 0.0
      %3858 = vmatpush1.msra.mxu0 0.0
      %3859 = vmatprep.subr.mxu0 0.0
      %3860 = vmatpush1.msra.mxu0 0.0
      %3861 = vmatprep.subr.mxu0 0.0
      %3862 = vmatpush1.msra.mxu0 0.0
      %3863 = vmatprep.subr.mxu0 0.0
      %3864 = vmatpush1.msra.mxu0 0.0
      %3865 = vmatprep.subr.mxu0 0.0
      %3866 = vmatpush1.msra.mxu0 0.0
      %3867 = vmatprep.subr.mxu0 0.0
      %3868 = vmatpush1.msra.mxu0 0.0
      %3869 = vmatprep.subr.mxu0 0.0
      %3870 = vmatpush1.msra.mxu0 0.0
      %3871 = vmatprep.subr.mxu0 0.0
      %3872 = vmatpush1.msra.mxu0 0.0
      %3873 = vmatprep.subr.mxu0 0.0
      %3874 = vmatpush1.msra.mxu0 0.0
      %3875 = vmatprep.subr.mxu0 0.0
      %3876 = vmatpush1.msra.mxu0 0.0
      %3877 = vmatprep.subr.mxu0 0.0
      %3878 = vmatpush1.msra.mxu0 0.0
      %3879 = vmatprep.subr.mxu0 0.0
      %3880 = vmatpush1.msra.mxu0 0.0
      %3881 = vmatprep.mubr.f32.mxu0 0.0
      %3882 = vmatmul.mubr.f32.gmra.mrb[0].mxu0 %v3815
      %v3883 = vpop.f32.mrb[0].mxu0
      %v3884 = vadd.f32 0.0, %v3883
      %v3885 = vpop.f32.mrb[0].mxu0
      %3886 = vdwg.mxu0
      %vm3887 = vcmask 57344
      %v3888 = vsel %vm3887, %v843, 0.0
      %3889 = vadd.xlane.f32.xlu0 %v3888
      %v3890 = vpop.xlane.xlu0 %3889
      %v3891 = vmax.f32 %v3890, 1e-09
      %v3892 = vrcp.pop %v3891
      %v3893 = vmul.f32 %v3884, %v3892
      %v3894 = vpack.c.bf16 %v3893, %v3893
      %v3895 = vld [vmem:[%s21] sm:$0xff]
      %v3896 = vld [vmem:[%s21 + $0x8] sm:$0xff]
      %v3897 = vld [vmem:[%s21 + $0x10] sm:$0xff]
      %v3898 = vld [vmem:[%s21 + $0x18] sm:$0xff]
      %v3899 = vpack.c.bf16 %v3896, %v3895
      %v3900 = vpack.c.bf16 %v3898, %v3897
      %v3901 = vld [vmem:[#allocation2] sm:$0x1]
      %v3903 = vsel %vm814, %v3894, 0
      %3905 = vmatprep.subr.bf16.mxu0 0
      %3906 = vmatpush1.bf16.msra.mxu0 %v3899
      %3907 = vmatprep.subr.bf16.mxu0 0
      %3908 = vmatpush1.bf16.msra.mxu0 %v3900
      %3909 = vmatprep.subr.bf16.mxu0 0
      %3910 = vmatpush1.bf16.msra.mxu0 0
      %3911 = vmatprep.subr.bf16.mxu0 0
      %3912 = vmatpush1.bf16.msra.mxu0 0
      %3913 = vmatprep.subr.bf16.mxu0 0
      %3914 = vmatpush1.bf16.msra.mxu0 0
      %3915 = vmatprep.subr.bf16.mxu0 0
      %3916 = vmatpush1.bf16.msra.mxu0 0
      %3917 = vmatprep.subr.bf16.mxu0 0
      %3918 = vmatpush1.bf16.msra.mxu0 0
      %3919 = vmatprep.subr.bf16.mxu0 0
      %3920 = vmatpush1.bf16.msra.mxu0 0
      %3921 = vmatprep.subr.bf16.mxu0 0
      %3922 = vmatpush1.bf16.msra.mxu0 0
      %3923 = vmatprep.subr.bf16.mxu0 0
      %3924 = vmatpush1.bf16.msra.mxu0 0
      %3925 = vmatprep.subr.bf16.mxu0 0
      %3926 = vmatpush1.bf16.msra.mxu0 0
      %3927 = vmatprep.subr.bf16.mxu0 0
      %3928 = vmatpush1.bf16.msra.mxu0 0
      %3929 = vmatprep.subr.bf16.mxu0 0
      %3930 = vmatpush1.bf16.msra.mxu0 0
      %3931 = vmatprep.subr.bf16.mxu0 0
      %3932 = vmatpush1.bf16.msra.mxu0 0
      %3933 = vmatprep.subr.bf16.mxu0 0
      %3934 = vmatpush1.bf16.msra.mxu0 0
      %3935 = vmatprep.subr.bf16.mxu0 0
      %3936 = vmatpush1.bf16.msra.mxu0 0
      %3937 = vmatprep.mubr.bf16.mxu0 0
      %3938 = vmatmul.mubr.bf16.gmra.mrb[0].mxu0 %v3903
      %v3939 = vpop.f32.mrb[0].mxu0
      %v3940 = vadd.f32 %v3901, %v3939
      %v3941 = vpop.f32.mrb[0].mxu0
      %v3942 = vpop.f32.mrb[0].mxu0
      %v3943 = vpop.f32.mrb[0].mxu0
      %3944 = vdwg.mxu0
      %vm3945 = vcmask 0
      %3946 = vst.msk [vmem:[%s719] sm:$0x1] %vm3945, %v3940
      %p3947 = scmp.lt.s32.totalorder %s36, 1
      %s3948 = scalar_select %p3947, %s36, 1
      %s3949 = scalar_lea.vmem %s23, %s3948
      // Predicated region
      $region113: #{deberta_for_regression_forward.1} parent=111 // pred_check
        %p3950 = pneg %p547
      $region114: #{deberta_for_regression_forward.1} parent=111 // pred_check_branch
        %3952 = sbr.rel (%p3950) target = $region116
      $region115: #{deberta_for_regression_forward.1} parent=111 // pred_region
        _
      $region116: #{deberta_for_regression_forward.1} parent=111 // pred_fallthru
        _
    $region112: #{deberta_for_regression_forward.1} parent=5 // pred_fallthru
      _
    %p3953 = scmp.le.s32.totalorder 2, %s31
    // Predicated region
    $region117: #{deberta_for_regression_forward.1} parent=5 // pred_check
      %p3954 = pneg %p3953
    $region118: #{deberta_for_regression_forward.1} parent=5 // pred_check_branch
      %3956 = sbr.rel (%p3954) target = $region120
    $region119: #{deberta_for_regression_forward.1} parent=5 // pred_region
      %s3957 = ssub.s32 %s31, 2
      // Predicated region
      $region121: #{deberta_for_regression_forward.1} parent=119 // pred_check
        %p3958 = pneg %p553
      $region122: #{deberta_for_regression_forward.1} parent=119 // pred_check_branch
        %3960 = sbr.rel (%p3958) target = $region124
      $region123: #{deberta_for_regression_forward.1} parent=119 // pred_region
        %p3961 = scmp.lt.s32.totalorder %s37, 1
        %s3962 = scalar_select %p3961, %s37, 1
        %s3963 = scalar_lea.vmem %s23, %s3962
      $region124: #{deberta_for_regression_forward.1} parent=119 // pred_fallthru
        _
    $region120: #{deberta_for_regression_forward.1} parent=5 // pred_fallthru
      _
  $region6: #{deberta_for_regression_forward.1} parent=0 // loop_footer
    %s35 = sadd.s32 1, %s31
  $region7: #{deberta_for_regression_forward.1} parent=0 // loop_footer_branch
    %30 = sbr.rel target = $region3
  $region8: #{deberta_for_regression_forward.1} parent=0 // loop_exit
    _

</llo_original>
